<compile_context>
chip_gen: v6e
topology: v6e:2x2x1
jax: 0.10.0
libtpu: 0.0.40
codegen_flags: <defaults>
</compile_context>

<pallas_src>
import functools

import jax
import jax.numpy as jnp
from jax.experimental import pallas as pl
from jax.experimental.pallas import tpu as pltpu


_VMEM_LIMIT_BYTES = 32 * 1024 * 1024   # safe on v5e/v6e/v7x; demo tiles stay far under it
_RMS_EPS = 1e-5


def _tile(dim, pref):
    """Largest tile <= pref that evenly divides dim; falls back to the full extent.

    pref values are multiples of (8, 128), so the returned tile always satisfies the
    TPU (8, 128) block constraint (either aligned, or equal to the full array dim).
    """
    t = min(dim, pref)
    if dim % t == 0:
        return t
    return dim


# ------------------------------------------------------------------- kernels --

def _matmul_acc_kernel(*refs, has_bias, has_residual):
    """Tiled matmul, f32 K-accumulation; bias / residual fused at the last K step."""
    x_ref, w_ref = refs[0], refs[1]
    pos = 2
    bias_ref = refs[pos] if has_bias else None
    pos += int(has_bias)
    res_ref = refs[pos] if has_residual else None
    pos += int(has_residual)
    o_ref, acc_ref = refs[pos], refs[pos + 1]

    k = pl.program_id(2)

    @pl.when(k == 0)
    def _():
        acc_ref[...] = jnp.zeros(acc_ref.shape, jnp.float32)

    acc_ref[...] += jnp.dot(x_ref[...], w_ref[...],
                            preferred_element_type=jnp.float32)

    @pl.when(k == pl.num_programs(2) - 1)
    def _():
        out = acc_ref[...]
        if has_bias:
            out = out + bias_ref[...].astype(jnp.float32)
        if has_residual:
            out = out + res_ref[...].astype(jnp.float32)
        o_ref[...] = out.astype(o_ref.dtype)


def _rmsnorm_matmul_kernel(x_ref, nw_ref, w_ref, o_ref, xn_sc, *, eps):
    """RMSNorm over the full feature axis fused with a matmul, tiled over N.

    The normalized row tile is computed once (at j==0) into VMEM scratch and reused
    for every N tile, so the norm cost is O(M*K) instead of O(M*K*N/tn).
    """
    @pl.when(pl.program_id(1) == 0)
    def _():
        x = x_ref[...].astype(jnp.float32)
        var = jnp.mean(x * x, axis=-1, keepdims=True)
        xn = x * jax.lax.rsqrt(var + eps) * nw_ref[...].astype(jnp.float32)
        xn_sc[...] = xn.astype(xn_sc.dtype)            # bf16 operand into the MXU

    o_ref[...] = jnp.dot(xn_sc[...], w_ref[...],
                         preferred_element_type=jnp.float32).astype(o_ref.dtype)


def _swiglu_kernel(x_ref, nw_ref, wg_ref, wu_ref, wd_ref, o_ref,
                   xn_ref, acc_ref, *, eps):
    """Fused RMSNorm -> SwiGLU MLP -> residual add, tiled over the intermediate dim."""
    l = pl.program_id(1)

    @pl.when(l == 0)
    def _():
        xf = x_ref[...].astype(jnp.float32)
        var = jnp.mean(xf * xf, axis=-1, keepdims=True)
        xn = xf * jax.lax.rsqrt(var + eps) * nw_ref[...].astype(jnp.float32)
        xn_ref[...] = xn.astype(xn_ref.dtype)
        acc_ref[...] = xf                              # residual pre-loaded into acc

    xn = xn_ref[...]
    g = jnp.dot(xn, wg_ref[...], preferred_element_type=jnp.float32)
    u = jnp.dot(xn, wu_ref[...], preferred_element_type=jnp.float32)
    a = (g * jax.nn.sigmoid(g) * u).astype(wd_ref.dtype)   # SiLU(gate) * up, bf16
    acc_ref[...] += jnp.dot(a, wd_ref[...], preferred_element_type=jnp.float32)

    @pl.when(l == pl.num_programs(1) - 1)
    def _():
        o_ref[...] = acc_ref[...].astype(o_ref.dtype)


def _flash_attn_kernel(q_ref, k_ref, v_ref, cq_ref, sq_ref, ck_ref, sk_ref,
                       o_ref, qrot_sc, m_sc, l_sc, acc_sc,
                       *, n_heads, head_dim, scale):
    """Non-causal flash attention with in-kernel RoPE; lane-dense (tq, H*hd) output.

    The Q tile is RoPE-rotated, transposed to (H, tq, hd) and pre-scaled by
    1/sqrt(hd) exactly once per q tile (jk==0) and cached in VMEM scratch.
    """
    jk = pl.program_id(2)
    tq = q_ref.shape[1]
    half = head_dim // 2

    def rope(xh, cos, sin):                            # xh: (H, t, hd); cos/sin: (t, hd)
        rot = jnp.concatenate([-xh[..., half:], xh[..., :half]], axis=-1)
        return xh * cos[None, :, :] + rot * sin[None, :, :]

    @pl.when(jk == 0)
    def _():
        m_sc[...] = jnp.full(m_sc.shape, -jnp.inf, jnp.float32)
        l_sc[...] = jnp.zeros(l_sc.shape, jnp.float32)
        acc_sc[...] = jnp.zeros(acc_sc.shape, jnp.float32)
        q = jnp.transpose(q_ref[0], (1, 0, 2)).astype(jnp.float32)   # (H, tq, hd)
        q = rope(q, cq_ref[...], sq_ref[...]) * scale
        qrot_sc[...] = q.astype(qrot_sc.dtype)                       # bf16 MXU operand

    k = jnp.transpose(k_ref[0], (1, 0, 2)).astype(jnp.float32)       # (H, tkv, hd)
    v = jnp.transpose(v_ref[0], (1, 0, 2))                           # (H, tkv, hd) bf16
    k = rope(k, ck_ref[...], sk_ref[...]).astype(k_ref.dtype)
    q = qrot_sc[...]

    s = jnp.einsum("hqd,hkd->hqk", q, k,
                   preferred_element_type=jnp.float32)               # (H, tq, tkv) f32

    m_prev = m_sc[...]
    m_new = jnp.maximum(m_prev, s.max(axis=-1, keepdims=True))
    alpha = jnp.exp(m_prev - m_new)
    p = jnp.exp(s - m_new)
    l_sc[...] = alpha * l_sc[...] + p.sum(axis=-1, keepdims=True)
    acc_sc[...] = alpha * acc_sc[...] + jnp.einsum(
        "hqk,hkd->hqd", p.astype(v.dtype), v, preferred_element_type=jnp.float32)
    m_sc[...] = m_new

    @pl.when(jk == pl.num_programs(2) - 1)
    def _():
        inv_l = pl.reciprocal(l_sc[...], approx=True)                # EUP slot
        out = acc_sc[...] * inv_l                                    # (H, tq, hd)
        out = jnp.transpose(out, (1, 0, 2)).reshape(1, tq, n_heads * head_dim)
        o_ref[...] = out.astype(o_ref.dtype)


# ------------------------------------------------------------------ wrappers --

def pallas_matmul(x, w, bias=None, residual=None, out_dtype=None,
                  tm=256, tn=256, tk=512):
    m, kdim = x.shape
    n = w.shape[1]
    if out_dtype is None:
        out_dtype = x.dtype
    tm, tn, tk = _tile(m, tm), _tile(n, tn), _tile(kdim, tk)
    grid = (m // tm, n // tn, kdim // tk)

    in_specs = [pl.BlockSpec((tm, tk), lambda i, j, k: (i, k)),
                pl.BlockSpec((tk, tn), lambda i, j, k: (k, j))]
    args = [x, w]
    if bias is not None:
        in_specs.append(pl.BlockSpec((1, tn), lambda i, j, k: (0, j)))
        args.append(jnp.reshape(bias, (1, n)))
    if residual is not None:
        in_specs.append(pl.BlockSpec((tm, tn), lambda i, j, k: (i, j)))
        args.append(residual)

    flops = 2 * m * n * kdim
    bytes_accessed = (x.size * x.dtype.itemsize + w.size * w.dtype.itemsize
                      + m * n * jnp.dtype(out_dtype).itemsize)
    return pl.pallas_call(
        functools.partial(_matmul_acc_kernel,
                          has_bias=bias is not None,
                          has_residual=residual is not None),
        grid=grid,
        in_specs=in_specs,
        out_specs=pl.BlockSpec((tm, tn), lambda i, j, k: (i, j)),
        out_shape=jax.ShapeDtypeStruct((m, n), out_dtype),
        scratch_shapes=[pltpu.VMEM((tm, tn), jnp.float32)],
        compiler_params=pltpu.CompilerParams(
            dimension_semantics=("parallel", "parallel", "arbitrary"),
            vmem_limit_bytes=_VMEM_LIMIT_BYTES),
        cost_estimate=pl.CostEstimate(flops=flops, transcendentals=0,
                                      bytes_accessed=bytes_accessed),
    )(*args)


def pallas_rmsnorm_matmul(x, norm_w, w, out_dtype=None, tm=256, tn=256, eps=_RMS_EPS):
    m, kdim = x.shape
    n = w.shape[1]
    if out_dtype is None:
        out_dtype = x.dtype
    tm, tn = _tile(m, tm), _tile(n, tn)
    grid = (m // tm, n // tn)
    flops = 2 * m * n * kdim
    bytes_accessed = (x.size * x.dtype.itemsize + w.size * w.dtype.itemsize
                      + m * n * jnp.dtype(out_dtype).itemsize)
    return pl.pallas_call(
        functools.partial(_rmsnorm_matmul_kernel, eps=eps),
        grid=grid,
        in_specs=[pl.BlockSpec((tm, kdim), lambda i, j: (i, 0)),
                  pl.BlockSpec((1, kdim), lambda i, j: (0, 0)),
                  pl.BlockSpec((kdim, tn), lambda i, j: (0, j))],
        out_specs=pl.BlockSpec((tm, tn), lambda i, j: (i, j)),
        out_shape=jax.ShapeDtypeStruct((m, n), out_dtype),
        scratch_shapes=[pltpu.VMEM((tm, kdim), w.dtype)],     # normalized x, reused over j
        compiler_params=pltpu.CompilerParams(
            dimension_semantics=("parallel", "arbitrary"),
            vmem_limit_bytes=_VMEM_LIMIT_BYTES),
        cost_estimate=pl.CostEstimate(flops=flops, transcendentals=m,
                                      bytes_accessed=bytes_accessed),
    )(x, jnp.reshape(norm_w, (1, kdim)), w)


def pallas_swiglu(x, norm_w, wg, wu, wd, tm=256, ti=512, eps=_RMS_EPS):
    m, d = x.shape
    inter = wg.shape[1]
    tm, ti = _tile(m, tm), _tile(inter, ti)
    grid = (m // tm, inter // ti)
    flops = 6 * m * inter * d
    bytes_accessed = (x.size * x.dtype.itemsize
                      + (wg.size + wu.size + wd.size) * wg.dtype.itemsize
                      + m * d * x.dtype.itemsize)
    return pl.pallas_call(
        functools.partial(_swiglu_kernel, eps=eps),
        grid=grid,
        in_specs=[pl.BlockSpec((tm, d), lambda i, l: (i, 0)),
                  pl.BlockSpec((1, d), lambda i, l: (0, 0)),
                  pl.BlockSpec((d, ti), lambda i, l: (0, l)),
                  pl.BlockSpec((d, ti), lambda i, l: (0, l)),
                  pl.BlockSpec((ti, d), lambda i, l: (l, 0))],
        out_specs=pl.BlockSpec((tm, d), lambda i, l: (i, 0)),
        out_shape=jax.ShapeDtypeStruct((m, d), x.dtype),
        scratch_shapes=[pltpu.VMEM((tm, d), x.dtype),
                        pltpu.VMEM((tm, d), jnp.float32)],
        compiler_params=pltpu.CompilerParams(
            dimension_semantics=("parallel", "arbitrary"),
            vmem_limit_bytes=_VMEM_LIMIT_BYTES),
        cost_estimate=pl.CostEstimate(flops=flops, transcendentals=m * inter,
                                      bytes_accessed=bytes_accessed),
    )(x, jnp.reshape(norm_w, (1, d)), wg, wu, wd)


def pallas_attention(q, k, v, cos, sin, n_heads, tq=256, tkv=256):
    b, t, d = q.shape
    hd = d // n_heads
    scale = 1.0 / (hd ** 0.5)
    tq, tkv = _tile(t, tq), _tile(t, tkv)
    grid = (b, t // tq, t // tkv)

    q4 = q.reshape(b, t, n_heads, hd)
    k4 = k.reshape(b, t, n_heads, hd)
    v4 = v.reshape(b, t, n_heads, hd)

    q_spec = pl.BlockSpec((1, tq, n_heads, hd), lambda bi, iq, jk: (bi, iq, 0, 0))
    kv_spec = pl.BlockSpec((1, tkv, n_heads, hd), lambda bi, iq, jk: (bi, jk, 0, 0))
    cq_spec = pl.BlockSpec((tq, hd), lambda bi, iq, jk: (iq, 0))
    ck_spec = pl.BlockSpec((tkv, hd), lambda bi, iq, jk: (jk, 0))

    flops = 4 * b * n_heads * t * t * hd
    transcendentals = b * n_heads * t * t
    bytes_accessed = (q.size + k.size + v.size + q.size) * q.dtype.itemsize

    return pl.pallas_call(
        functools.partial(_flash_attn_kernel, n_heads=n_heads, head_dim=hd,
                          scale=scale),
        grid=grid,
        in_specs=[q_spec, kv_spec, kv_spec, cq_spec, cq_spec, ck_spec, ck_spec],
        out_specs=pl.BlockSpec((1, tq, d), lambda bi, iq, jk: (bi, iq, 0)),
        out_shape=jax.ShapeDtypeStruct((b, t, d), q.dtype),
        scratch_shapes=[pltpu.VMEM((n_heads, tq, hd), q.dtype),      # RoPE'd, scaled q
                        pltpu.VMEM((n_heads, tq, 1), jnp.float32),   # m
                        pltpu.VMEM((n_heads, tq, 1), jnp.float32),   # l
                        pltpu.VMEM((n_heads, tq, hd), jnp.float32)], # acc
        compiler_params=pltpu.CompilerParams(
            dimension_semantics=("parallel", "parallel", "arbitrary"),
            vmem_limit_bytes=_VMEM_LIMIT_BYTES),
        cost_estimate=pl.CostEstimate(flops=flops, transcendentals=transcendentals,
                                      bytes_accessed=bytes_accessed),
    )(q4, k4, v4, cos, sin, cos, sin)


# --------------------------------------------------------------------- model --

def _rope_cos_sin(t, hd, base=10000.0):
    inv_freq = 1.0 / (base ** (jnp.arange(0, hd, 2, dtype=jnp.float32) / hd))
    pos = jnp.arange(t, dtype=jnp.float32)
    freqs = jnp.outer(pos, inv_freq)                 # (T, hd/2)
    emb = jnp.concatenate([freqs, freqs], axis=-1)   # (T, hd)
    return jnp.cos(emb), jnp.sin(emb)


def init_params(key, hidden, inter, vocab, embed_dim, n_layers):
    def nrm(k, shape, fan_in, dtype):
        return (jax.random.normal(k, shape, jnp.float32) / (fan_in ** 0.5)).astype(dtype)

    keys = jax.random.split(key, n_layers * 5 + 3)
    it = iter(keys)
    layers = []
    for _ in range(n_layers):
        layers.append(dict(
            attn_norm=jnp.ones((hidden,), jnp.bfloat16),
            wqkv=nrm(next(it), (hidden, 3 * hidden), hidden, jnp.bfloat16),  # fused QKV
            wo=nrm(next(it), (hidden, hidden), hidden, jnp.bfloat16),
            mlp_norm=jnp.ones((hidden,), jnp.bfloat16),
            wg=nrm(next(it), (hidden, inter), hidden, jnp.bfloat16),
            wu=nrm(next(it), (hidden, inter), hidden, jnp.bfloat16),
            wd=nrm(next(it), (inter, hidden), inter, jnp.bfloat16),
        ))
    return dict(
        layers=layers,
        final_norm=jnp.ones((hidden,), jnp.bfloat16),
        lm_head=nrm(next(it), (hidden, vocab), hidden, jnp.bfloat16),
        ln_f_w=nrm(next(it), (vocab, embed_dim), vocab, jnp.float32),
        ln_f_b=nrm(next(it), (embed_dim,), 1.0, jnp.float32) * 0.01,
    )


def transformer_forward(sequences, params, *, n_heads):
    """sequences: (B, T, hidden) float32 inputs_embeds  ->  (B, T, embed_dim) float32."""
    b, t, d = sequences.shape
    hd = d // n_heads
    cos, sin = _rope_cos_sin(t, hd)

    x = sequences.astype(jnp.bfloat16)               # autocast(bfloat16) region
    for layer in params["layers"]:
        x2d = x.reshape(b * t, d)

        # fused RMSNorm + QKV projection (single matmul against the [d, 3d] weight)
        qkv = pallas_rmsnorm_matmul(x2d, layer["attn_norm"], layer["wqkv"])
        qkv = qkv.reshape(b, t, 3 * d)
        q, k, v = qkv[..., :d], qkv[..., d:2 * d], qkv[..., 2 * d:]

        # non-causal flash attention (RoPE applied inside the kernel)
        attn = pallas_attention(q, k, v, cos, sin, n_heads)       # (B, T, d) bf16

        # output projection with the residual add fused into the writeback
        x = pallas_matmul(attn.reshape(b * t, d), layer["wo"],
                          residual=x2d, out_dtype=jnp.bfloat16).reshape(b, t, d)

        # fused RMSNorm + SwiGLU MLP + residual add, tiled over the intermediate dim
        x = pallas_swiglu(x.reshape(b * t, d), layer["mlp_norm"],
                          layer["wg"], layer["wu"], layer["wd"]).reshape(b, t, d)

    # final RMSNorm fused with lm_head -> bf16 logits (as under autocast)
    logits = pallas_rmsnorm_matmul(x.reshape(b * t, d), params["final_norm"],
                                   params["lm_head"])

    # ln_f : Linear(vocab_size -> embed_dim) in float32, K-tiled over the vocab axis
    out = pallas_matmul(logits, params["ln_f_w"], bias=params["ln_f_b"],
                        out_dtype=jnp.float32)
    embed_dim = params["ln_f_w"].shape[1]
    # TODO(synk): past_keys_values cache update is a torch.rand() side effect with no
    # functional equivalent here; only the returned tensor path is implemented.
    return out.reshape(b, t, embed_dim)


# ---------------------------------------------------------------------- main --

if __name__ == "__main__":
    # Small shapes consistent with the module's forward: sequences = inputs_embeds [B, T, hidden]
    B, T = 2, 8
    HIDDEN, N_HEADS, INTER = 32, 4, 64
    VOCAB, EMBED_DIM, N_LAYERS = 128, 32, 2

    key = jax.random.PRNGKey(0)
    k_params, k_x = jax.random.split(key)
    params = init_params(k_params, HIDDEN, INTER, VOCAB, EMBED_DIM, N_LAYERS)
    sequences = jax.random.normal(k_x, (B, T, HIDDEN), dtype=jnp.float32)

    fwd = jax.jit(transformer_forward, static_argnames=("n_heads",))
    out = fwd(sequences, params, n_heads=N_HEADS)
    out = jax.block_until_ready(out)
    assert out.shape == (B, T, EMBED_DIM) and out.dtype == jnp.float32
    print("KERNEL_OK")
</pallas_src>

<mosaic_0001>
module attributes {stable_mosaic.version = 11 : i64} {
  func.func @_rmsnorm_matmul_kernel(%arg0: i32, %arg1: i32, %arg2: memref<16x32xbf16, #tpu.memory_space<vmem>>, %arg3: memref<1x32xbf16, #tpu.memory_space<vmem>>, %arg4: memref<32x96xbf16, #tpu.memory_space<vmem>>, %arg5: memref<16x96xbf16, #tpu.memory_space<vmem>>, %arg6: memref<16x32xbf16, #tpu.memory_space<vmem>>) attributes {dimension_semantics = [#tpu.dimension_semantics<parallel>, #tpu.dimension_semantics<arbitrary>], iteration_bounds = array<i64: 1, 1>, scalar_prefetch = 0 : i64, scratch_operands = 1 : i64, tpu.core_type = #tpu.core_type<tc>, window_params = [{transform_indices = @transform_0, window_bounds = array<i64: 16, 32>}, {pipeline_mode = #tpu.pipeline_mode<synchronous>, transform_indices = @transform_1, window_bounds = array<i64: 1, 32>}, {transform_indices = @transform_2, window_bounds = array<i64: 32, 96>}, {transform_indices = @transform_3, window_bounds = array<i64: 16, 96>}]} {
    %c0_i32 = arith.constant 0 : i32
    %0 = arith.cmpi eq, %arg1, %c0_i32 : i32
    %1 = arith.extui %0 : i1 to i32
    %c0_i32_0 = arith.constant 0 : i32
    %2 = arith.cmpi ne, %1, %c0_i32_0 : i32
    scf.if %2 {
      %c0_6 = arith.constant 0 : index
      %c0_7 = arith.constant 0 : index
      %8 = vector.load %arg2[%c0_6, %c0_7] : memref<16x32xbf16, #tpu.memory_space<vmem>>, vector<16x32xbf16>
      %9 = arith.extf %8 : vector<16x32xbf16> to vector<16x32xf32>
      %10 = arith.mulf %9, %9 : vector<16x32xf32>
      %cst_8 = arith.constant dense<0.000000e+00> : vector<16xf32>
      %11 = vector.multi_reduction <add>, %10, %cst_8 [1] : vector<16x32xf32> to vector<16xf32>
      %12 = vector.shape_cast %11 : vector<16xf32> to vector<16x1xf32>
      %cst_9 = arith.constant 3.200000e+01 : f32
      %13 = vector.broadcast %cst_9 : f32 to vector<16x1xf32>
      %14 = arith.divf %12, %13 : vector<16x1xf32>
      %cst_10 = arith.constant 9.99999974E-6 : f32
      %15 = vector.broadcast %cst_10 : f32 to vector<16x1xf32>
      %16 = arith.addf %14, %15 : vector<16x1xf32>
      %17 = math.rsqrt %16 : vector<16x1xf32>
      %18 = vector.broadcast %17 : vector<16x1xf32> to vector<16x32xf32>
      %19 = arith.mulf %9, %18 : vector<16x32xf32>
      %c0_11 = arith.constant 0 : index
      %c0_12 = arith.constant 0 : index
      %20 = vector.load %arg3[%c0_11, %c0_12] : memref<1x32xbf16, #tpu.memory_space<vmem>>, vector<1x32xbf16>
      %21 = arith.extf %20 : vector<1x32xbf16> to vector<1x32xf32>
      %22 = vector.broadcast %21 : vector<1x32xf32> to vector<16x32xf32>
      %23 = arith.mulf %19, %22 : vector<16x32xf32>
      %24 = arith.truncf %23 : vector<16x32xf32> to vector<16x32xbf16>
      %c0_13 = arith.constant 0 : index
      %c0_14 = arith.constant 0 : index
      %25 = vector.load %arg6[%c0_13, %c0_14] : memref<16x32xbf16, #tpu.memory_space<vmem>>, vector<16x32xbf16>
      tpu.vector_store %arg6[%c0_13, %c0_14], %24 {strides = array<i32>} : memref<16x32xbf16, #tpu.memory_space<vmem>>, vector<16x32xbf16>,
    } else {
    }
    %c0 = arith.constant 0 : index
    %c0_1 = arith.constant 0 : index
    %3 = vector.load %arg6[%c0, %c0_1] : memref<16x32xbf16, #tpu.memory_space<vmem>>, vector<16x32xbf16>
    %c0_2 = arith.constant 0 : index
    %c0_3 = arith.constant 0 : index
    %4 = vector.load %arg4[%c0_2, %c0_3] : memref<32x96xbf16, #tpu.memory_space<vmem>>, vector<32x96xbf16>
    %cst = arith.constant dense<0.000000e+00> : vector<16x96xf32>
    %5 = tpu.matmul %3, %4, %cst {dimension_numbers = #tpu.dot_dimension_numbers<[1], [0], [0], [1], [0, 0, 1, 1], [], []>} : vector<16x32xbf16>, vector<32x96xbf16>, vector<16x96xf32> -> vector<16x96xf32>
    %6 = arith.truncf %5 : vector<16x96xf32> to vector<16x96xbf16>
    %c0_4 = arith.constant 0 : index
    %c0_5 = arith.constant 0 : index
    %7 = vector.load %arg5[%c0_4, %c0_5] : memref<16x96xbf16, #tpu.memory_space<vmem>>, vector<16x96xbf16>
    tpu.vector_store %arg5[%c0_4, %c0_5], %6 {strides = array<i32>} : memref<16x96xbf16, #tpu.memory_space<vmem>>, vector<16x96xbf16>,
    return
  }
  func.func @transform_0(%arg0: i32, %arg1: i32) -> (i32, i32) {
    %c0_i32 = arith.constant 0 : i32
    %c0_i32_0 = arith.constant 0 : i32
    return %arg0, %c0_i32 : i32, i32
  }
  func.func @transform_1(%arg0: i32, %arg1: i32) -> (i32, i32) {
    %c0_i32 = arith.constant 0 : i32
    %c0_i32_0 = arith.constant 0 : i32
    %c0_i32_1 = arith.constant 0 : i32
    return %c0_i32, %c0_i32_0 : i32, i32
  }
  func.func @transform_2(%arg0: i32, %arg1: i32) -> (i32, i32) {
    %c0_i32 = arith.constant 0 : i32
    %c0_i32_0 = arith.constant 0 : i32
    return %c0_i32, %arg1 : i32, i32
  }
  func.func @transform_3(%arg0: i32, %arg1: i32) -> (i32, i32) {
    %c0_i32 = arith.constant 0 : i32
    return %arg0, %arg1 : i32, i32
  }
}

module attributes {stable_mosaic.version = 11 : i64} {
  func.func @_flash_attn_kernel(%arg0: i32, %arg1: i32, %arg2: i32, %arg3: memref<1x8x4x8xbf16, #tpu.memory_space<vmem>>, %arg4: memref<1x8x4x8xbf16, #tpu.memory_space<vmem>>, %arg5: memref<1x8x4x8xbf16, #tpu.memory_space<vmem>>, %arg6: memref<8x8xf32, #tpu.memory_space<vmem>>, %arg7: memref<8x8xf32, #tpu.memory_space<vmem>>, %arg8: memref<8x8xf32, #tpu.memory_space<vmem>>, %arg9: memref<8x8xf32, #tpu.memory_space<vmem>>, %arg10: memref<1x8x32xbf16, #tpu.memory_space<vmem>>, %arg11: memref<4x8x8xbf16, #tpu.memory_space<vmem>>, %arg12: memref<4x8x1xf32, #tpu.memory_space<vmem>>, %arg13: memref<4x8x1xf32, #tpu.memory_space<vmem>>, %arg14: memref<4x8x8xf32, #tpu.memory_space<vmem>>) attributes {dimension_semantics = [#tpu.dimension_semantics<parallel>, #tpu.dimension_semantics<parallel>, #tpu.dimension_semantics<arbitrary>], iteration_bounds = array<i64: 2, 1, 1>, scalar_prefetch = 0 : i64, scratch_operands = 4 : i64, tpu.core_type = #tpu.core_type<tc>, window_params = [{transform_indices = @transform_0, window_bounds = array<i64: 1, 8, 4, 8>}, {transform_indices = @transform_1, window_bounds = array<i64: 1, 8, 4, 8>}, {transform_indices = @transform_2, window_bounds = array<i64: 1, 8, 4, 8>}, {transform_indices = @transform_3, window_bounds = array<i64: 8, 8>}, {transform_indices = @transform_4, window_bounds = array<i64: 8, 8>}, {transform_indices = @transform_5, window_bounds = array<i64: 8, 8>}, {transform_indices = @transform_6, window_bounds = array<i64: 8, 8>}, {transform_indices = @transform_7, window_bounds = array<i64: 1, 8, 32>}]} {
    %c0_i32 = arith.constant 0 : i32
    %0 = arith.cmpi eq, %arg2, %c0_i32 : i32
    %1 = arith.extui %0 : i1 to i32
    %c0_i32_0 = arith.constant 0 : i32
    %2 = arith.cmpi ne, %1, %c0_i32_0 : i32
    scf.if %2 {
      %cst_39 = arith.constant 0xFF800000 : f32
      %53 = vector.broadcast %cst_39 : f32 to vector<4x8x1xf32>
      %c0_40 = arith.constant 0 : index
      %c0_41 = arith.constant 0 : index
      %c0_42 = arith.constant 0 : index
      %54 = vector.load %arg12[%c0_40, %c0_41, %c0_42] : memref<4x8x1xf32, #tpu.memory_space<vmem>>, vector<4x8x1xf32>
      tpu.vector_store %arg12[%c0_40, %c0_41, %c0_42], %53 {strides = array<i32>} : memref<4x8x1xf32, #tpu.memory_space<vmem>>, vector<4x8x1xf32>,
      %cst_43 = arith.constant 0.000000e+00 : f32
      %55 = vector.broadcast %cst_43 : f32 to vector<4x8x1xf32>
      %c0_44 = arith.constant 0 : index
      %c0_45 = arith.constant 0 : index
      %c0_46 = arith.constant 0 : index
      %56 = vector.load %arg13[%c0_44, %c0_45, %c0_46] : memref<4x8x1xf32, #tpu.memory_space<vmem>>, vector<4x8x1xf32>
      tpu.vector_store %arg13[%c0_44, %c0_45, %c0_46], %55 {strides = array<i32>} : memref<4x8x1xf32, #tpu.memory_space<vmem>>, vector<4x8x1xf32>,
      %cst_47 = arith.constant 0.000000e+00 : f32
      %57 = vector.broadcast %cst_47 : f32 to vector<4x8x8xf32>
      %c0_48 = arith.constant 0 : index
      %c0_49 = arith.constant 0 : index
      %c0_50 = arith.constant 0 : index
      %58 = vector.load %arg14[%c0_48, %c0_49, %c0_50] : memref<4x8x8xf32, #tpu.memory_space<vmem>>, vector<4x8x8xf32>
      tpu.vector_store %arg14[%c0_48, %c0_49, %c0_50], %57 {strides = array<i32>} : memref<4x8x8xf32, #tpu.memory_space<vmem>>, vector<4x8x8xf32>,
      %c0_51 = arith.constant 0 : index
      %c0_52 = arith.constant 0 : index
      %c0_53 = arith.constant 0 : index
      %c0_54 = arith.constant 0 : index
      %59 = vector.load %arg3[%c0_51, %c0_52, %c0_53, %c0_54] : memref<1x8x4x8xbf16, #tpu.memory_space<vmem>>, vector<1x8x4x8xbf16>
      %60 = vector.shape_cast %59 : vector<1x8x4x8xbf16> to vector<8x4x8xbf16>
      %61 = tpu.transpose %60, [1, 0, 2] : vector<8x4x8xbf16> -> vector<4x8x8xbf16>
      %62 = arith.extf %61 : vector<4x8x8xbf16> to vector<4x8x8xf32>
      %c0_55 = arith.constant 0 : index
      %c0_56 = arith.constant 0 : index
      %63 = vector.load %arg6[%c0_55, %c0_56] : memref<8x8xf32, #tpu.memory_space<vmem>>, vector<8x8xf32>
      %c0_57 = arith.constant 0 : index
      %c0_58 = arith.constant 0 : index
      %64 = vector.load %arg7[%c0_57, %c0_58] : memref<8x8xf32, #tpu.memory_space<vmem>>, vector<8x8xf32>
      %65 = vector.extract_strided_slice %62 {offsets = [0, 0, 4], sizes = [4, 8, 4], strides = [1, 1, 1]} : vector<4x8x8xf32> to vector<4x8x4xf32>
      %cst_59 = arith.constant 0.000000e+00 : f32
      %66 = vector.broadcast %cst_59 : f32 to vector<4x8x4xf32>
      %67 = arith.subf %66, %65 : vector<4x8x4xf32>
      %68 = vector.extract_strided_slice %62 {offsets = [0, 0, 0], sizes = [4, 8, 4], strides = [1, 1, 1]} : vector<4x8x8xf32> to vector<4x8x4xf32>
      %69 = tpu.concatenate %67, %68 in 2 : vector<4x8x4xf32>, vector<4x8x4xf32> -> vector<4x8x8xf32>
      %70 = vector.shape_cast %63 : vector<8x8xf32> to vector<1x8x8xf32>
      %71 = vector.broadcast %70 : vector<1x8x8xf32> to vector<4x8x8xf32>
      %72 = arith.mulf %62, %71 : vector<4x8x8xf32>
      %73 = vector.shape_cast %64 : vector<8x8xf32> to vector<1x8x8xf32>
      %74 = vector.broadcast %73 : vector<1x8x8xf32> to vector<4x8x8xf32>
      %75 = arith.mulf %69, %74 : vector<4x8x8xf32>
      %76 = arith.addf %72, %75 : vector<4x8x8xf32>
      %cst_60 = arith.constant 0.353553385 : f32
      %77 = vector.broadcast %cst_60 : f32 to vector<4x8x8xf32>
      %78 = arith.mulf %76, %77 : vector<4x8x8xf32>
      %79 = arith.truncf %78 : vector<4x8x8xf32> to vector<4x8x8xbf16>
      %c0_61 = arith.constant 0 : index
      %c0_62 = arith.constant 0 : index
      %c0_63 = arith.constant 0 : index
      %80 = vector.load %arg11[%c0_61, %c0_62, %c0_63] : memref<4x8x8xbf16, #tpu.memory_space<vmem>>, vector<4x8x8xbf16>
      tpu.vector_store %arg11[%c0_61, %c0_62, %c0_63], %79 {strides = array<i32>} : memref<4x8x8xbf16, #tpu.memory_space<vmem>>, vector<4x8x8xbf16>,
    } else {
    }
    %c0 = arith.constant 0 : index
    %c0_1 = arith.constant 0 : index
    %c0_2 = arith.constant 0 : index
    %c0_3 = arith.constant 0 : index
    %3 = vector.load %arg4[%c0, %c0_1, %c0_2, %c0_3] : memref<1x8x4x8xbf16, #tpu.memory_space<vmem>>, vector<1x8x4x8xbf16>
    %4 = vector.shape_cast %3 : vector<1x8x4x8xbf16> to vector<8x4x8xbf16>
    %5 = tpu.transpose %4, [1, 0, 2] : vector<8x4x8xbf16> -> vector<4x8x8xbf16>
    %6 = arith.extf %5 : vector<4x8x8xbf16> to vector<4x8x8xf32>
    %c0_4 = arith.constant 0 : index
    %c0_5 = arith.constant 0 : index
    %c0_6 = arith.constant 0 : index
    %c0_7 = arith.constant 0 : index
    %7 = vector.load %arg5[%c0_4, %c0_5, %c0_6, %c0_7] : memref<1x8x4x8xbf16, #tpu.memory_space<vmem>>, vector<1x8x4x8xbf16>
    %8 = vector.shape_cast %7 : vector<1x8x4x8xbf16> to vector<8x4x8xbf16>
    %9 = tpu.transpose %8, [1, 0, 2] : vector<8x4x8xbf16> -> vector<4x8x8xbf16>
    %c0_8 = arith.constant 0 : index
    %c0_9 = arith.constant 0 : index
    %10 = vector.load %arg8[%c0_8, %c0_9] : memref<8x8xf32, #tpu.memory_space<vmem>>, vector<8x8xf32>
    %c0_10 = arith.constant 0 : index
    %c0_11 = arith.constant 0 : index
    %11 = vector.load %arg9[%c0_10, %c0_11] : memref<8x8xf32, #tpu.memory_space<vmem>>, vector<8x8xf32>
    %12 = vector.extract_strided_slice %6 {offsets = [0, 0, 4], sizes = [4, 8, 4], strides = [1, 1, 1]} : vector<4x8x8xf32> to vector<4x8x4xf32>
    %cst = arith.constant 0.000000e+00 : f32
    %13 = vector.broadcast %cst : f32 to vector<4x8x4xf32>
    %14 = arith.subf %13, %12 : vector<4x8x4xf32>
    %15 = vector.extract_strided_slice %6 {offsets = [0, 0, 0], sizes = [4, 8, 4], strides = [1, 1, 1]} : vector<4x8x8xf32> to vector<4x8x4xf32>
    %16 = tpu.concatenate %14, %15 in 2 : vector<4x8x4xf32>, vector<4x8x4xf32> -> vector<4x8x8xf32>
    %17 = vector.shape_cast %10 : vector<8x8xf32> to vector<1x8x8xf32>
    %18 = vector.broadcast %17 : vector<1x8x8xf32> to vector<4x8x8xf32>
    %19 = arith.mulf %6, %18 : vector<4x8x8xf32>
    %20 = vector.shape_cast %11 : vector<8x8xf32> to vector<1x8x8xf32>
    %21 = vector.broadcast %20 : vector<1x8x8xf32> to vector<4x8x8xf32>
    %22 = arith.mulf %16, %21 : vector<4x8x8xf32>
    %23 = arith.addf %19, %22 : vector<4x8x8xf32>
    %24 = arith.truncf %23 : vector<4x8x8xf32> to vector<4x8x8xbf16>
    %c0_12 = arith.constant 0 : index
    %c0_13 = arith.constant 0 : index
    %c0_14 = arith.constant 0 : index
    %25 = vector.load %arg11[%c0_12, %c0_13, %c0_14] : memref<4x8x8xbf16, #tpu.memory_space<vmem>>, vector<4x8x8xbf16>
    "tpu.trace_start"() <{level = 10 : i32, message = "hqd,hkd->hqk"}> : () -> ()
    %cst_15 = arith.constant dense<0.000000e+00> : vector<4x8x8xf32>
    %26 = tpu.matmul %25, %24, %cst_15 {dimension_numbers = #tpu.dot_dimension_numbers<[2], [2], [1], [1], [0, 0, 0, 1, 1, 1], [0], [0]>} : vector<4x8x8xbf16>, vector<4x8x8xbf16>, vector<4x8x8xf32> -> vector<4x8x8xf32>
    "tpu.trace_stop"() : () -> ()
    %c0_16 = arith.constant 0 : index
    %c0_17 = arith.constant 0 : index
    %c0_18 = arith.constant 0 : index
    %27 = vector.load %arg12[%c0_16, %c0_17, %c0_18] : memref<4x8x1xf32, #tpu.memory_space<vmem>>, vector<4x8x1xf32>
    %cst_19 = arith.constant dense<0xFF800000> : vector<4x8xf32>
    %28 = vector.multi_reduction <maximumf>, %26, %cst_19 [2] : vector<4x8x8xf32> to vector<4x8xf32>
    %29 = vector.shape_cast %28 : vector<4x8xf32> to vector<4x8x1xf32>
    %30 = arith.maximumf %27, %29 : vector<4x8x1xf32>
    %31 = arith.subf %27, %30 : vector<4x8x1xf32>
    %32 = math.exp %31 : vector<4x8x1xf32>
    %33 = vector.broadcast %30 : vector<4x8x1xf32> to vector<4x8x8xf32>
    %34 = arith.subf %26, %33 : vector<4x8x8xf32>
    %35 = math.exp %34 : vector<4x8x8xf32>
    %c0_20 = arith.constant 0 : index
    %c0_21 = arith.constant 0 : index
    %c0_22 = arith.constant 0 : index
    %36 = vector.load %arg13[%c0_20, %c0_21, %c0_22] : memref<4x8x1xf32, #tpu.memory_space<vmem>>, vector<4x8x1xf32>
    %37 = arith.mulf %32, %36 : vector<4x8x1xf32>
    %cst_23 = arith.constant dense<0.000000e+00> : vector<4x8xf32>
    %38 = vector.multi_reduction <add>, %35, %cst_23 [2] : vector<4x8x8xf32> to vector<4x8xf32>
    %39 = vector.shape_cast %38 : vector<4x8xf32> to vector<4x8x1xf32>
    %40 = arith.addf %37, %39 : vector<4x8x1xf32>
    %c0_24 = arith.constant 0 : index
    %c0_25 = arith.constant 0 : index
    %c0_26 = arith.constant 0 : index
    %41 = vector.load %arg13[%c0_24, %c0_25, %c0_26] : memref<4x8x1xf32, #tpu.memory_space<vmem>>, vector<4x8x1xf32>
    tpu.vector_store %arg13[%c0_24, %c0_25, %c0_26], %40 {strides = array<i32>} : memref<4x8x1xf32, #tpu.memory_space<vmem>>, vector<4x8x1xf32>,
    %c0_27 = arith.constant 0 : index
    %c0_28 = arith.constant 0 : index
    %c0_29 = arith.constant 0 : index
    %42 = vector.load %arg14[%c0_27, %c0_28, %c0_29] : memref<4x8x8xf32, #tpu.memory_space<vmem>>, vector<4x8x8xf32>
    %43 = vector.broadcast %32 : vector<4x8x1xf32> to vector<4x8x8xf32>
    %44 = arith.mulf %43, %42 : vector<4x8x8xf32>
    %45 = arith.truncf %35 : vector<4x8x8xf32> to vector<4x8x8xbf16>
    "tpu.trace_start"() <{level = 10 : i32, message = "hqk,hkd->hqd"}> : () -> ()
    %cst_30 = arith.constant dense<0.000000e+00> : vector<4x8x8xf32>
    %46 = tpu.matmul %45, %9, %cst_30 {dimension_numbers = #tpu.dot_dimension_numbers<[2], [1], [1], [2], [0, 0, 0, 1, 1, 2], [0], [0]>} : vector<4x8x8xbf16>, vector<4x8x8xbf16>, vector<4x8x8xf32> -> vector<4x8x8xf32>
    "tpu.trace_stop"() : () -> ()
    %47 = arith.addf %44, %46 : vector<4x8x8xf32>
    %c0_31 = arith.constant 0 : index
    %c0_32 = arith.constant 0 : index
    %c0_33 = arith.constant 0 : index
    %48 = vector.load %arg14[%c0_31, %c0_32, %c0_33] : memref<4x8x8xf32, #tpu.memory_space<vmem>>, vector<4x8x8xf32>
    tpu.vector_store %arg14[%c0_31, %c0_32, %c0_33], %47 {strides = array<i32>} : memref<4x8x8xf32, #tpu.memory_space<vmem>>, vector<4x8x8xf32>,
    %c0_34 = arith.constant 0 : index
    %c0_35 = arith.constant 0 : index
    %c0_36 = arith.constant 0 : index
    %49 = vector.load %arg12[%c0_34, %c0_35, %c0_36] : memref<4x8x1xf32, #tpu.memory_space<vmem>>, vector<4x8x1xf32>
    tpu.vector_store %arg12[%c0_34, %c0_35, %c0_36], %30 {strides = array<i32>} : memref<4x8x1xf32, #tpu.memory_space<vmem>>, vector<4x8x1xf32>,
    %c0_i32_37 = arith.constant 0 : i32
    %50 = arith.cmpi eq, %arg2, %c0_i32_37 : i32
    %51 = arith.extui %50 : i1 to i32
    %c0_i32_38 = arith.constant 0 : i32
    %52 = arith.cmpi ne, %51, %c0_i32_38 : i32
    scf.if %52 {
      %c0_39 = arith.constant 0 : index
      %c0_40 = arith.constant 0 : index
      %c0_41 = arith.constant 0 : index
      %53 = vector.load %arg13[%c0_39, %c0_40, %c0_41] : memref<4x8x1xf32, #tpu.memory_space<vmem>>, vector<4x8x1xf32>
      %54 = tpu.reciprocal %53 {approx = true} : vector<4x8x1xf32> -> vector<4x8x1xf32>
      %c0_42 = arith.constant 0 : index
      %c0_43 = arith.constant 0 : index
      %c0_44 = arith.constant 0 : index
      %55 = vector.load %arg14[%c0_42, %c0_43, %c0_44] : memref<4x8x8xf32, #tpu.memory_space<vmem>>, vector<4x8x8xf32>
      %56 = vector.broadcast %54 : vector<4x8x1xf32> to vector<4x8x8xf32>
      %57 = arith.mulf %55, %56 : vector<4x8x8xf32>
      %58 = tpu.transpose %57, [1, 0, 2] : vector<4x8x8xf32> -> vector<8x4x8xf32>
      %59 = vector.shape_cast %58 : vector<8x4x8xf32> to vector<1x8x32xf32>
      %60 = arith.truncf %59 : vector<1x8x32xf32> to vector<1x8x32xbf16>
      %c0_45 = arith.constant 0 : index
      %c0_46 = arith.constant 0 : index
      %c0_47 = arith.constant 0 : index
      %61 = vector.load %arg10[%c0_45, %c0_46, %c0_47] : memref<1x8x32xbf16, #tpu.memory_space<vmem>>, vector<1x8x32xbf16>
      tpu.vector_store %arg10[%c0_45, %c0_46, %c0_47], %60 {strides = array<i32>} : memref<1x8x32xbf16, #tpu.memory_space<vmem>>, vector<1x8x32xbf16>,
    } else {
    }
    return
  }
  func.func @transform_0(%arg0: i32, %arg1: i32, %arg2: i32) -> (i32, i32, i32, i32) {
    %c0_i32 = arith.constant 0 : i32
    %c0_i32_0 = arith.constant 0 : i32
    %c0_i32_1 = arith.constant 0 : i32
    return %arg0, %arg1, %c0_i32, %c0_i32_0 : i32, i32, i32, i32
  }
  func.func @transform_1(%arg0: i32, %arg1: i32, %arg2: i32) -> (i32, i32, i32, i32) {
    %c0_i32 = arith.constant 0 : i32
    %c0_i32_0 = arith.constant 0 : i32
    %c0_i32_1 = arith.constant 0 : i32
    return %arg0, %arg2, %c0_i32, %c0_i32_0 : i32, i32, i32, i32
  }
  func.func @transform_2(%arg0: i32, %arg1: i32, %arg2: i32) -> (i32, i32, i32, i32) {
    %c0_i32 = arith.constant 0 : i32
    %c0_i32_0 = arith.constant 0 : i32
    %c0_i32_1 = arith.constant 0 : i32
    return %arg0, %arg2, %c0_i32, %c0_i32_0 : i32, i32, i32, i32
  }
  func.func @transform_3(%arg0: i32, %arg1: i32, %arg2: i32) -> (i32, i32) {
    %c0_i32 = arith.constant 0 : i32
    %c0_i32_0 = arith.constant 0 : i32
    return %arg1, %c0_i32 : i32, i32
  }
  func.func @transform_4(%arg0: i32, %arg1: i32, %arg2: i32) -> (i32, i32) {
    %c0_i32 = arith.constant 0 : i32
    %c0_i32_0 = arith.constant 0 : i32
    return %arg1, %c0_i32 : i32, i32
  }
  func.func @transform_5(%arg0: i32, %arg1: i32, %arg2: i32) -> (i32, i32) {
    %c0_i32 = arith.constant 0 : i32
    %c0_i32_0 = arith.constant 0 : i32
    return %arg2, %c0_i32 : i32, i32
  }
  func.func @transform_6(%arg0: i32, %arg1: i32, %arg2: i32) -> (i32, i32) {
    %c0_i32 = arith.constant 0 : i32
    %c0_i32_0 = arith.constant 0 : i32
    return %arg2, %c0_i32 : i32, i32
  }
  func.func @transform_7(%arg0: i32, %arg1: i32, %arg2: i32) -> (i32, i32, i32) {
    %c0_i32 = arith.constant 0 : i32
    %c0_i32_0 = arith.constant 0 : i32
    return %arg0, %arg1, %c0_i32 : i32, i32, i32
  }
}

module attributes {stable_mosaic.version = 11 : i64} {
  func.func @_matmul_acc_kernel(%arg0: i32, %arg1: i32, %arg2: i32, %arg3: memref<16x32xbf16, #tpu.memory_space<vmem>>, %arg4: memref<32x32xbf16, #tpu.memory_space<vmem>>, %arg5: memref<16x32xbf16, #tpu.memory_space<vmem>>, %arg6: memref<16x32xbf16, #tpu.memory_space<vmem>>, %arg7: memref<16x32xf32, #tpu.memory_space<vmem>>) attributes {dimension_semantics = [#tpu.dimension_semantics<parallel>, #tpu.dimension_semantics<parallel>, #tpu.dimension_semantics<arbitrary>], iteration_bounds = array<i64: 1, 1, 1>, scalar_prefetch = 0 : i64, scratch_operands = 1 : i64, tpu.core_type = #tpu.core_type<tc>, window_params = [{transform_indices = @transform_0, window_bounds = array<i64: 16, 32>}, {transform_indices = @transform_1, window_bounds = array<i64: 32, 32>}, {transform_indices = @transform_2, window_bounds = array<i64: 16, 32>}, {transform_indices = @transform_3, window_bounds = array<i64: 16, 32>}]} {
    %c0_i32 = arith.constant 0 : i32
    %0 = arith.cmpi eq, %arg2, %c0_i32 : i32
    %1 = arith.extui %0 : i1 to i32
    %c0_i32_0 = arith.constant 0 : i32
    %2 = arith.cmpi ne, %1, %c0_i32_0 : i32
    scf.if %2 {
      %cst_10 = arith.constant 0.000000e+00 : f32
      %12 = vector.broadcast %cst_10 : f32 to vector<16x32xf32>
      %c0_11 = arith.constant 0 : index
      %c0_12 = arith.constant 0 : index
      %13 = vector.load %arg7[%c0_11, %c0_12] : memref<16x32xf32, #tpu.memory_space<vmem>>, vector<16x32xf32>
      tpu.vector_store %arg7[%c0_11, %c0_12], %12 {strides = array<i32>} : memref<16x32xf32, #tpu.memory_space<vmem>>, vector<16x32xf32>,
    } else {
    }
    %c0 = arith.constant 0 : index
    %c0_1 = arith.constant 0 : index
    %3 = vector.load %arg7[%c0, %c0_1] : memref<16x32xf32, #tpu.memory_space<vmem>>, vector<16x32xf32>
    %c0_2 = arith.constant 0 : index
    %c0_3 = arith.constant 0 : index
    %4 = vector.load %arg3[%c0_2, %c0_3] : memref<16x32xbf16, #tpu.memory_space<vmem>>, vector<16x32xbf16>
    %c0_4 = arith.constant 0 : index
    %c0_5 = arith.constant 0 : index
    %5 = vector.load %arg4[%c0_4, %c0_5] : memref<32x32xbf16, #tpu.memory_space<vmem>>, vector<32x32xbf16>
    %cst = arith.constant dense<0.000000e+00> : vector<16x32xf32>
    %6 = tpu.matmul %4, %5, %cst {dimension_numbers = #tpu.dot_dimension_numbers<[1], [0], [0], [1], [0, 0, 1, 1], [], []>} : vector<16x32xbf16>, vector<32x32xbf16>, vector<16x32xf32> -> vector<16x32xf32>
    %7 = arith.addf %3, %6 : vector<16x32xf32>
    %c0_6 = arith.constant 0 : index
    %c0_7 = arith.constant 0 : index
    %8 = vector.load %arg7[%c0_6, %c0_7] : memref<16x32xf32, #tpu.memory_space<vmem>>, vector<16x32xf32>
    tpu.vector_store %arg7[%c0_6, %c0_7], %7 {strides = array<i32>} : memref<16x32xf32, #tpu.memory_space<vmem>>, vector<16x32xf32>,
    %c0_i32_8 = arith.constant 0 : i32
    %9 = arith.cmpi eq, %arg2, %c0_i32_8 : i32
    %10 = arith.extui %9 : i1 to i32
    %c0_i32_9 = arith.constant 0 : i32
    %11 = arith.cmpi ne, %10, %c0_i32_9 : i32
    scf.if %11 {
      %c0_10 = arith.constant 0 : index
      %c0_11 = arith.constant 0 : index
      %12 = vector.load %arg7[%c0_10, %c0_11] : memref<16x32xf32, #tpu.memory_space<vmem>>, vector<16x32xf32>
      %c0_12 = arith.constant 0 : index
      %c0_13 = arith.constant 0 : index
      %13 = vector.load %arg5[%c0_12, %c0_13] : memref<16x32xbf16, #tpu.memory_space<vmem>>, vector<16x32xbf16>
      %14 = arith.extf %13 : vector<16x32xbf16> to vector<16x32xf32>
      %15 = arith.addf %12, %14 : vector<16x32xf32>
      %16 = arith.truncf %15 : vector<16x32xf32> to vector<16x32xbf16>
      %c0_14 = arith.constant 0 : index
      %c0_15 = arith.constant 0 : index
      %17 = vector.load %arg6[%c0_14, %c0_15] : memref<16x32xbf16, #tpu.memory_space<vmem>>, vector<16x32xbf16>
      tpu.vector_store %arg6[%c0_14, %c0_15], %16 {strides = array<i32>} : memref<16x32xbf16, #tpu.memory_space<vmem>>, vector<16x32xbf16>,
    } else {
    }
    return
  }
  func.func @transform_0(%arg0: i32, %arg1: i32, %arg2: i32) -> (i32, i32) {
    %c0_i32 = arith.constant 0 : i32
    return %arg0, %arg2 : i32, i32
  }
  func.func @transform_1(%arg0: i32, %arg1: i32, %arg2: i32) -> (i32, i32) {
    %c0_i32 = arith.constant 0 : i32
    return %arg2, %arg1 : i32, i32
  }
  func.func @transform_2(%arg0: i32, %arg1: i32, %arg2: i32) -> (i32, i32) {
    %c0_i32 = arith.constant 0 : i32
    return %arg0, %arg1 : i32, i32
  }
  func.func @transform_3(%arg0: i32, %arg1: i32, %arg2: i32) -> (i32, i32) {
    %c0_i32 = arith.constant 0 : i32
    return %arg0, %arg1 : i32, i32
  }
}

module attributes {stable_mosaic.version = 11 : i64} {
  func.func @_swiglu_kernel(%arg0: i32, %arg1: i32, %arg2: memref<16x32xbf16, #tpu.memory_space<vmem>>, %arg3: memref<1x32xbf16, #tpu.memory_space<vmem>>, %arg4: memref<32x64xbf16, #tpu.memory_space<vmem>>, %arg5: memref<32x64xbf16, #tpu.memory_space<vmem>>, %arg6: memref<64x32xbf16, #tpu.memory_space<vmem>>, %arg7: memref<16x32xbf16, #tpu.memory_space<vmem>>, %arg8: memref<16x32xbf16, #tpu.memory_space<vmem>>, %arg9: memref<16x32xf32, #tpu.memory_space<vmem>>) attributes {dimension_semantics = [#tpu.dimension_semantics<parallel>, #tpu.dimension_semantics<arbitrary>], iteration_bounds = array<i64: 1, 1>, scalar_prefetch = 0 : i64, scratch_operands = 2 : i64, tpu.core_type = #tpu.core_type<tc>, window_params = [{transform_indices = @transform_0, window_bounds = array<i64: 16, 32>}, {pipeline_mode = #tpu.pipeline_mode<synchronous>, transform_indices = @transform_1, window_bounds = array<i64: 1, 32>}, {transform_indices = @transform_2, window_bounds = array<i64: 32, 64>}, {transform_indices = @transform_3, window_bounds = array<i64: 32, 64>}, {transform_indices = @transform_4, window_bounds = array<i64: 64, 32>}, {transform_indices = @transform_5, window_bounds = array<i64: 16, 32>}]} {
    %c0_i32 = arith.constant 0 : i32
    %0 = arith.cmpi eq, %arg1, %c0_i32 : i32
    %1 = arith.extui %0 : i1 to i32
    %c0_i32_0 = arith.constant 0 : i32
    %2 = arith.cmpi ne, %1, %c0_i32_0 : i32
    scf.if %2 {
      %c0_17 = arith.constant 0 : index
      %c0_18 = arith.constant 0 : index
      %24 = vector.load %arg2[%c0_17, %c0_18] : memref<16x32xbf16, #tpu.memory_space<vmem>>, vector<16x32xbf16>
      %25 = arith.extf %24 : vector<16x32xbf16> to vector<16x32xf32>
      %26 = arith.mulf %25, %25 : vector<16x32xf32>
      %cst_19 = arith.constant dense<0.000000e+00> : vector<16xf32>
      %27 = vector.multi_reduction <add>, %26, %cst_19 [1] : vector<16x32xf32> to vector<16xf32>
      %28 = vector.shape_cast %27 : vector<16xf32> to vector<16x1xf32>
      %cst_20 = arith.constant 3.200000e+01 : f32
      %29 = vector.broadcast %cst_20 : f32 to vector<16x1xf32>
      %30 = arith.divf %28, %29 : vector<16x1xf32>
      %cst_21 = arith.constant 9.99999974E-6 : f32
      %31 = vector.broadcast %cst_21 : f32 to vector<16x1xf32>
      %32 = arith.addf %30, %31 : vector<16x1xf32>
      %33 = math.rsqrt %32 : vector<16x1xf32>
      %34 = vector.broadcast %33 : vector<16x1xf32> to vector<16x32xf32>
      %35 = arith.mulf %25, %34 : vector<16x32xf32>
      %c0_22 = arith.constant 0 : index
      %c0_23 = arith.constant 0 : index
      %36 = vector.load %arg3[%c0_22, %c0_23] : memref<1x32xbf16, #tpu.memory_space<vmem>>, vector<1x32xbf16>
      %37 = arith.extf %36 : vector<1x32xbf16> to vector<1x32xf32>
      %38 = vector.broadcast %37 : vector<1x32xf32> to vector<16x32xf32>
      %39 = arith.mulf %35, %38 : vector<16x32xf32>
      %40 = arith.truncf %39 : vector<16x32xf32> to vector<16x32xbf16>
      %c0_24 = arith.constant 0 : index
      %c0_25 = arith.constant 0 : index
      %41 = vector.load %arg8[%c0_24, %c0_25] : memref<16x32xbf16, #tpu.memory_space<vmem>>, vector<16x32xbf16>
      tpu.vector_store %arg8[%c0_24, %c0_25], %40 {strides = array<i32>} : memref<16x32xbf16, #tpu.memory_space<vmem>>, vector<16x32xbf16>,
      %c0_26 = arith.constant 0 : index
      %c0_27 = arith.constant 0 : index
      %42 = vector.load %arg9[%c0_26, %c0_27] : memref<16x32xf32, #tpu.memory_space<vmem>>, vector<16x32xf32>
      tpu.vector_store %arg9[%c0_26, %c0_27], %25 {strides = array<i32>} : memref<16x32xf32, #tpu.memory_space<vmem>>, vector<16x32xf32>,
    } else {
    }
    %c0 = arith.constant 0 : index
    %c0_1 = arith.constant 0 : index
    %3 = vector.load %arg8[%c0, %c0_1] : memref<16x32xbf16, #tpu.memory_space<vmem>>, vector<16x32xbf16>
    %c0_2 = arith.constant 0 : index
    %c0_3 = arith.constant 0 : index
    %4 = vector.load %arg4[%c0_2, %c0_3] : memref<32x64xbf16, #tpu.memory_space<vmem>>, vector<32x64xbf16>
    %cst = arith.constant dense<0.000000e+00> : vector<16x64xf32>
    %5 = tpu.matmul %3, %4, %cst {dimension_numbers = #tpu.dot_dimension_numbers<[1], [0], [0], [1], [0, 0, 1, 1], [], []>} : vector<16x32xbf16>, vector<32x64xbf16>, vector<16x64xf32> -> vector<16x64xf32>
    %c0_4 = arith.constant 0 : index
    %c0_5 = arith.constant 0 : index
    %6 = vector.load %arg5[%c0_4, %c0_5] : memref<32x64xbf16, #tpu.memory_space<vmem>>, vector<32x64xbf16>
    %cst_6 = arith.constant dense<0.000000e+00> : vector<16x64xf32>
    %7 = tpu.matmul %3, %6, %cst_6 {dimension_numbers = #tpu.dot_dimension_numbers<[1], [0], [0], [1], [0, 0, 1, 1], [], []>} : vector<16x32xbf16>, vector<32x64xbf16>, vector<16x64xf32> -> vector<16x64xf32>
    %8 = arith.negf %5 : vector<16x64xf32>
    %9 = math.exp %8 : vector<16x64xf32>
    %cst_7 = arith.constant 1.000000e+00 : f32
    %10 = vector.broadcast %cst_7 : f32 to vector<16x64xf32>
    %11 = arith.addf %10, %9 : vector<16x64xf32>
    %12 = arith.divf %10, %11 : vector<16x64xf32>
    %13 = arith.mulf %5, %12 : vector<16x64xf32>
    %14 = arith.mulf %13, %7 : vector<16x64xf32>
    %15 = arith.truncf %14 : vector<16x64xf32> to vector<16x64xbf16>
    %c0_8 = arith.constant 0 : index
    %c0_9 = arith.constant 0 : index
    %16 = vector.load %arg9[%c0_8, %c0_9] : memref<16x32xf32, #tpu.memory_space<vmem>>, vector<16x32xf32>
    %c0_10 = arith.constant 0 : index
    %c0_11 = arith.constant 0 : index
    %17 = vector.load %arg6[%c0_10, %c0_11] : memref<64x32xbf16, #tpu.memory_space<vmem>>, vector<64x32xbf16>
    %cst_12 = arith.constant dense<0.000000e+00> : vector<16x32xf32>
    %18 = tpu.matmul %15, %17, %cst_12 {dimension_numbers = #tpu.dot_dimension_numbers<[1], [0], [0], [1], [0, 0, 1, 1], [], []>} : vector<16x64xbf16>, vector<64x32xbf16>, vector<16x32xf32> -> vector<16x32xf32>
    %19 = arith.addf %16, %18 : vector<16x32xf32>
    %c0_13 = arith.constant 0 : index
    %c0_14 = arith.constant 0 : index
    %20 = vector.load %arg9[%c0_13, %c0_14] : memref<16x32xf32, #tpu.memory_space<vmem>>, vector<16x32xf32>
    tpu.vector_store %arg9[%c0_13, %c0_14], %19 {strides = array<i32>} : memref<16x32xf32, #tpu.memory_space<vmem>>, vector<16x32xf32>,
    %c0_i32_15 = arith.constant 0 : i32
    %21 = arith.cmpi eq, %arg1, %c0_i32_15 : i32
    %22 = arith.extui %21 : i1 to i32
    %c0_i32_16 = arith.constant 0 : i32
    %23 = arith.cmpi ne, %22, %c0_i32_16 : i32
    scf.if %23 {
      %c0_17 = arith.constant 0 : index
      %c0_18 = arith.constant 0 : index
      %24 = vector.load %arg9[%c0_17, %c0_18] : memref<16x32xf32, #tpu.memory_space<vmem>>, vector<16x32xf32>
      %25 = arith.truncf %24 : vector<16x32xf32> to vector<16x32xbf16>
      %c0_19 = arith.constant 0 : index
      %c0_20 = arith.constant 0 : index
      %26 = vector.load %arg7[%c0_19, %c0_20] : memref<16x32xbf16, #tpu.memory_space<vmem>>, vector<16x32xbf16>
      tpu.vector_store %arg7[%c0_19, %c0_20], %25 {strides = array<i32>} : memref<16x32xbf16, #tpu.memory_space<vmem>>, vector<16x32xbf16>,
    } else {
    }
    return
  }
  func.func @transform_0(%arg0: i32, %arg1: i32) -> (i32, i32) {
    %c0_i32 = arith.constant 0 : i32
    %c0_i32_0 = arith.constant 0 : i32
    return %arg0, %c0_i32 : i32, i32
  }
  func.func @transform_1(%arg0: i32, %arg1: i32) -> (i32, i32) {
    %c0_i32 = arith.constant 0 : i32
    %c0_i32_0 = arith.constant 0 : i32
    %c0_i32_1 = arith.constant 0 : i32
    return %c0_i32, %c0_i32_0 : i32, i32
  }
  func.func @transform_2(%arg0: i32, %arg1: i32) -> (i32, i32) {
    %c0_i32 = arith.constant 0 : i32
    %c0_i32_0 = arith.constant 0 : i32
    return %c0_i32, %arg1 : i32, i32
  }
  func.func @transform_3(%arg0: i32, %arg1: i32) -> (i32, i32) {
    %c0_i32 = arith.constant 0 : i32
    %c0_i32_0 = arith.constant 0 : i32
    return %c0_i32, %arg1 : i32, i32
  }
  func.func @transform_4(%arg0: i32, %arg1: i32) -> (i32, i32) {
    %c0_i32 = arith.constant 0 : i32
    %c0_i32_0 = arith.constant 0 : i32
    return %arg1, %c0_i32 : i32, i32
  }
  func.func @transform_5(%arg0: i32, %arg1: i32) -> (i32, i32) {
    %c0_i32 = arith.constant 0 : i32
    %c0_i32_0 = arith.constant 0 : i32
    return %arg0, %c0_i32 : i32, i32
  }
}

module attributes {stable_mosaic.version = 11 : i64} {
  func.func @_rmsnorm_matmul_kernel(%arg0: i32, %arg1: i32, %arg2: memref<16x32xbf16, #tpu.memory_space<vmem>>, %arg3: memref<1x32xbf16, #tpu.memory_space<vmem>>, %arg4: memref<32x128xbf16, #tpu.memory_space<vmem>>, %arg5: memref<16x128xbf16, #tpu.memory_space<vmem>>, %arg6: memref<16x32xbf16, #tpu.memory_space<vmem>>) attributes {dimension_semantics = [#tpu.dimension_semantics<parallel>, #tpu.dimension_semantics<arbitrary>], iteration_bounds = array<i64: 1, 1>, scalar_prefetch = 0 : i64, scratch_operands = 1 : i64, tpu.core_type = #tpu.core_type<tc>, window_params = [{transform_indices = @transform_0, window_bounds = array<i64: 16, 32>}, {pipeline_mode = #tpu.pipeline_mode<synchronous>, transform_indices = @transform_1, window_bounds = array<i64: 1, 32>}, {transform_indices = @transform_2, window_bounds = array<i64: 32, 128>}, {transform_indices = @transform_3, window_bounds = array<i64: 16, 128>}]} {
    %c0_i32 = arith.constant 0 : i32
    %0 = arith.cmpi eq, %arg1, %c0_i32 : i32
    %1 = arith.extui %0 : i1 to i32
    %c0_i32_0 = arith.constant 0 : i32
    %2 = arith.cmpi ne, %1, %c0_i32_0 : i32
    scf.if %2 {
      %c0_6 = arith.constant 0 : index
      %c0_7 = arith.constant 0 : index
      %8 = vector.load %arg2[%c0_6, %c0_7] : memref<16x32xbf16, #tpu.memory_space<vmem>>, vector<16x32xbf16>
      %9 = arith.extf %8 : vector<16x32xbf16> to vector<16x32xf32>
      %10 = arith.mulf %9, %9 : vector<16x32xf32>
      %cst_8 = arith.constant dense<0.000000e+00> : vector<16xf32>
      %11 = vector.multi_reduction <add>, %10, %cst_8 [1] : vector<16x32xf32> to vector<16xf32>
      %12 = vector.shape_cast %11 : vector<16xf32> to vector<16x1xf32>
      %cst_9 = arith.constant 3.200000e+01 : f32
      %13 = vector.broadcast %cst_9 : f32 to vector<16x1xf32>
      %14 = arith.divf %12, %13 : vector<16x1xf32>
      %cst_10 = arith.constant 9.99999974E-6 : f32
      %15 = vector.broadcast %cst_10 : f32 to vector<16x1xf32>
      %16 = arith.addf %14, %15 : vector<16x1xf32>
      %17 = math.rsqrt %16 : vector<16x1xf32>
      %18 = vector.broadcast %17 : vector<16x1xf32> to vector<16x32xf32>
      %19 = arith.mulf %9, %18 : vector<16x32xf32>
      %c0_11 = arith.constant 0 : index
      %c0_12 = arith.constant 0 : index
      %20 = vector.load %arg3[%c0_11, %c0_12] : memref<1x32xbf16, #tpu.memory_space<vmem>>, vector<1x32xbf16>
      %21 = arith.extf %20 : vector<1x32xbf16> to vector<1x32xf32>
      %22 = vector.broadcast %21 : vector<1x32xf32> to vector<16x32xf32>
      %23 = arith.mulf %19, %22 : vector<16x32xf32>
      %24 = arith.truncf %23 : vector<16x32xf32> to vector<16x32xbf16>
      %c0_13 = arith.constant 0 : index
      %c0_14 = arith.constant 0 : index
      %25 = vector.load %arg6[%c0_13, %c0_14] : memref<16x32xbf16, #tpu.memory_space<vmem>>, vector<16x32xbf16>
      tpu.vector_store %arg6[%c0_13, %c0_14], %24 {strides = array<i32>} : memref<16x32xbf16, #tpu.memory_space<vmem>>, vector<16x32xbf16>,
    } else {
    }
    %c0 = arith.constant 0 : index
    %c0_1 = arith.constant 0 : index
    %3 = vector.load %arg6[%c0, %c0_1] : memref<16x32xbf16, #tpu.memory_space<vmem>>, vector<16x32xbf16>
    %c0_2 = arith.constant 0 : index
    %c0_3 = arith.constant 0 : index
    %4 = vector.load %arg4[%c0_2, %c0_3] : memref<32x128xbf16, #tpu.memory_space<vmem>>, vector<32x128xbf16>
    %cst = arith.constant dense<0.000000e+00> : vector<16x128xf32>
    %5 = tpu.matmul %3, %4, %cst {dimension_numbers = #tpu.dot_dimension_numbers<[1], [0], [0], [1], [0, 0, 1, 1], [], []>} : vector<16x32xbf16>, vector<32x128xbf16>, vector<16x128xf32> -> vector<16x128xf32>
    %6 = arith.truncf %5 : vector<16x128xf32> to vector<16x128xbf16>
    %c0_4 = arith.constant 0 : index
    %c0_5 = arith.constant 0 : index
    %7 = vector.load %arg5[%c0_4, %c0_5] : memref<16x128xbf16, #tpu.memory_space<vmem>>, vector<16x128xbf16>
    tpu.vector_store %arg5[%c0_4, %c0_5], %6 {strides = array<i32>} : memref<16x128xbf16, #tpu.memory_space<vmem>>, vector<16x128xbf16>,
    return
  }
  func.func @transform_0(%arg0: i32, %arg1: i32) -> (i32, i32) {
    %c0_i32 = arith.constant 0 : i32
    %c0_i32_0 = arith.constant 0 : i32
    return %arg0, %c0_i32 : i32, i32
  }
  func.func @transform_1(%arg0: i32, %arg1: i32) -> (i32, i32) {
    %c0_i32 = arith.constant 0 : i32
    %c0_i32_0 = arith.constant 0 : i32
    %c0_i32_1 = arith.constant 0 : i32
    return %c0_i32, %c0_i32_0 : i32, i32
  }
  func.func @transform_2(%arg0: i32, %arg1: i32) -> (i32, i32) {
    %c0_i32 = arith.constant 0 : i32
    %c0_i32_0 = arith.constant 0 : i32
    return %c0_i32, %arg1 : i32, i32
  }
  func.func @transform_3(%arg0: i32, %arg1: i32) -> (i32, i32) {
    %c0_i32 = arith.constant 0 : i32
    return %arg0, %arg1 : i32, i32
  }
}

module attributes {stable_mosaic.version = 11 : i64} {
  func.func @_matmul_acc_kernel(%arg0: i32, %arg1: i32, %arg2: i32, %arg3: memref<16x128xbf16, #tpu.memory_space<vmem>>, %arg4: memref<128x32xf32, #tpu.memory_space<vmem>>, %arg5: memref<1x32xf32, #tpu.memory_space<vmem>>, %arg6: memref<16x32xf32, #tpu.memory_space<vmem>>, %arg7: memref<16x32xf32, #tpu.memory_space<vmem>>) attributes {dimension_semantics = [#tpu.dimension_semantics<parallel>, #tpu.dimension_semantics<parallel>, #tpu.dimension_semantics<arbitrary>], iteration_bounds = array<i64: 1, 1, 1>, scalar_prefetch = 0 : i64, scratch_operands = 1 : i64, tpu.core_type = #tpu.core_type<tc>, window_params = [{transform_indices = @transform_0, window_bounds = array<i64: 16, 128>}, {transform_indices = @transform_1, window_bounds = array<i64: 128, 32>}, {transform_indices = @transform_2, window_bounds = array<i64: 1, 32>}, {transform_indices = @transform_3, window_bounds = array<i64: 16, 32>}]} {
    %c0_i32 = arith.constant 0 : i32
    %0 = arith.cmpi eq, %arg2, %c0_i32 : i32
    %1 = arith.extui %0 : i1 to i32
    %c0_i32_0 = arith.constant 0 : i32
    %2 = arith.cmpi ne, %1, %c0_i32_0 : i32
    scf.if %2 {
      %cst_10 = arith.constant 0.000000e+00 : f32
      %12 = vector.broadcast %cst_10 : f32 to vector<16x32xf32>
      %c0_11 = arith.constant 0 : index
      %c0_12 = arith.constant 0 : index
      %13 = vector.load %arg7[%c0_11, %c0_12] : memref<16x32xf32, #tpu.memory_space<vmem>>, vector<16x32xf32>
      tpu.vector_store %arg7[%c0_11, %c0_12], %12 {strides = array<i32>} : memref<16x32xf32, #tpu.memory_space<vmem>>, vector<16x32xf32>,
    } else {
    }
    %c0 = arith.constant 0 : index
    %c0_1 = arith.constant 0 : index
    %3 = vector.load %arg7[%c0, %c0_1] : memref<16x32xf32, #tpu.memory_space<vmem>>, vector<16x32xf32>
    %c0_2 = arith.constant 0 : index
    %c0_3 = arith.constant 0 : index
    %4 = vector.load %arg3[%c0_2, %c0_3] : memref<16x128xbf16, #tpu.memory_space<vmem>>, vector<16x128xbf16>
    %c0_4 = arith.constant 0 : index
    %c0_5 = arith.constant 0 : index
    %5 = vector.load %arg4[%c0_4, %c0_5] : memref<128x32xf32, #tpu.memory_space<vmem>>, vector<128x32xf32>
    %cst = arith.constant dense<0.000000e+00> : vector<16x32xf32>
    %6 = tpu.matmul %4, %5, %cst {dimension_numbers = #tpu.dot_dimension_numbers<[1], [0], [0], [1], [0, 0, 1, 1], [], []>} : vector<16x128xbf16>, vector<128x32xf32>, vector<16x32xf32> -> vector<16x32xf32>
    %7 = arith.addf %3, %6 : vector<16x32xf32>
    %c0_6 = arith.constant 0 : index
    %c0_7 = arith.constant 0 : index
    %8 = vector.load %arg7[%c0_6, %c0_7] : memref<16x32xf32, #tpu.memory_space<vmem>>, vector<16x32xf32>
    tpu.vector_store %arg7[%c0_6, %c0_7], %7 {strides = array<i32>} : memref<16x32xf32, #tpu.memory_space<vmem>>, vector<16x32xf32>,
    %c0_i32_8 = arith.constant 0 : i32
    %9 = arith.cmpi eq, %arg2, %c0_i32_8 : i32
    %10 = arith.extui %9 : i1 to i32
    %c0_i32_9 = arith.constant 0 : i32
    %11 = arith.cmpi ne, %10, %c0_i32_9 : i32
    scf.if %11 {
      %c0_10 = arith.constant 0 : index
      %c0_11 = arith.constant 0 : index
      %12 = vector.load %arg7[%c0_10, %c0_11] : memref<16x32xf32, #tpu.memory_space<vmem>>, vector<16x32xf32>
      %c0_12 = arith.constant 0 : index
      %c0_13 = arith.constant 0 : index
      %13 = vector.load %arg5[%c0_12, %c0_13] : memref<1x32xf32, #tpu.memory_space<vmem>>, vector<1x32xf32>
      %14 = vector.broadcast %13 : vector<1x32xf32> to vector<16x32xf32>
      %15 = arith.addf %12, %14 : vector<16x32xf32>
      %c0_14 = arith.constant 0 : index
      %c0_15 = arith.constant 0 : index
      %16 = vector.load %arg6[%c0_14, %c0_15] : memref<16x32xf32, #tpu.memory_space<vmem>>, vector<16x32xf32>
      tpu.vector_store %arg6[%c0_14, %c0_15], %15 {strides = array<i32>} : memref<16x32xf32, #tpu.memory_space<vmem>>, vector<16x32xf32>,
    } else {
    }
    return
  }
  func.func @transform_0(%arg0: i32, %arg1: i32, %arg2: i32) -> (i32, i32) {
    %c0_i32 = arith.constant 0 : i32
    return %arg0, %arg2 : i32, i32
  }
  func.func @transform_1(%arg0: i32, %arg1: i32, %arg2: i32) -> (i32, i32) {
    %c0_i32 = arith.constant 0 : i32
    return %arg2, %arg1 : i32, i32
  }
  func.func @transform_2(%arg0: i32, %arg1: i32, %arg2: i32) -> (i32, i32) {
    %c0_i32 = arith.constant 0 : i32
    %c0_i32_0 = arith.constant 0 : i32
    return %c0_i32, %arg1 : i32, i32
  }
  func.func @transform_3(%arg0: i32, %arg1: i32, %arg2: i32) -> (i32, i32) {
    %c0_i32 = arith.constant 0 : i32
    return %arg0, %arg1 : i32, i32
  }
}

</mosaic_0001>

<llo_original>
// kernel: transformer_forward.10
$region0: #{transformer_forward.10}
  #allocation0 [shape = 'u32[]', space=smem, size = 0x4, offset = 0x4, fixed_abs, tag = 'smem constant byte address 0x4 - core index']
  #allocation1 [shape = 'u32[144,128]{1,0:T(1,128)}', space=vmem, size = 0x12000, scoped, tag = 'internal scratch']
  #allocation2 [shape = 'bf16[16,32]{1,0:T(8,128)(2,1)}', space=vmem, size = 0x1000, scoped, tag = 'scratch operand']
  %s0 = inlined_call_operand.vmem [shape: bf16[16,32], index: 0, kind: input, shape index: {}]
  %s1 = inlined_call_operand.vmem [shape: bf16[1,32], index: 1, kind: input, shape index: {}]
  %s2 = inlined_call_operand.vmem [shape: bf16[32,96], index: 2, kind: input, shape index: {}]
  %s3 = inlined_call_operand.vmem [shape: bf16[16,96], index: 3, kind: output, shape index: {}]
  %s4 = sld [smem:[#allocation0]]
  $region26: #{transformer_forward.10} parent=0
    _
  %s6 = ssub.s32 1, %s4
  %s7 = scalar_select 0, %s6, %s4
  // Predicated region
  $region2: #{transformer_forward.10} parent=0 // pred_check
    _
  $region3: #{transformer_forward.10} parent=0 // pred_check_branch
    %9 = sbr.rel (0) target = $region5
  $region4: #{transformer_forward.10} parent=0 // pred_region
    _
  $region5: #{transformer_forward.10} parent=0 // pred_fallthru
    _
  // Predicated region
  $region6: #{transformer_forward.10} parent=0 // pred_check
    _
  $region7: #{transformer_forward.10} parent=0 // pred_check_branch
    %11 = sbr.rel (0) target = $region9
  $region8: #{transformer_forward.10} parent=0 // pred_region
    _
  $region9: #{transformer_forward.10} parent=0 // pred_fallthru
    _
  // Predicated region
  $region10: #{transformer_forward.10} parent=0 // pred_check
    _
  $region11: #{transformer_forward.10} parent=0 // pred_check_branch
    %13 = sbr.rel (0) target = $region13
  $region12: #{transformer_forward.10} parent=0 // pred_region
    _
  $region13: #{transformer_forward.10} parent=0 // pred_fallthru
    _
  %p15 = scmp.eq.s32.totalorder 0, 0
  // Predicated region
  $region14: #{transformer_forward.10} parent=0 // pred_check
    %p16 = pneg %p15
  $region15: #{transformer_forward.10} parent=0 // pred_check_branch
    %18 = sbr.rel (%p16) target = $region17
  $region16: #{transformer_forward.10} parent=0 // pred_region
    %v19 = vld [vmem:[%s0] sm:$0xf]
    %v20 = vld [vmem:[%s0 + $0x4] sm:$0xf]
    %v21 = vunpack.c.l.bf16 %v19
    %v22 = vunpack.c.l.bf16 %v20
    %v23 = vmul.f32 %v21, %v21
    %v24 = vmul.f32 %v22, %v22
    %vm25 = vcmask 261120
    %v26 = vsel %vm25, %v23, 0.0
    %27 = vadd.xlane.f32.xlu0 %v26
    %v28 = vpop.xlane.xlu0 %27
    %v29 = vsel %vm25, %v24, 0.0
    %30 = vadd.xlane.f32.xlu0 %v29
    %v31 = vpop.xlane.xlu0 %30
    %v32 = vrcp.pop 32.0
    %v33 = vmul.f32 %v28, %v32
    %v34 = vmul.f32 %v31, %v32
    %v35 = vadd.f32 %v33, 1e-05
    %v36 = vadd.f32 %v34, 1e-05
    %v37 = vrsqrt.pop %v35
    %v38 = vrsqrt.pop %v36
    %v39 = vmul.f32 %v21, %v37
    %v40 = vmul.f32 %v22, %v38
    %v41 = vld [vmem:[%s1] sm:$0x1]
    %v42 = vunpack.c.l.bf16 %v41
    %v43 = vlaneseq
    %v44 = vshrl.u32 %v43, 7
    %v45 = vsub.s32 0, %v44
    %v46 = vrot.slane %v42, %v45
    %v47 = vmul.f32 %v39, %v46
    %v48 = vmul.f32 %v40, %v46
    %v49 = vpack.c.bf16 %v48, %v47
    %v51 = vunpack.c.l.b16 %v49
    %v52 = vunpack.c.h.b16 %v49
    %v53 = vpack.c.b16 %v51, %v51
    %v54 = vpack.c.b16 %v52, %v52
    %vm57 = vcmask 257024
    %58 = vst.msk [vmem:[#allocation2] sm:$0xf] %vm57, %v53
    %59 = vst.msk [vmem:[#allocation2 + $0x4] sm:$0xf] %vm57, %v54
  $region17: #{transformer_forward.10} parent=0 // pred_fallthru
    _
  %v60 = vld [vmem:[#allocation2] sm:$0xf]
  %v61 = vld [vmem:[#allocation2 + $0x4] sm:$0xf]
  %v62 = vld [vmem:[%s2] sm:$0xf]
  %v63 = vld [vmem:[%s2 + $0x4] sm:$0xf]
  %v64 = vld [vmem:[%s2 + $0x8] sm:$0xf]
  %v65 = vld [vmem:[%s2 + $0xc] sm:$0xf]
  %v68 = vunpack.c.l.b16 %v60
  %v69 = vunpack.c.l.b16 %v61
  %v70 = vpack.c.b16 %v69, %v68
  %v75 = vunpack.c.l.b16 %v62
  %v76 = vunpack.c.l.b16 %v63
  %v77 = vunpack.c.l.b16 %v64
  %v78 = vunpack.c.l.b16 %v65
  %v79 = vpack.c.b16 %v76, %v75
  %v80 = vpack.c.b16 %v78, %v77
  %vm83 = vcmask 261120
  %v85 = vsel %vm83, %v70, 0
  %87 = vmatprep.subr.bf16.mxu0 0
  %88 = vmatpush1.bf16.msra.mxu0 0
  %89 = vmatprep.subr.bf16.mxu0 0
  %90 = vmatpush1.bf16.msra.mxu0 0
  %91 = vmatprep.subr.bf16.mxu0 0
  %92 = vmatpush1.bf16.msra.mxu0 0
  %93 = vmatprep.subr.bf16.mxu0 0
  %94 = vmatpush1.bf16.msra.mxu0 0
  %95 = vmatprep.subr.bf16.mxu0 0
  %96 = vmatpush1.bf16.msra.mxu0 0
  %97 = vmatprep.subr.bf16.mxu0 0
  %98 = vmatpush1.bf16.msra.mxu0 0
  %99 = vmatprep.subr.bf16.mxu0 0
  %100 = vmatpush1.bf16.msra.mxu0 %v80
  %101 = vmatprep.subr.bf16.mxu0 0
  %102 = vmatpush1.bf16.msra.mxu0 %v79
  %103 = vmatprep.subr.bf16.mxu0 0
  %104 = vmatpush2.bf16.msra.mxu0 0
  %105 = vmatprep.subr.bf16.mxu0 0
  %106 = vmatpush2.bf16.msra.mxu0 0
  %107 = vmatprep.subr.bf16.mxu0 0
  %108 = vmatpush2.bf16.msra.mxu0 0
  %109 = vmatprep.subr.bf16.mxu0 0
  %110 = vmatpush2.bf16.msra.mxu0 0
  %111 = vmatprep.subr.bf16.mxu0 0
  %112 = vmatpush2.bf16.msra.mxu0 0
  %113 = vmatprep.subr.bf16.mxu0 0
  %114 = vmatpush2.bf16.msra.mxu0 0
  %115 = vmatprep.subr.bf16.mxu0 0
  %116 = vmatpush2.bf16.msra.mxu0 0
  %117 = vmatprep.subr.bf16.mxu0 0
  %118 = vmatpush2.bf16.msra.mxu0 0
  %119 = vmatprep.mubr.bf16.mxu0 0
  %120 = vmatmul.mubr.bf16.gmra.mxu0 %v85
  %v121 = vpop.f32.mrf.mxu0
  %v122 = vadd.f32 0.0, %v121
  %v123 = vpop.f32.mrf.mxu0
  %v124 = vpop.f32.mrf.mxu0
  %v125 = vadd.f32 0.0, %v124
  %v126 = vpop.f32.mrf.mxu0
  %127 = vdwg.mxu0
  %v128 = vpack.c.bf16 %v125, %v122
  %v130 = vunpack.c.l.b16 %v128
  %v131 = vunpack.c.h.b16 %v128
  %v132 = vpack.c.b16 %v130, %v130
  %v133 = vpack.c.b16 %v131, %v131
  %vm136 = vcmask 781312
  %137 = vst.msk [vmem:[%s3] sm:$0xf] %vm136, %v132
  %138 = vst.msk [vmem:[%s3 + $0x4] sm:$0xf] %vm136, %v133
  // Predicated region
  $region18: #{transformer_forward.10} parent=0 // pred_check
    _
  $region19: #{transformer_forward.10} parent=0 // pred_check_branch
    %140 = sbr.rel (0) target = $region21
  $region20: #{transformer_forward.10} parent=0 // pred_region
    _
  $region21: #{transformer_forward.10} parent=0 // pred_fallthru
    _
  // Predicated region
  $region22: #{transformer_forward.10} parent=0 // pred_check
    _
  $region23: #{transformer_forward.10} parent=0 // pred_check_branch
    %142 = sbr.rel (0) target = $region25
  $region24: #{transformer_forward.10} parent=0 // pred_region
    _
  $region25: #{transformer_forward.10} parent=0 // pred_fallthru
    _

// kernel: transformer_forward.12
$region0: #{transformer_forward.12}
  #allocation0 [shape = 'u32[]', space=smem, size = 0x4, offset = 0x4, fixed_abs, tag = 'smem constant byte address 0x4 - core index']
  #allocation1 [shape = 'u32[144,128]{1,0:T(1,128)}', space=vmem, size = 0x12000, scoped, tag = 'internal scratch']
  #allocation2 [shape = 'f32[16,32]{1,0:T(8,128)}', space=vmem, size = 0x2000, scoped, tag = 'scratch operand']
  %s0 = inlined_call_operand.vmem [shape: bf16[16,32], index: 0, kind: input, shape index: {}]
  %s1 = inlined_call_operand.vmem [shape: bf16[32,32], index: 1, kind: input, shape index: {}]
  %s2 = inlined_call_operand.vmem [shape: bf16[16,32], index: 2, kind: input, shape index: {}]
  %s3 = inlined_call_operand.vmem [shape: bf16[16,32], index: 3, kind: output, shape index: {}]
  %s4 = sld [smem:[#allocation0]]
  $region30: #{transformer_forward.12} parent=0
    _
  %s6 = ssub.s32 1, %s4
  %s7 = scalar_select 0, %s6, %s4
  // Predicated region
  $region2: #{transformer_forward.12} parent=0 // pred_check
    _
  $region3: #{transformer_forward.12} parent=0 // pred_check_branch
    %9 = sbr.rel (0) target = $region5
  $region4: #{transformer_forward.12} parent=0 // pred_region
    _
  $region5: #{transformer_forward.12} parent=0 // pred_fallthru
    _
  // Predicated region
  $region6: #{transformer_forward.12} parent=0 // pred_check
    _
  $region7: #{transformer_forward.12} parent=0 // pred_check_branch
    %11 = sbr.rel (0) target = $region9
  $region8: #{transformer_forward.12} parent=0 // pred_region
    _
  $region9: #{transformer_forward.12} parent=0 // pred_fallthru
    _
  // Predicated region
  $region10: #{transformer_forward.12} parent=0 // pred_check
    _
  $region11: #{transformer_forward.12} parent=0 // pred_check_branch
    %13 = sbr.rel (0) target = $region13
  $region12: #{transformer_forward.12} parent=0 // pred_region
    _
  $region13: #{transformer_forward.12} parent=0 // pred_fallthru
    _
  %p15 = scmp.eq.s32.totalorder 0, 0
  // Predicated region
  $region14: #{transformer_forward.12} parent=0 // pred_check
    %p16 = pneg %p15
  $region15: #{transformer_forward.12} parent=0 // pred_check_branch
    %18 = sbr.rel (%p16) target = $region17
  $region16: #{transformer_forward.12} parent=0 // pred_region
    %vm19 = vcmask 261120
    %20 = vst.msk [vmem:[#allocation2] sm:$0xff] %vm19, 0.0
    %21 = vst.msk [vmem:[#allocation2 + $0x8] sm:$0xff] %vm19, 0.0
  $region17: #{transformer_forward.12} parent=0 // pred_fallthru
    _
  %v22 = vld [vmem:[#allocation2] sm:$0xff]
  %v23 = vld [vmem:[#allocation2 + $0x8] sm:$0xff]
  %v24 = vld [vmem:[%s0] sm:$0xf]
  %v25 = vld [vmem:[%s0 + $0x4] sm:$0xf]
  %v26 = vld [vmem:[%s1] sm:$0xf]
  %v27 = vld [vmem:[%s1 + $0x4] sm:$0xf]
  %v28 = vld [vmem:[%s1 + $0x8] sm:$0xf]
  %v29 = vld [vmem:[%s1 + $0xc] sm:$0xf]
  %v32 = vunpack.c.l.b16 %v24
  %v33 = vunpack.c.l.b16 %v25
  %v34 = vpack.c.b16 %v33, %v32
  %v39 = vunpack.c.l.b16 %v26
  %v40 = vunpack.c.l.b16 %v27
  %v41 = vunpack.c.l.b16 %v28
  %v42 = vunpack.c.l.b16 %v29
  %v43 = vpack.c.b16 %v40, %v39
  %v44 = vpack.c.b16 %v42, %v41
  %vm47 = vcmask 261120
  %v49 = vsel %vm47, %v34, 0
  %51 = vmatprep.subr.bf16.mxu0 0
  %52 = vmatpush1.bf16.msra.mxu0 0
  %53 = vmatprep.subr.bf16.mxu0 0
  %54 = vmatpush1.bf16.msra.mxu0 0
  %55 = vmatprep.subr.bf16.mxu0 0
  %56 = vmatpush1.bf16.msra.mxu0 0
  %57 = vmatprep.subr.bf16.mxu0 0
  %58 = vmatpush1.bf16.msra.mxu0 0
  %59 = vmatprep.subr.bf16.mxu0 0
  %60 = vmatpush1.bf16.msra.mxu0 0
  %61 = vmatprep.subr.bf16.mxu0 0
  %62 = vmatpush1.bf16.msra.mxu0 0
  %63 = vmatprep.subr.bf16.mxu0 0
  %64 = vmatpush1.bf16.msra.mxu0 %v44
  %65 = vmatprep.subr.bf16.mxu0 0
  %66 = vmatpush1.bf16.msra.mxu0 %v43
  %67 = vmatprep.subr.bf16.mxu0 0
  %68 = vmatpush2.bf16.msra.mxu0 0
  %69 = vmatprep.subr.bf16.mxu0 0
  %70 = vmatpush2.bf16.msra.mxu0 0
  %71 = vmatprep.subr.bf16.mxu0 0
  %72 = vmatpush2.bf16.msra.mxu0 0
  %73 = vmatprep.subr.bf16.mxu0 0
  %74 = vmatpush2.bf16.msra.mxu0 0
  %75 = vmatprep.subr.bf16.mxu0 0
  %76 = vmatpush2.bf16.msra.mxu0 0
  %77 = vmatprep.subr.bf16.mxu0 0
  %78 = vmatpush2.bf16.msra.mxu0 0
  %79 = vmatprep.subr.bf16.mxu0 0
  %80 = vmatpush2.bf16.msra.mxu0 0
  %81 = vmatprep.subr.bf16.mxu0 0
  %82 = vmatpush2.bf16.msra.mxu0 0
  %83 = vmatprep.mubr.bf16.mxu0 0
  %84 = vmatmul.mubr.bf16.gmra.mxu0 %v49
  %v85 = vpop.f32.mrf.mxu0
  %v86 = vadd.f32 0.0, %v85
  %v87 = vpop.f32.mrf.mxu0
  %v88 = vpop.f32.mrf.mxu0
  %v89 = vadd.f32 0.0, %v88
  %v90 = vpop.f32.mrf.mxu0
  %91 = vdwg.mxu0
  %v92 = vadd.f32 %v22, %v86
  %v93 = vadd.f32 %v23, %v89
  %94 = vst.msk [vmem:[#allocation2] sm:$0xff] %vm47, %v92
  %95 = vst.msk [vmem:[#allocation2 + $0x8] sm:$0xff] %vm47, %v93
  // Predicated region
  $region18: #{transformer_forward.12} parent=0 // pred_check
    %p96 = pneg %p15
  $region19: #{transformer_forward.12} parent=0 // pred_check_branch
    %98 = sbr.rel (%p96) target = $region21
  $region20: #{transformer_forward.12} parent=0 // pred_region
    %v99 = vld [vmem:[#allocation2] sm:$0xff]
    %v100 = vld [vmem:[#allocation2 + $0x8] sm:$0xff]
    %v101 = vld [vmem:[%s2] sm:$0xf]
    %v102 = vld [vmem:[%s2 + $0x4] sm:$0xf]
    %v103 = vunpack.c.l.bf16 %v101
    %v104 = vunpack.c.l.bf16 %v102
    %v105 = vadd.f32 %v99, %v103
    %v106 = vadd.f32 %v100, %v104
    %v107 = vpack.c.bf16 %v106, %v105
    %v109 = vunpack.c.l.b16 %v107
    %v110 = vunpack.c.h.b16 %v107
    %v111 = vpack.c.b16 %v109, %v109
    %v112 = vpack.c.b16 %v110, %v110
    %vm115 = vcmask 257024
    %116 = vst.msk [vmem:[%s3] sm:$0xf] %vm115, %v111
    %117 = vst.msk [vmem:[%s3 + $0x4] sm:$0xf] %vm115, %v112
  $region21: #{transformer_forward.12} parent=0 // pred_fallthru
    _
  // Predicated region
  $region22: #{transformer_forward.12} parent=0 // pred_check
    _
  $region23: #{transformer_forward.12} parent=0 // pred_check_branch
    %119 = sbr.rel (0) target = $region25
  $region24: #{transformer_forward.12} parent=0 // pred_region
    _
  $region25: #{transformer_forward.12} parent=0 // pred_fallthru
    _
  // Predicated region
  $region26: #{transformer_forward.12} parent=0 // pred_check
    _
  $region27: #{transformer_forward.12} parent=0 // pred_check_branch
    %121 = sbr.rel (0) target = $region29
  $region28: #{transformer_forward.12} parent=0 // pred_region
    _
  $region29: #{transformer_forward.12} parent=0 // pred_fallthru
    _

// kernel: transformer_forward.13
$region0: #{transformer_forward.13}
  #allocation0 [shape = 'u32[]', space=smem, size = 0x4, offset = 0x4, fixed_abs, tag = 'smem constant byte address 0x4 - core index']
  #allocation1 [shape = 'u32[144,128]{1,0:T(1,128)}', space=vmem, size = 0x12000, scoped, tag = 'internal scratch']
  #allocation2 [shape = 'bf16[16,32]{1,0:T(8,128)(2,1)}', space=vmem, size = 0x1000, scoped, tag = 'scratch operand']
  #allocation3 [shape = 'f32[16,32]{1,0:T(8,128)}', space=vmem, size = 0x2000, scoped, tag = 'scratch operand']
  %s0 = inlined_call_operand.vmem [shape: bf16[16,32], index: 0, kind: input, shape index: {}]
  %s1 = inlined_call_operand.vmem [shape: bf16[1,32], index: 1, kind: input, shape index: {}]
  %s2 = inlined_call_operand.vmem [shape: bf16[32,64], index: 2, kind: input, shape index: {}]
  %s3 = inlined_call_operand.vmem [shape: bf16[32,64], index: 3, kind: input, shape index: {}]
  %s4 = inlined_call_operand.vmem [shape: bf16[64,32], index: 4, kind: input, shape index: {}]
  %s5 = inlined_call_operand.vmem [shape: bf16[16,32], index: 5, kind: output, shape index: {}]
  %s6 = sld [smem:[#allocation0]]
  $region38: #{transformer_forward.13} parent=0
    _
  %s8 = ssub.s32 1, %s6
  %s9 = scalar_select 0, %s8, %s6
  // Predicated region
  $region2: #{transformer_forward.13} parent=0 // pred_check
    _
  $region3: #{transformer_forward.13} parent=0 // pred_check_branch
    %11 = sbr.rel (0) target = $region5
  $region4: #{transformer_forward.13} parent=0 // pred_region
    _
  $region5: #{transformer_forward.13} parent=0 // pred_fallthru
    _
  // Predicated region
  $region6: #{transformer_forward.13} parent=0 // pred_check
    _
  $region7: #{transformer_forward.13} parent=0 // pred_check_branch
    %13 = sbr.rel (0) target = $region9
  $region8: #{transformer_forward.13} parent=0 // pred_region
    _
  $region9: #{transformer_forward.13} parent=0 // pred_fallthru
    _
  // Predicated region
  $region10: #{transformer_forward.13} parent=0 // pred_check
    _
  $region11: #{transformer_forward.13} parent=0 // pred_check_branch
    %15 = sbr.rel (0) target = $region13
  $region12: #{transformer_forward.13} parent=0 // pred_region
    _
  $region13: #{transformer_forward.13} parent=0 // pred_fallthru
    _
  // Predicated region
  $region14: #{transformer_forward.13} parent=0 // pred_check
    _
  $region15: #{transformer_forward.13} parent=0 // pred_check_branch
    %17 = sbr.rel (0) target = $region17
  $region16: #{transformer_forward.13} parent=0 // pred_region
    _
  $region17: #{transformer_forward.13} parent=0 // pred_fallthru
    _
  // Predicated region
  $region18: #{transformer_forward.13} parent=0 // pred_check
    _
  $region19: #{transformer_forward.13} parent=0 // pred_check_branch
    %19 = sbr.rel (0) target = $region21
  $region20: #{transformer_forward.13} parent=0 // pred_region
    _
  $region21: #{transformer_forward.13} parent=0 // pred_fallthru
    _
  %p21 = scmp.eq.s32.totalorder 0, 0
  // Predicated region
  $region22: #{transformer_forward.13} parent=0 // pred_check
    %p22 = pneg %p21
  $region23: #{transformer_forward.13} parent=0 // pred_check_branch
    %24 = sbr.rel (%p22) target = $region25
  $region24: #{transformer_forward.13} parent=0 // pred_region
    %v25 = vld [vmem:[%s0] sm:$0xf]
    %v26 = vld [vmem:[%s0 + $0x4] sm:$0xf]
    %v27 = vunpack.c.l.bf16 %v25
    %v28 = vunpack.c.l.bf16 %v26
    %v29 = vmul.f32 %v27, %v27
    %v30 = vmul.f32 %v28, %v28
    %vm31 = vcmask 261120
    %v32 = vsel %vm31, %v29, 0.0
    %33 = vadd.xlane.f32.xlu0 %v32
    %v34 = vpop.xlane.xlu0 %33
    %v35 = vsel %vm31, %v30, 0.0
    %36 = vadd.xlane.f32.xlu0 %v35
    %v37 = vpop.xlane.xlu0 %36
    %v38 = vrcp.pop 32.0
    %v39 = vmul.f32 %v34, %v38
    %v40 = vmul.f32 %v37, %v38
    %v41 = vadd.f32 %v39, 1e-05
    %v42 = vadd.f32 %v40, 1e-05
    %v43 = vrsqrt.pop %v41
    %v44 = vrsqrt.pop %v42
    %v45 = vmul.f32 %v27, %v43
    %v46 = vmul.f32 %v28, %v44
    %v47 = vld [vmem:[%s1] sm:$0x1]
    %v48 = vunpack.c.l.bf16 %v47
    %v49 = vlaneseq
    %v50 = vshrl.u32 %v49, 7
    %v51 = vsub.s32 0, %v50
    %v52 = vrot.slane %v48, %v51
    %v53 = vmul.f32 %v45, %v52
    %v54 = vmul.f32 %v46, %v52
    %v55 = vpack.c.bf16 %v54, %v53
    %v57 = vunpack.c.l.b16 %v55
    %v58 = vunpack.c.h.b16 %v55
    %v59 = vpack.c.b16 %v57, %v57
    %v60 = vpack.c.b16 %v58, %v58
    %vm63 = vcmask 257024
    %64 = vst.msk [vmem:[#allocation2] sm:$0xf] %vm63, %v59
    %65 = vst.msk [vmem:[#allocation2 + $0x4] sm:$0xf] %vm63, %v60
    %66 = vst.msk [vmem:[#allocation3] sm:$0xff] %vm31, %v27
    %67 = vst.msk [vmem:[#allocation3 + $0x8] sm:$0xff] %vm31, %v28
  $region25: #{transformer_forward.13} parent=0 // pred_fallthru
    _
  %v68 = vld [vmem:[#allocation2] sm:$0xf]
  %v69 = vld [vmem:[#allocation2 + $0x4] sm:$0xf]
  %v70 = vld [vmem:[%s2] sm:$0xf]
  %v71 = vld [vmem:[%s2 + $0x4] sm:$0xf]
  %v72 = vld [vmem:[%s2 + $0x8] sm:$0xf]
  %v73 = vld [vmem:[%s2 + $0xc] sm:$0xf]
  %v76 = vunpack.c.l.b16 %v68
  %v77 = vunpack.c.l.b16 %v69
  %v78 = vpack.c.b16 %v77, %v76
  %v83 = vunpack.c.l.b16 %v70
  %v84 = vunpack.c.l.b16 %v71
  %v85 = vunpack.c.l.b16 %v72
  %v86 = vunpack.c.l.b16 %v73
  %v87 = vpack.c.b16 %v84, %v83
  %v88 = vpack.c.b16 %v86, %v85
  %vm91 = vcmask 261120
  %v93 = vsel %vm91, %v78, 0
  %95 = vmatprep.subr.bf16.mxu0 0
  %96 = vmatpush1.bf16.msra.mxu0 0
  %97 = vmatprep.subr.bf16.mxu0 0
  %98 = vmatpush1.bf16.msra.mxu0 0
  %99 = vmatprep.subr.bf16.mxu0 0
  %100 = vmatpush1.bf16.msra.mxu0 0
  %101 = vmatprep.subr.bf16.mxu0 0
  %102 = vmatpush1.bf16.msra.mxu0 0
  %103 = vmatprep.subr.bf16.mxu0 0
  %104 = vmatpush1.bf16.msra.mxu0 0
  %105 = vmatprep.subr.bf16.mxu0 0
  %106 = vmatpush1.bf16.msra.mxu0 0
  %107 = vmatprep.subr.bf16.mxu0 0
  %108 = vmatpush1.bf16.msra.mxu0 %v88
  %109 = vmatprep.subr.bf16.mxu0 0
  %110 = vmatpush1.bf16.msra.mxu0 %v87
  %111 = vmatprep.subr.bf16.mxu0 0
  %112 = vmatpush2.bf16.msra.mxu0 0
  %113 = vmatprep.subr.bf16.mxu0 0
  %114 = vmatpush2.bf16.msra.mxu0 0
  %115 = vmatprep.subr.bf16.mxu0 0
  %116 = vmatpush2.bf16.msra.mxu0 0
  %117 = vmatprep.subr.bf16.mxu0 0
  %118 = vmatpush2.bf16.msra.mxu0 0
  %119 = vmatprep.subr.bf16.mxu0 0
  %120 = vmatpush2.bf16.msra.mxu0 0
  %121 = vmatprep.subr.bf16.mxu0 0
  %122 = vmatpush2.bf16.msra.mxu0 0
  %123 = vmatprep.subr.bf16.mxu0 0
  %124 = vmatpush2.bf16.msra.mxu0 0
  %125 = vmatprep.subr.bf16.mxu0 0
  %126 = vmatpush2.bf16.msra.mxu0 0
  %127 = vmatprep.mubr.bf16.mxu0 0
  %128 = vmatmul.mubr.bf16.gmra.mxu0 %v93
  %v129 = vpop.f32.mrf.mxu0
  %v130 = vadd.f32 0.0, %v129
  %v131 = vpop.f32.mrf.mxu0
  %v132 = vpop.f32.mrf.mxu0
  %v133 = vadd.f32 0.0, %v132
  %v134 = vpop.f32.mrf.mxu0
  %135 = vdwg.mxu0
  %v136 = vld [vmem:[%s3] sm:$0xf]
  %v137 = vld [vmem:[%s3 + $0x4] sm:$0xf]
  %v138 = vld [vmem:[%s3 + $0x8] sm:$0xf]
  %v139 = vld [vmem:[%s3 + $0xc] sm:$0xf]
  %v144 = vunpack.c.l.b16 %v136
  %v145 = vunpack.c.l.b16 %v137
  %v146 = vunpack.c.l.b16 %v138
  %v147 = vunpack.c.l.b16 %v139
  %v148 = vpack.c.b16 %v145, %v144
  %v149 = vpack.c.b16 %v147, %v146
  %152 = vmatprep.subr.bf16.mxu0 0
  %153 = vmatpush1.bf16.msra.mxu0 0
  %154 = vmatprep.subr.bf16.mxu0 0
  %155 = vmatpush1.bf16.msra.mxu0 0
  %156 = vmatprep.subr.bf16.mxu0 0
  %157 = vmatpush1.bf16.msra.mxu0 0
  %158 = vmatprep.subr.bf16.mxu0 0
  %159 = vmatpush1.bf16.msra.mxu0 0
  %160 = vmatprep.subr.bf16.mxu0 0
  %161 = vmatpush1.bf16.msra.mxu0 0
  %162 = vmatprep.subr.bf16.mxu0 0
  %163 = vmatpush1.bf16.msra.mxu0 0
  %164 = vmatprep.subr.bf16.mxu0 0
  %165 = vmatpush1.bf16.msra.mxu0 %v149
  %166 = vmatprep.subr.bf16.mxu0 0
  %167 = vmatpush1.bf16.msra.mxu0 %v148
  %168 = vmatprep.subr.bf16.mxu0 0
  %169 = vmatpush2.bf16.msra.mxu0 0
  %170 = vmatprep.subr.bf16.mxu0 0
  %171 = vmatpush2.bf16.msra.mxu0 0
  %172 = vmatprep.subr.bf16.mxu0 0
  %173 = vmatpush2.bf16.msra.mxu0 0
  %174 = vmatprep.subr.bf16.mxu0 0
  %175 = vmatpush2.bf16.msra.mxu0 0
  %176 = vmatprep.subr.bf16.mxu0 0
  %177 = vmatpush2.bf16.msra.mxu0 0
  %178 = vmatprep.subr.bf16.mxu0 0
  %179 = vmatpush2.bf16.msra.mxu0 0
  %180 = vmatprep.subr.bf16.mxu0 0
  %181 = vmatpush2.bf16.msra.mxu0 0
  %182 = vmatprep.subr.bf16.mxu0 0
  %183 = vmatpush2.bf16.msra.mxu0 0
  %184 = vmatprep.mubr.bf16.mxu0 0
  %185 = vmatmul.mubr.bf16.gmra.mxu0 %v93
  %v186 = vpop.f32.mrf.mxu0
  %v187 = vadd.f32 0.0, %v186
  %v188 = vpop.f32.mrf.mxu0
  %v189 = vpop.f32.mrf.mxu0
  %v190 = vadd.f32 0.0, %v189
  %v191 = vpop.f32.mrf.mxu0
  %192 = vdwg.mxu0
  %v193 = vxor.u32 %v130, 2147483648
  %v194 = vxor.u32 %v133, 2147483648
  %v195 = vmul.f32 %v193, 1.442695
  %v196 = vpow.pop %v195
  %v197 = vmul.f32 %v194, 1.442695
  %v198 = vpow.pop %v197
  %v199 = vadd.f32 %v196, 1.0
  %v200 = vadd.f32 %v198, 1.0
  %v201 = vrcp.pop %v199
  %v202 = vmul.f32 1.0, %v201
  %v203 = vrcp.pop %v200
  %v204 = vmul.f32 1.0, %v203
  %v205 = vmul.f32 %v130, %v202
  %v206 = vmul.f32 %v133, %v204
  %v207 = vmul.f32 %v205, %v187
  %v208 = vmul.f32 %v206, %v190
  %v209 = vpack.c.bf16 %v208, %v207
  %v210 = vld [vmem:[#allocation3] sm:$0xff]
  %v211 = vld [vmem:[#allocation3 + $0x8] sm:$0xff]
  %v212 = vld [vmem:[%s4] sm:$0xf]
  %v213 = vld [vmem:[%s4 + $0x4] sm:$0xf]
  %v214 = vld [vmem:[%s4 + $0x8] sm:$0xf]
  %v215 = vld [vmem:[%s4 + $0xc] sm:$0xf]
  %v216 = vld [vmem:[%s4 + $0x10] sm:$0xf]
  %v217 = vld [vmem:[%s4 + $0x14] sm:$0xf]
  %v218 = vld [vmem:[%s4 + $0x18] sm:$0xf]
  %v219 = vld [vmem:[%s4 + $0x1c] sm:$0xf]
  %v228 = vunpack.c.l.b16 %v212
  %v229 = vunpack.c.l.b16 %v213
  %v230 = vunpack.c.l.b16 %v214
  %v231 = vunpack.c.l.b16 %v215
  %v232 = vunpack.c.l.b16 %v216
  %v233 = vunpack.c.l.b16 %v217
  %v234 = vunpack.c.l.b16 %v218
  %v235 = vunpack.c.l.b16 %v219
  %v236 = vpack.c.b16 %v229, %v228
  %v237 = vpack.c.b16 %v231, %v230
  %v238 = vpack.c.b16 %v233, %v232
  %v239 = vpack.c.b16 %v235, %v234
  %vm244 = vcmask 523264
  %v246 = vsel %vm244, %v209, 0
  %248 = vmatprep.subr.bf16.mxu0 0
  %249 = vmatpush1.bf16.msra.mxu0 0
  %250 = vmatprep.subr.bf16.mxu0 0
  %251 = vmatpush1.bf16.msra.mxu0 0
  %252 = vmatprep.subr.bf16.mxu0 0
  %253 = vmatpush1.bf16.msra.mxu0 0
  %254 = vmatprep.subr.bf16.mxu0 0
  %255 = vmatpush1.bf16.msra.mxu0 0
  %256 = vmatprep.subr.bf16.mxu0 0
  %257 = vmatpush1.bf16.msra.mxu0 %v239
  %258 = vmatprep.subr.bf16.mxu0 0
  %259 = vmatpush1.bf16.msra.mxu0 %v238
  %260 = vmatprep.subr.bf16.mxu0 0
  %261 = vmatpush1.bf16.msra.mxu0 %v237
  %262 = vmatprep.subr.bf16.mxu0 0
  %263 = vmatpush1.bf16.msra.mxu0 %v236
  %264 = vmatprep.subr.bf16.mxu0 0
  %265 = vmatpush2.bf16.msra.mxu0 0
  %266 = vmatprep.subr.bf16.mxu0 0
  %267 = vmatpush2.bf16.msra.mxu0 0
  %268 = vmatprep.subr.bf16.mxu0 0
  %269 = vmatpush2.bf16.msra.mxu0 0
  %270 = vmatprep.subr.bf16.mxu0 0
  %271 = vmatpush2.bf16.msra.mxu0 0
  %272 = vmatprep.subr.bf16.mxu0 0
  %273 = vmatpush2.bf16.msra.mxu0 0
  %274 = vmatprep.subr.bf16.mxu0 0
  %275 = vmatpush2.bf16.msra.mxu0 0
  %276 = vmatprep.subr.bf16.mxu0 0
  %277 = vmatpush2.bf16.msra.mxu0 0
  %278 = vmatprep.subr.bf16.mxu0 0
  %279 = vmatpush2.bf16.msra.mxu0 0
  %280 = vmatprep.mubr.bf16.mxu0 0
  %281 = vmatmul.mubr.bf16.gmra.mxu0 %v246
  %v282 = vpop.f32.mrf.mxu0
  %v283 = vadd.f32 0.0, %v282
  %v284 = vpop.f32.mrf.mxu0
  %v285 = vpop.f32.mrf.mxu0
  %v286 = vadd.f32 0.0, %v285
  %v287 = vpop.f32.mrf.mxu0
  %288 = vdwg.mxu0
  %v289 = vadd.f32 %v210, %v283
  %v290 = vadd.f32 %v211, %v286
  %291 = vst.msk [vmem:[#allocation3] sm:$0xff] %vm91, %v289
  %292 = vst.msk [vmem:[#allocation3 + $0x8] sm:$0xff] %vm91, %v290
  // Predicated region
  $region26: #{transformer_forward.13} parent=0 // pred_check
    %p293 = pneg %p21
  $region27: #{transformer_forward.13} parent=0 // pred_check_branch
    %295 = sbr.rel (%p293) target = $region29
  $region28: #{transformer_forward.13} parent=0 // pred_region
    %v296 = vld [vmem:[#allocation3] sm:$0xff]
    %v297 = vld [vmem:[#allocation3 + $0x8] sm:$0xff]
    %v298 = vpack.c.bf16 %v297, %v296
    %v300 = vunpack.c.l.b16 %v298
    %v301 = vunpack.c.h.b16 %v298
    %v302 = vpack.c.b16 %v300, %v300
    %v303 = vpack.c.b16 %v301, %v301
    %vm306 = vcmask 257024
    %307 = vst.msk [vmem:[%s5] sm:$0xf] %vm306, %v302
    %308 = vst.msk [vmem:[%s5 + $0x4] sm:$0xf] %vm306, %v303
  $region29: #{transformer_forward.13} parent=0 // pred_fallthru
    _
  // Predicated region
  $region30: #{transformer_forward.13} parent=0 // pred_check
    _
  $region31: #{transformer_forward.13} parent=0 // pred_check_branch
    %310 = sbr.rel (0) target = $region33
  $region32: #{transformer_forward.13} parent=0 // pred_region
    _
  $region33: #{transformer_forward.13} parent=0 // pred_fallthru
    _
  // Predicated region
  $region34: #{transformer_forward.13} parent=0 // pred_check
    _
  $region35: #{transformer_forward.13} parent=0 // pred_check_branch
    %312 = sbr.rel (0) target = $region37
  $region36: #{transformer_forward.13} parent=0 // pred_region
    _
  $region37: #{transformer_forward.13} parent=0 // pred_fallthru
    _

// kernel: transformer_forward.18
$region0: #{transformer_forward.18}
  #allocation0 [shape = 'u32[]', space=smem, size = 0x4, offset = 0x4, fixed_abs, tag = 'smem constant byte address 0x4 - core index']
  #allocation1 [shape = 'u32[144,128]{1,0:T(1,128)}', space=vmem, size = 0x12000, scoped, tag = 'internal scratch']
  #allocation2 [shape = 'bf16[16,32]{1,0:T(8,128)(2,1)}', space=vmem, size = 0x1000, scoped, tag = 'scratch operand']
  %s0 = inlined_call_operand.vmem [shape: bf16[16,32], index: 0, kind: input, shape index: {}]
  %s1 = inlined_call_operand.vmem [shape: bf16[1,32], index: 1, kind: input, shape index: {}]
  %s2 = inlined_call_operand.vmem [shape: bf16[32,128], index: 2, kind: input, shape index: {}]
  %s3 = inlined_call_operand.vmem [shape: bf16[16,128], index: 3, kind: output, shape index: {}]
  %s4 = sld [smem:[#allocation0]]
  $region26: #{transformer_forward.18} parent=0
    _
  %s6 = ssub.s32 1, %s4
  %s7 = scalar_select 0, %s6, %s4
  // Predicated region
  $region2: #{transformer_forward.18} parent=0 // pred_check
    _
  $region3: #{transformer_forward.18} parent=0 // pred_check_branch
    %9 = sbr.rel (0) target = $region5
  $region4: #{transformer_forward.18} parent=0 // pred_region
    _
  $region5: #{transformer_forward.18} parent=0 // pred_fallthru
    _
  // Predicated region
  $region6: #{transformer_forward.18} parent=0 // pred_check
    _
  $region7: #{transformer_forward.18} parent=0 // pred_check_branch
    %11 = sbr.rel (0) target = $region9
  $region8: #{transformer_forward.18} parent=0 // pred_region
    _
  $region9: #{transformer_forward.18} parent=0 // pred_fallthru
    _
  // Predicated region
  $region10: #{transformer_forward.18} parent=0 // pred_check
    _
  $region11: #{transformer_forward.18} parent=0 // pred_check_branch
    %13 = sbr.rel (0) target = $region13
  $region12: #{transformer_forward.18} parent=0 // pred_region
    _
  $region13: #{transformer_forward.18} parent=0 // pred_fallthru
    _
  %p15 = scmp.eq.s32.totalorder 0, 0
  // Predicated region
  $region14: #{transformer_forward.18} parent=0 // pred_check
    %p16 = pneg %p15
  $region15: #{transformer_forward.18} parent=0 // pred_check_branch
    %18 = sbr.rel (%p16) target = $region17
  $region16: #{transformer_forward.18} parent=0 // pred_region
    %v19 = vld [vmem:[%s0] sm:$0xf]
    %v20 = vld [vmem:[%s0 + $0x4] sm:$0xf]
    %v21 = vunpack.c.l.bf16 %v19
    %v22 = vunpack.c.l.bf16 %v20
    %v23 = vmul.f32 %v21, %v21
    %v24 = vmul.f32 %v22, %v22
    %vm25 = vcmask 261120
    %v26 = vsel %vm25, %v23, 0.0
    %27 = vadd.xlane.f32.xlu0 %v26
    %v28 = vpop.xlane.xlu0 %27
    %v29 = vsel %vm25, %v24, 0.0
    %30 = vadd.xlane.f32.xlu0 %v29
    %v31 = vpop.xlane.xlu0 %30
    %v32 = vrcp.pop 32.0
    %v33 = vmul.f32 %v28, %v32
    %v34 = vmul.f32 %v31, %v32
    %v35 = vadd.f32 %v33, 1e-05
    %v36 = vadd.f32 %v34, 1e-05
    %v37 = vrsqrt.pop %v35
    %v38 = vrsqrt.pop %v36
    %v39 = vmul.f32 %v21, %v37
    %v40 = vmul.f32 %v22, %v38
    %v41 = vld [vmem:[%s1] sm:$0x1]
    %v42 = vunpack.c.l.bf16 %v41
    %v43 = vlaneseq
    %v44 = vshrl.u32 %v43, 7
    %v45 = vsub.s32 0, %v44
    %v46 = vrot.slane %v42, %v45
    %v47 = vmul.f32 %v39, %v46
    %v48 = vmul.f32 %v40, %v46
    %v49 = vpack.c.bf16 %v48, %v47
    %v51 = vunpack.c.l.b16 %v49
    %v52 = vunpack.c.h.b16 %v49
    %v53 = vpack.c.b16 %v51, %v51
    %v54 = vpack.c.b16 %v52, %v52
    %vm57 = vcmask 257024
    %58 = vst.msk [vmem:[#allocation2] sm:$0xf] %vm57, %v53
    %59 = vst.msk [vmem:[#allocation2 + $0x4] sm:$0xf] %vm57, %v54
  $region17: #{transformer_forward.18} parent=0 // pred_fallthru
    _
  %v60 = vld [vmem:[#allocation2] sm:$0xf]
  %v61 = vld [vmem:[#allocation2 + $0x4] sm:$0xf]
  %v62 = vld [vmem:[%s2] sm:$0xf]
  %v63 = vld [vmem:[%s2 + $0x4] sm:$0xf]
  %v64 = vld [vmem:[%s2 + $0x8] sm:$0xf]
  %v65 = vld [vmem:[%s2 + $0xc] sm:$0xf]
  %v68 = vunpack.c.l.b16 %v60
  %v69 = vunpack.c.l.b16 %v61
  %v70 = vpack.c.b16 %v69, %v68
  %v75 = vunpack.c.l.b16 %v62
  %v76 = vunpack.c.l.b16 %v63
  %v77 = vunpack.c.l.b16 %v64
  %v78 = vunpack.c.l.b16 %v65
  %v79 = vpack.c.b16 %v76, %v75
  %v80 = vpack.c.b16 %v78, %v77
  %vm83 = vcmask 261120
  %v85 = vsel %vm83, %v70, 0
  %87 = vmatprep.subr.bf16.mxu0 0
  %88 = vmatpush1.bf16.msra.mxu0 0
  %89 = vmatprep.subr.bf16.mxu0 0
  %90 = vmatpush1.bf16.msra.mxu0 0
  %91 = vmatprep.subr.bf16.mxu0 0
  %92 = vmatpush1.bf16.msra.mxu0 0
  %93 = vmatprep.subr.bf16.mxu0 0
  %94 = vmatpush1.bf16.msra.mxu0 0
  %95 = vmatprep.subr.bf16.mxu0 0
  %96 = vmatpush1.bf16.msra.mxu0 0
  %97 = vmatprep.subr.bf16.mxu0 0
  %98 = vmatpush1.bf16.msra.mxu0 0
  %99 = vmatprep.subr.bf16.mxu0 0
  %100 = vmatpush1.bf16.msra.mxu0 %v80
  %101 = vmatprep.subr.bf16.mxu0 0
  %102 = vmatpush1.bf16.msra.mxu0 %v79
  %103 = vmatprep.subr.bf16.mxu0 0
  %104 = vmatpush2.bf16.msra.mxu0 0
  %105 = vmatprep.subr.bf16.mxu0 0
  %106 = vmatpush2.bf16.msra.mxu0 0
  %107 = vmatprep.subr.bf16.mxu0 0
  %108 = vmatpush2.bf16.msra.mxu0 0
  %109 = vmatprep.subr.bf16.mxu0 0
  %110 = vmatpush2.bf16.msra.mxu0 0
  %111 = vmatprep.subr.bf16.mxu0 0
  %112 = vmatpush2.bf16.msra.mxu0 0
  %113 = vmatprep.subr.bf16.mxu0 0
  %114 = vmatpush2.bf16.msra.mxu0 0
  %115 = vmatprep.subr.bf16.mxu0 0
  %116 = vmatpush2.bf16.msra.mxu0 0
  %117 = vmatprep.subr.bf16.mxu0 0
  %118 = vmatpush2.bf16.msra.mxu0 0
  %119 = vmatprep.mubr.bf16.mxu0 0
  %120 = vmatmul.mubr.bf16.gmra.mxu0 %v85
  %v121 = vpop.f32.mrf.mxu0
  %v122 = vadd.f32 0.0, %v121
  %v123 = vpop.f32.mrf.mxu0
  %v124 = vpop.f32.mrf.mxu0
  %v125 = vadd.f32 0.0, %v124
  %v126 = vpop.f32.mrf.mxu0
  %127 = vdwg.mxu0
  %v128 = vpack.c.bf16 %v125, %v122
  %v130 = vunpack.c.l.b16 %v128
  %v131 = vunpack.c.h.b16 %v128
  %v132 = vpack.c.b16 %v130, %v130
  %v133 = vpack.c.b16 %v131, %v131
  %136 = vst [vmem:[%s3] sm:$0xf] %v132
  %137 = vst [vmem:[%s3 + $0x4] sm:$0xf] %v133
  // Predicated region
  $region18: #{transformer_forward.18} parent=0 // pred_check
    _
  $region19: #{transformer_forward.18} parent=0 // pred_check_branch
    %139 = sbr.rel (0) target = $region21
  $region20: #{transformer_forward.18} parent=0 // pred_region
    _
  $region21: #{transformer_forward.18} parent=0 // pred_fallthru
    _
  // Predicated region
  $region22: #{transformer_forward.18} parent=0 // pred_check
    _
  $region23: #{transformer_forward.18} parent=0 // pred_check_branch
    %141 = sbr.rel (0) target = $region25
  $region24: #{transformer_forward.18} parent=0 // pred_region
    _
  $region25: #{transformer_forward.18} parent=0 // pred_fallthru
    _

// kernel: transformer_forward.11
$region0: #{transformer_forward.11}
  #allocation0 [shape = 'u32[]', space=smem, size = 0x4, offset = 0x4, fixed_abs, tag = 'smem constant byte address 0x4 - core index']
  #allocation1 [shape = 'u32[144,128]{1,0:T(1,128)}', space=vmem, size = 0x12000, scoped, tag = 'internal scratch']
  #allocation2 [shape = 'bf16[4,8,8]{2,1,0:T(8,128)(2,1)}', space=vmem, size = 0x2000, scoped, tag = 'scratch operand']
  #allocation3 [shape = 'f32[4,8,1]{2,1,0:T(8,128)}', space=vmem, size = 0x4000, scoped, tag = 'scratch operand']
  #allocation4 [shape = 'f32[4,8,1]{2,1,0:T(8,128)}', space=vmem, size = 0x4000, scoped, tag = 'scratch operand']
  #allocation5 [shape = 'f32[4,8,8]{2,1,0:T(8,128)}', space=vmem, size = 0x4000, scoped, tag = 'scratch operand']
  %s0 = inlined_call_operand.vmem [shape: bf16[2,8,4,8], index: 0, kind: input, shape index: {}]
  %s1 = inlined_call_operand.vmem [shape: bf16[2,8,4,8], index: 1, kind: input, shape index: {}]
  %s2 = inlined_call_operand.vmem [shape: bf16[2,8,4,8], index: 2, kind: input, shape index: {}]
  %s3 = inlined_call_operand.vmem [shape: f32[8,8], index: 3, kind: input, shape index: {}, may-alias: {3,5}]
  %s4 = inlined_call_operand.vmem [shape: f32[8,8], index: 4, kind: input, shape index: {}, may-alias: {4,6}]
  %s5 = inlined_call_operand.vmem [shape: f32[8,8], index: 5, kind: input, shape index: {}, may-alias: {3,5}]
  %s6 = inlined_call_operand.vmem [shape: f32[8,8], index: 6, kind: input, shape index: {}, may-alias: {4,6}]
  %s7 = inlined_call_operand.vmem [shape: bf16[2,8,32], index: 7, kind: output, shape index: {}]
  %s8 = sld [smem:[#allocation0]]
  $region69: #{transformer_forward.11} parent=0
    _
  %s10 = ssub.s32 1, %s8
  %s11 = scalar_select 0, %s10, %s8
  loop: start=0, step=1, limit=4
  $region2: #{transformer_forward.11} parent=0 // loop_pre_header
    _
  $region3: #{transformer_forward.11} parent=0 // loop_header
    %s13 = sphi 0, %s17
    %p14 = scmp.ge.s32.totalorder %s13, 4
    %s20 = sphi 0, %s39
    %s21 = sphi 0, %s35
    %s22 = sphi 0, %s31
    %s23 = sphi 0, %s20
    %s24 = sphi 0, %s21
    %s25 = sphi 0, %s22
    %s26 = sphi 0, %s23
    %s27 = sphi 0, %s24
    %s28 = sphi 0, %s25
    %s44 = sphi 0, %s46
    %s47 = sphi 0, %s44
    %s48 = sphi 0, %s47
    %s64 = sphi 0, %s48
    %s72 = sphi 0, %s74
    %s75 = sphi 0, %s72
    %s76 = sphi 0, %s75
    %s92 = sphi 0, %s76
    %s100 = sphi 0, %s102
    %s103 = sphi 0, %s100
    %s104 = sphi 0, %s103
    %s120 = sphi 0, %s104
    %s126 = sphi 0, %s128
    %s129 = sphi 0, %s126
    %s130 = sphi 0, %s129
    %s146 = sphi 0, %s130
    %s152 = sphi 0, %s154
    %s155 = sphi 0, %s152
    %s156 = sphi 0, %s155
    %s172 = sphi 0, %s156
    %s178 = sphi 0, %s180
    %s181 = sphi 0, %s178
    %s182 = sphi 0, %s181
    %s198 = sphi 0, %s182
    %s204 = sphi 0, %s206
    %s207 = sphi 0, %s204
    %s208 = sphi 0, %s207
    %s224 = sphi 0, %s208
    %s232 = sphi 0, %s234
    %s235 = sphi 0, %s232
    %s236 = sphi 0, %s235
    %s252 = sphi 0, %s236
  $region4: #{transformer_forward.11} parent=0 // loop_header_branch
    %16 = sbr.rel (%p14) target = $region8
  $region5: #{transformer_forward.11} parent=0 // loop_body
    %s18 = ssub.s32 %s13, 1
    %s19 = ssub.s32 %s13, 2
    %s29 = sadd.s32 1, %s22
    %p30 = scmp.ge.s32.totalorder %s29, 1
    %s31 = scalar_select %p30, 0, %s29
    %s32 = sadd.s32 1, %s21
    %s33 = scalar_select %p30, %s32, %s21
    %p34 = scmp.ge.s32.totalorder %s33, 1
    %s35 = scalar_select %p34, 0, %s33
    %s36 = sadd.s32 1, %s20
    %s37 = scalar_select %p34, %s36, %s20
    %p38 = scmp.ge.s32.totalorder %s37, 2
    %s39 = scalar_select %p38, 0, %s37
    %s40 = ssub.s32 %s20, %s39
    %s41 = ssub.s32 %s21, %s35
    %s42 = sor.u32 %s40, %s41
    %p43 = scmp.eq.s32.totalorder %s42, 0
    %s45 = sadd.s32 %s44, 1
    %s46 = scalar_select %p43, %s44, %s45
    %p49 = pneg %p43
    %p50 = scmp.eq.s32.totalorder %s13, 1
    %p51 = por %p49, %p50
    %p52 = scmp.ne.s32.totalorder %s44, %s47
    %p53 = scmp.eq.s32.totalorder %s13, 0
    %p54 = por %p52, %p53
    %p55 = scmp.ne.s32.totalorder %s44, %s47
    %p56 = scmp.eq.s32.totalorder %s18, 1
    %p57 = por %p55, %p56
    %p58 = scmp.ne.s32.totalorder %s47, %s48
    %p59 = scmp.eq.s32.totalorder %s18, 0
    %p60 = por %p58, %p59
    %p61 = scmp.ne.s32.totalorder %s47, %s48
    %p62 = scmp.eq.s32.totalorder %s19, 1
    %p63 = por %p61, %p62
    %p65 = scmp.ne.s32.totalorder %s48, %s64
    %p66 = scmp.eq.s32.totalorder %s19, 0
    %p67 = por %p65, %p66
    %s68 = ssub.s32 %s20, %s39
    %s69 = ssub.s32 %s22, %s31
    %s70 = sor.u32 %s68, %s69
    %p71 = scmp.eq.s32.totalorder %s70, 0
    %s73 = sadd.s32 %s72, 1
    %s74 = scalar_select %p71, %s72, %s73
    %p77 = pneg %p71
    %p78 = scmp.eq.s32.totalorder %s13, 1
    %p79 = por %p77, %p78
    %p80 = scmp.ne.s32.totalorder %s72, %s75
    %p81 = scmp.eq.s32.totalorder %s13, 0
    %p82 = por %p80, %p81
    %p83 = scmp.ne.s32.totalorder %s72, %s75
    %p84 = scmp.eq.s32.totalorder %s18, 1
    %p85 = por %p83, %p84
    %p86 = scmp.ne.s32.totalorder %s75, %s76
    %p87 = scmp.eq.s32.totalorder %s18, 0
    %p88 = por %p86, %p87
    %p89 = scmp.ne.s32.totalorder %s75, %s76
    %p90 = scmp.eq.s32.totalorder %s19, 1
    %p91 = por %p89, %p90
    %p93 = scmp.ne.s32.totalorder %s76, %s92
    %p94 = scmp.eq.s32.totalorder %s19, 0
    %p95 = por %p93, %p94
    %s96 = ssub.s32 %s20, %s39
    %s97 = ssub.s32 %s22, %s31
    %s98 = sor.u32 %s96, %s97
    %p99 = scmp.eq.s32.totalorder %s98, 0
    %s101 = sadd.s32 %s100, 1
    %s102 = scalar_select %p99, %s100, %s101
    %p105 = pneg %p99
    %p106 = scmp.eq.s32.totalorder %s13, 1
    %p107 = por %p105, %p106
    %p108 = scmp.ne.s32.totalorder %s100, %s103
    %p109 = scmp.eq.s32.totalorder %s13, 0
    %p110 = por %p108, %p109
    %p111 = scmp.ne.s32.totalorder %s100, %s103
    %p112 = scmp.eq.s32.totalorder %s18, 1
    %p113 = por %p111, %p112
    %p114 = scmp.ne.s32.totalorder %s103, %s104
    %p115 = scmp.eq.s32.totalorder %s18, 0
    %p116 = por %p114, %p115
    %p117 = scmp.ne.s32.totalorder %s103, %s104
    %p118 = scmp.eq.s32.totalorder %s19, 1
    %p119 = por %p117, %p118
    %p121 = scmp.ne.s32.totalorder %s104, %s120
    %p122 = scmp.eq.s32.totalorder %s19, 0
    %p123 = por %p121, %p122
    %s124 = ssub.s32 %s21, %s35
    %p125 = scmp.eq.s32.totalorder %s124, 0
    %s127 = sadd.s32 %s126, 1
    %s128 = scalar_select %p125, %s126, %s127
    %p131 = pneg %p125
    %p132 = scmp.eq.s32.totalorder %s13, 1
    %p133 = por %p131, %p132
    %p134 = scmp.ne.s32.totalorder %s126, %s129
    %p135 = scmp.eq.s32.totalorder %s13, 0
    %p136 = por %p134, %p135
    %p137 = scmp.ne.s32.totalorder %s126, %s129
    %p138 = scmp.eq.s32.totalorder %s18, 1
    %p139 = por %p137, %p138
    %p140 = scmp.ne.s32.totalorder %s129, %s130
    %p141 = scmp.eq.s32.totalorder %s18, 0
    %p142 = por %p140, %p141
    %p143 = scmp.ne.s32.totalorder %s129, %s130
    %p144 = scmp.eq.s32.totalorder %s19, 1
    %p145 = por %p143, %p144
    %p147 = scmp.ne.s32.totalorder %s130, %s146
    %p148 = scmp.eq.s32.totalorder %s19, 0
    %p149 = por %p147, %p148
    %s150 = ssub.s32 %s21, %s35
    %p151 = scmp.eq.s32.totalorder %s150, 0
    %s153 = sadd.s32 %s152, 1
    %s154 = scalar_select %p151, %s152, %s153
    %p157 = pneg %p151
    %p158 = scmp.eq.s32.totalorder %s13, 1
    %p159 = por %p157, %p158
    %p160 = scmp.ne.s32.totalorder %s152, %s155
    %p161 = scmp.eq.s32.totalorder %s13, 0
    %p162 = por %p160, %p161
    %p163 = scmp.ne.s32.totalorder %s152, %s155
    %p164 = scmp.eq.s32.totalorder %s18, 1
    %p165 = por %p163, %p164
    %p166 = scmp.ne.s32.totalorder %s155, %s156
    %p167 = scmp.eq.s32.totalorder %s18, 0
    %p168 = por %p166, %p167
    %p169 = scmp.ne.s32.totalorder %s155, %s156
    %p170 = scmp.eq.s32.totalorder %s19, 1
    %p171 = por %p169, %p170
    %p173 = scmp.ne.s32.totalorder %s156, %s172
    %p174 = scmp.eq.s32.totalorder %s19, 0
    %p175 = por %p173, %p174
    %s176 = ssub.s32 %s22, %s31
    %p177 = scmp.eq.s32.totalorder %s176, 0
    %s179 = sadd.s32 %s178, 1
    %s180 = scalar_select %p177, %s178, %s179
    %p183 = pneg %p177
    %p184 = scmp.eq.s32.totalorder %s13, 1
    %p185 = por %p183, %p184
    %p186 = scmp.ne.s32.totalorder %s178, %s181
    %p187 = scmp.eq.s32.totalorder %s13, 0
    %p188 = por %p186, %p187
    %p189 = scmp.ne.s32.totalorder %s178, %s181
    %p190 = scmp.eq.s32.totalorder %s18, 1
    %p191 = por %p189, %p190
    %p192 = scmp.ne.s32.totalorder %s181, %s182
    %p193 = scmp.eq.s32.totalorder %s18, 0
    %p194 = por %p192, %p193
    %p195 = scmp.ne.s32.totalorder %s181, %s182
    %p196 = scmp.eq.s32.totalorder %s19, 1
    %p197 = por %p195, %p196
    %p199 = scmp.ne.s32.totalorder %s182, %s198
    %p200 = scmp.eq.s32.totalorder %s19, 0
    %p201 = por %p199, %p200
    %s202 = ssub.s32 %s22, %s31
    %p203 = scmp.eq.s32.totalorder %s202, 0
    %s205 = sadd.s32 %s204, 1
    %s206 = scalar_select %p203, %s204, %s205
    %p209 = pneg %p203
    %p210 = scmp.eq.s32.totalorder %s13, 1
    %p211 = por %p209, %p210
    %p212 = scmp.ne.s32.totalorder %s204, %s207
    %p213 = scmp.eq.s32.totalorder %s13, 0
    %p214 = por %p212, %p213
    %p215 = scmp.ne.s32.totalorder %s204, %s207
    %p216 = scmp.eq.s32.totalorder %s18, 1
    %p217 = por %p215, %p216
    %p218 = scmp.ne.s32.totalorder %s207, %s208
    %p219 = scmp.eq.s32.totalorder %s18, 0
    %p220 = por %p218, %p219
    %p221 = scmp.ne.s32.totalorder %s207, %s208
    %p222 = scmp.eq.s32.totalorder %s19, 1
    %p223 = por %p221, %p222
    %p225 = scmp.ne.s32.totalorder %s208, %s224
    %p226 = scmp.eq.s32.totalorder %s19, 0
    %p227 = por %p225, %p226
    %s228 = ssub.s32 %s20, %s39
    %s229 = ssub.s32 %s21, %s35
    %s230 = sor.u32 %s228, %s229
    %p231 = scmp.eq.s32.totalorder %s230, 0
    %s233 = sadd.s32 %s232, 1
    %s234 = scalar_select %p231, %s232, %s233
    %p237 = pneg %p231
    %p238 = scmp.eq.s32.totalorder %s13, 1
    %p239 = por %p237, %p238
    %p240 = scmp.ne.s32.totalorder %s232, %s235
    %p241 = scmp.eq.s32.totalorder %s13, 0
    %p242 = por %p240, %p241
    %p243 = scmp.ne.s32.totalorder %s232, %s235
    %p244 = scmp.eq.s32.totalorder %s18, 1
    %p245 = por %p243, %p244
    %p246 = scmp.ne.s32.totalorder %s235, %s236
    %p247 = scmp.eq.s32.totalorder %s18, 0
    %p248 = por %p246, %p247
    %p249 = scmp.ne.s32.totalorder %s235, %s236
    %p250 = scmp.eq.s32.totalorder %s19, 1
    %p251 = por %p249, %p250
    %p253 = scmp.ne.s32.totalorder %s236, %s252
    %p254 = scmp.eq.s32.totalorder %s19, 0
    %p255 = por %p253, %p254
    %p256 = scmp.le.s32.totalorder 1, %s13
    %p257 = scmp.lt.s32.totalorder %s13, 3
    %p258 = pnand %p256, %p257
    %p259 = pneg %p258
    // Predicated region
    $region9: #{transformer_forward.11} parent=5 // pred_check
      _
    $region10: #{transformer_forward.11} parent=5 // pred_check_branch
      %261 = sbr.rel (%p258) target = $region12
    $region11: #{transformer_forward.11} parent=5 // pred_region
      %s262 = ssub.s32 %s13, 1
      // Predicated region
      $region13: #{transformer_forward.11} parent=11 // pred_check
        %p263 = pneg %p142
      $region14: #{transformer_forward.11} parent=11 // pred_check_branch
        %265 = sbr.rel (%p263) target = $region16
      $region15: #{transformer_forward.11} parent=11 // pred_region
        %p266 = scmp.lt.s32.totalorder %s24, 0
        %s267 = scalar_select %p266, %s24, 0
        %s268 = smul.addr %s267, 8
        %s269 = scalar_lea.vmem %s3, %s268
      $region16: #{transformer_forward.11} parent=11 // pred_fallthru
        _
      // Predicated region
      $region17: #{transformer_forward.11} parent=11 // pred_check
        %p270 = pneg %p168
      $region18: #{transformer_forward.11} parent=11 // pred_check_branch
        %272 = sbr.rel (%p270) target = $region20
      $region19: #{transformer_forward.11} parent=11 // pred_region
        %p273 = scmp.lt.s32.totalorder %s24, 0
        %s274 = scalar_select %p273, %s24, 0
        %s275 = smul.addr %s274, 8
        %s276 = scalar_lea.vmem %s4, %s275
      $region20: #{transformer_forward.11} parent=11 // pred_fallthru
        _
      // Predicated region
      $region21: #{transformer_forward.11} parent=11 // pred_check
        %p277 = pneg %p194
      $region22: #{transformer_forward.11} parent=11 // pred_check_branch
        %279 = sbr.rel (%p277) target = $region24
      $region23: #{transformer_forward.11} parent=11 // pred_region
        %p280 = scmp.lt.s32.totalorder %s25, 0
        %s281 = scalar_select %p280, %s25, 0
        %s282 = smul.addr %s281, 8
        %s283 = scalar_lea.vmem %s5, %s282
      $region24: #{transformer_forward.11} parent=11 // pred_fallthru
        _
      // Predicated region
      $region25: #{transformer_forward.11} parent=11 // pred_check
        %p284 = pneg %p220
      $region26: #{transformer_forward.11} parent=11 // pred_check_branch
        %286 = sbr.rel (%p284) target = $region28
      $region27: #{transformer_forward.11} parent=11 // pred_region
        %p287 = scmp.lt.s32.totalorder %s25, 0
        %s288 = scalar_select %p287, %s25, 0
        %s289 = smul.addr %s288, 8
        %s290 = scalar_lea.vmem %s6, %s289
      $region28: #{transformer_forward.11} parent=11 // pred_fallthru
        _
    $region12: #{transformer_forward.11} parent=5 // pred_fallthru
      _
    %p291 = scmp.lt.s32.totalorder %s13, 2
    // Predicated region
    $region29: #{transformer_forward.11} parent=5 // pred_check
      %p292 = pneg %p291
    $region30: #{transformer_forward.11} parent=5 // pred_check_branch
      %294 = sbr.rel (%p292) target = $region32
    $region31: #{transformer_forward.11} parent=5 // pred_region
      // Predicated region
      $region33: #{transformer_forward.11} parent=31 // pred_check
        %p295 = pneg %p54
      $region34: #{transformer_forward.11} parent=31 // pred_check_branch
        %297 = sbr.rel (%p295) target = $region36
      $region35: #{transformer_forward.11} parent=31 // pred_region
        %s298 = smul.u32 8, %s21
        %p299 = scmp.lt.s32.totalorder %s20, 1
        %s300 = scalar_select %p299, %s20, 1
        %p301 = scmp.lt.s32.totalorder %s298, 7
        %s302 = scalar_select %p301, %s298, 7
        %s303 = smul.addr %s300, 8
        %s304 = sadd.s32 %s302, %s303
        %s305 = smul.addr %s304, 2
        %s306 = scalar_lea.vmem %s0, %s305
        %s307 = smul.u32 8, %s21
      $region36: #{transformer_forward.11} parent=31 // pred_fallthru
        _
      // Predicated region
      $region37: #{transformer_forward.11} parent=31 // pred_check
        %p308 = pneg %p82
      $region38: #{transformer_forward.11} parent=31 // pred_check_branch
        %310 = sbr.rel (%p308) target = $region40
      $region39: #{transformer_forward.11} parent=31 // pred_region
        %s311 = smul.u32 8, %s22
        %p312 = scmp.lt.s32.totalorder %s20, 1
        %s313 = scalar_select %p312, %s20, 1
        %p314 = scmp.lt.s32.totalorder %s311, 7
        %s315 = scalar_select %p314, %s311, 7
        %s316 = smul.addr %s313, 8
        %s317 = sadd.s32 %s315, %s316
        %s318 = smul.addr %s317, 2
        %s319 = scalar_lea.vmem %s1, %s318
        %s320 = smul.u32 8, %s22
      $region40: #{transformer_forward.11} parent=31 // pred_fallthru
        _
      // Predicated region
      $region41: #{transformer_forward.11} parent=31 // pred_check
        %p321 = pneg %p110
      $region42: #{transformer_forward.11} parent=31 // pred_check_branch
        %323 = sbr.rel (%p321) target = $region44
      $region43: #{transformer_forward.11} parent=31 // pred_region
        %s324 = smul.u32 8, %s22
        %p325 = scmp.lt.s32.totalorder %s20, 1
        %s326 = scalar_select %p325, %s20, 1
        %p327 = scmp.lt.s32.totalorder %s324, 7
        %s328 = scalar_select %p327, %s324, 7
        %s329 = smul.addr %s326, 8
        %s330 = sadd.s32 %s328, %s329
        %s331 = smul.addr %s330, 2
        %s332 = scalar_lea.vmem %s2, %s331
        %s333 = smul.u32 8, %s22
      $region44: #{transformer_forward.11} parent=31 // pred_fallthru
        _
    $region32: #{transformer_forward.11} parent=5 // pred_fallthru
      _
    %p334 = scmp.le.s32.totalorder 1, %s13
    %p335 = scmp.lt.s32.totalorder %s13, 3
    %p336 = pnand %p334, %p335
    %p337 = pneg %p336
    // Predicated region
    $region45: #{transformer_forward.11} parent=5 // pred_check
      _
    $region46: #{transformer_forward.11} parent=5 // pred_check_branch
      %339 = sbr.rel (%p336) target = $region48
    $region47: #{transformer_forward.11} parent=5 // pred_region
      %s340 = ssub.s32 %s13, 1
      %s341 = smul.u32 8, %s24
      %p342 = scmp.lt.s32.totalorder %s23, 1
      %s343 = scalar_select %p342, %s23, 1
      %p344 = scmp.lt.s32.totalorder %s341, 7
      %s345 = scalar_select %p344, %s341, 7
      %s346 = smul.addr %s343, 8
      %s347 = sadd.s32 %s345, %s346
      %s348 = smul.addr %s347, 2
      %s349 = scalar_lea.vmem %s0, %s348
      %p350 = pneg %p60
      %p351 = pneg %p57
      %s352 = smul.u32 8, %s25
      %p353 = scmp.lt.s32.totalorder %s23, 1
      %s354 = scalar_select %p353, %s23, 1
      %p355 = scmp.lt.s32.totalorder %s352, 7
      %s356 = scalar_select %p355, %s352, 7
      %s357 = smul.addr %s354, 8
      %s358 = sadd.s32 %s356, %s357
      %s359 = smul.addr %s358, 2
      %s360 = scalar_lea.vmem %s1, %s359
      %p361 = pneg %p88
      %p362 = pneg %p85
      %s363 = smul.u32 8, %s25
      %p364 = scmp.lt.s32.totalorder %s23, 1
      %s365 = scalar_select %p364, %s23, 1
      %p366 = scmp.lt.s32.totalorder %s363, 7
      %s367 = scalar_select %p366, %s363, 7
      %s368 = smul.addr %s365, 8
      %s369 = sadd.s32 %s367, %s368
      %s370 = smul.addr %s369, 2
      %s371 = scalar_lea.vmem %s2, %s370
      %p372 = pneg %p116
      %p373 = pneg %p113
      %p374 = scmp.lt.s32.totalorder %s24, 0
      %s375 = scalar_select %p374, %s24, 0
      %s376 = smul.addr %s375, 8
      %s377 = scalar_lea.vmem %s3, %s376
      %p378 = pneg %p142
      %p379 = pneg %p139
      %p380 = scmp.lt.s32.totalorder %s24, 0
      %s381 = scalar_select %p380, %s24, 0
      %s382 = smul.addr %s381, 8
      %s383 = scalar_lea.vmem %s4, %s382
      %p384 = pneg %p168
      %p385 = pneg %p165
      %p386 = scmp.lt.s32.totalorder %s25, 0
      %s387 = scalar_select %p386, %s25, 0
      %s388 = smul.addr %s387, 8
      %s389 = scalar_lea.vmem %s5, %s388
      %p390 = pneg %p194
      %p391 = pneg %p191
      %p392 = scmp.lt.s32.totalorder %s25, 0
      %s393 = scalar_select %p392, %s25, 0
      %s394 = smul.addr %s393, 8
      %s395 = scalar_lea.vmem %s6, %s394
      %p396 = pneg %p220
      %p397 = pneg %p217
      %p398 = pneg %p248
      %p399 = pneg %p245
      %p400 = scmp.lt.s32.totalorder %s23, 1
      %s401 = scalar_select %p400, %s23, 1
      %p402 = scmp.lt.s32.totalorder %s24, 0
      %s403 = scalar_select %p402, %s24, 0
      %s404 = sadd.s32 %s403, %s401
      %s405 = smul.addr %s404, 4
      %s406 = scalar_lea.vmem %s7, %s405
      %s407 = smul.u32 8, %s24
      %p408 = scmp.lt.s32.totalorder %s23, 1
      %s409 = scalar_select %p408, %s23, 1
      %p410 = scmp.lt.s32.totalorder %s407, 7
      %s411 = scalar_select %p410, %s407, 7
      %s412 = smul.addr %s409, 8
      %s413 = sadd.s32 %s411, %s412
      %s414 = smul.addr %s413, 2
      %s415 = scalar_lea.vmem %s0, %s414
      %s416 = smul.u32 8, %s24
      %s417 = smul.u32 8, %s25
      %p418 = scmp.lt.s32.totalorder %s23, 1
      %s419 = scalar_select %p418, %s23, 1
      %p420 = scmp.lt.s32.totalorder %s417, 7
      %s421 = scalar_select %p420, %s417, 7
      %s422 = smul.addr %s419, 8
      %s423 = sadd.s32 %s421, %s422
      %s424 = smul.addr %s423, 2
      %s425 = scalar_lea.vmem %s1, %s424
      %s426 = smul.u32 8, %s25
      %s427 = smul.u32 8, %s25
      %p428 = scmp.lt.s32.totalorder %s23, 1
      %s429 = scalar_select %p428, %s23, 1
      %p430 = scmp.lt.s32.totalorder %s427, 7
      %s431 = scalar_select %p430, %s427, 7
      %s432 = smul.addr %s429, 8
      %s433 = sadd.s32 %s431, %s432
      %s434 = smul.addr %s433, 2
      %s435 = scalar_lea.vmem %s2, %s434
      %s436 = smul.u32 8, %s25
      %p437 = scmp.lt.s32.totalorder %s24, 0
      %s438 = scalar_select %p437, %s24, 0
      %s439 = smul.addr %s438, 8
      %s440 = scalar_lea.vmem %s3, %s439
      %p441 = scmp.lt.s32.totalorder %s24, 0
      %s442 = scalar_select %p441, %s24, 0
      %s443 = smul.addr %s442, 8
      %s444 = scalar_lea.vmem %s4, %s443
      %p445 = scmp.lt.s32.totalorder %s25, 0
      %s446 = scalar_select %p445, %s25, 0
      %s447 = smul.addr %s446, 8
      %s448 = scalar_lea.vmem %s5, %s447
      %p449 = scmp.lt.s32.totalorder %s25, 0
      %s450 = scalar_select %p449, %s25, 0
      %s451 = smul.addr %s450, 8
      %s452 = scalar_lea.vmem %s6, %s451
      %p453 = scmp.lt.s32.totalorder %s23, 1
      %s454 = scalar_select %p453, %s23, 1
      %p455 = scmp.lt.s32.totalorder %s24, 0
      %s456 = scalar_select %p455, %s24, 0
      %s457 = sadd.s32 %s456, %s454
      %s458 = smul.addr %s457, 4
      %s459 = scalar_lea.vmem %s7, %s458
      %p461 = scmp.eq.s32.totalorder %s25, 0
      // Predicated region
      $region49: #{transformer_forward.11} parent=47 // pred_check
        %p462 = pneg %p461
      $region50: #{transformer_forward.11} parent=47 // pred_check_branch
        %464 = sbr.rel (%p462) target = $region52
      $region51: #{transformer_forward.11} parent=47 // pred_region
        %vm465 = vcmask 7168
        %466 = vst.msk [vmem:[#allocation3] sm:$0xff] %vm465, -inf
        %467 = vst.msk [vmem:[#allocation3 + $0x8] sm:$0xff] %vm465, -inf
        %468 = vst.msk [vmem:[#allocation3 + $0x10] sm:$0xff] %vm465, -inf
        %469 = vst.msk [vmem:[#allocation3 + $0x18] sm:$0xff] %vm465, -inf
        %470 = vst.msk [vmem:[#allocation4] sm:$0xff] %vm465, 0.0
        %471 = vst.msk [vmem:[#allocation4 + $0x8] sm:$0xff] %vm465, 0.0
        %472 = vst.msk [vmem:[#allocation4 + $0x10] sm:$0xff] %vm465, 0.0
        %473 = vst.msk [vmem:[#allocation4 + $0x18] sm:$0xff] %vm465, 0.0
        %vm474 = vcmask 64512
        %475 = vst.msk [vmem:[#allocation5] sm:$0xff] %vm474, 0.0
        %476 = vst.msk [vmem:[#allocation5 + $0x8] sm:$0xff] %vm474, 0.0
        %477 = vst.msk [vmem:[#allocation5 + $0x10] sm:$0xff] %vm474, 0.0
        %478 = vst.msk [vmem:[#allocation5 + $0x18] sm:$0xff] %vm474, 0.0
        %v479 = vld [vmem:[%s415] sm:$0x3]
        %v480 = vld [vmem:[%s415 + $0x2] sm:$0x3]
        %v481 = vld [vmem:[%s415 + $0x4] sm:$0x3]
        %v482 = vld [vmem:[%s415 + $0x6] sm:$0x3]
        %v483 = vld [vmem:[%s415 + $0x8] sm:$0x3]
        %v484 = vld [vmem:[%s415 + $0xa] sm:$0x3]
        %v485 = vld [vmem:[%s415 + $0xc] sm:$0x3]
        %v486 = vld [vmem:[%s415 + $0xe] sm:$0x3]
        %v487 = vcombine.low %v479, %v481
        %v489 = vunpack.c.l.s4 1934713408
        %v490 = vunpack.c.0.s8 %v489
        %v491 = vlaneseq
        %v492 = vshrl.u32 %v491, 7
        %v493 = vsub.s32 %v490, %v492
        %v494 = vrot.slane %v487, %v493
        %v495 = vcombine.high %v494, 0
        %v496 = vcombine.low %v480, %v482
        %v498 = vunpack.c.l.s4 1934713408
        %v499 = vunpack.c.0.s8 %v498
        %v500 = vlaneseq
        %v501 = vshrl.u32 %v500, 7
        %v502 = vsub.s32 %v499, %v501
        %v503 = vrot.slane %v496, %v502
        %v504 = vcombine.high %v503, 0
        %v505 = vcombine.low %v483, %v485
        %v507 = vunpack.c.l.s4 1934713408
        %v508 = vunpack.c.0.s8 %v507
        %v509 = vlaneseq
        %v510 = vshrl.u32 %v509, 7
        %v511 = vsub.s32 %v508, %v510
        %v512 = vrot.slane %v505, %v511
        %v513 = vcombine.high %v512, 0
        %v514 = vcombine.low %v484, %v486
        %v516 = vunpack.c.l.s4 1934713408
        %v517 = vunpack.c.0.s8 %v516
        %v518 = vlaneseq
        %v519 = vshrl.u32 %v518, 7
        %v520 = vsub.s32 %v517, %v519
        %v521 = vrot.slane %v514, %v520
        %v522 = vcombine.high %v521, 0
        %v525 = vpack.i.b16 %v503, %v494
        %v527 = vshrl.u32 %v494, 16
        %v528 = vshrl.u32 %v503, 16
        %v529 = vpack.i.b16 %v528, %v527
        %v533 = vpack.i.b16 %v504, %v495
        %v535 = vshrl.u32 %v495, 16
        %v536 = vshrl.u32 %v504, 16
        %v537 = vpack.i.b16 %v536, %v535
        %v541 = vpack.i.b16 %v521, %v512
        %v543 = vshrl.u32 %v512, 16
        %v544 = vshrl.u32 %v521, 16
        %v545 = vpack.i.b16 %v544, %v543
        %v549 = vpack.i.b16 %v522, %v513
        %v551 = vshrl.u32 %v513, 16
        %v552 = vshrl.u32 %v522, 16
        %v553 = vpack.i.b16 %v552, %v551
        %v555 = vunpack.c.l.bf16 %v525
        %v556 = vunpack.c.l.bf16 %v541
        %v557 = vunpack.c.l.bf16 %v529
        %v558 = vunpack.c.l.bf16 %v545
        %v559 = vunpack.c.l.bf16 %v533
        %v560 = vunpack.c.l.bf16 %v549
        %v561 = vunpack.c.l.bf16 %v537
        %v562 = vunpack.c.l.bf16 %v553
        %v563 = vld [vmem:[%s440] sm:$0xff]
        %v564 = vld [vmem:[%s444] sm:$0xff]
        %v565 = vsub.f32 0.0, %v555
        %v566 = vsub.f32 0.0, %v556
        %v567 = vsub.f32 0.0, %v557
        %v568 = vsub.f32 0.0, %v558
        %v569 = vsub.f32 0.0, %v559
        %v570 = vsub.f32 0.0, %v560
        %v571 = vsub.f32 0.0, %v561
        %v572 = vsub.f32 0.0, %v562
        %v581 = vcombine.low %v565, %v566
        %v582 = vcombine.low %v567, %v568
        %v583 = vcombine.low %v569, %v570
        %v584 = vcombine.low %v571, %v572
        %585 = vrot.lane.b32.xlu0 %v581, 124
        %v586 = vpop.permute.xlu0 %585
        %587 = vrot.lane.b32.xlu0 %v582, 124
        %v588 = vpop.permute.xlu0 %587
        %589 = vrot.lane.b32.xlu0 %v583, 124
        %v590 = vpop.permute.xlu0 %589
        %591 = vrot.lane.b32.xlu0 %v584, 124
        %v592 = vpop.permute.xlu0 %591
        %v605 = vcombine.low %v555, %v556
        %v606 = vcombine.low %v557, %v558
        %v607 = vcombine.low %v559, %v560
        %v608 = vcombine.low %v561, %v562
        %609 = vrot.lane.b32.xlu0 %v605, 4
        %v610 = vpop.permute.xlu0 %609
        %611 = vrot.lane.b32.xlu0 %v606, 4
        %v612 = vpop.permute.xlu0 %611
        %613 = vrot.lane.b32.xlu0 %v607, 4
        %v614 = vpop.permute.xlu0 %613
        %615 = vrot.lane.b32.xlu0 %v608, 4
        %v616 = vpop.permute.xlu0 %615
        %vm621 = vcmask 31744
        %v622 = vsel %vm621, %v586, %v610
        %v623 = vsel %vm621, %v588, %v612
        %v624 = vsel %vm621, %v590, %v614
        %v625 = vsel %vm621, %v592, %v616
        %v627 = vcombine.high %v563, %v563
        %v629 = vmul.f32 %v555, %v563
        %v630 = vmul.f32 %v556, %v627
        %v631 = vmul.f32 %v557, %v563
        %v632 = vmul.f32 %v558, %v627
        %v633 = vmul.f32 %v559, %v563
        %v634 = vmul.f32 %v560, %v627
        %v635 = vmul.f32 %v561, %v563
        %v636 = vmul.f32 %v562, %v627
        %v637 = vmul.f32 %v622, %v564
        %v638 = vmul.f32 %v623, %v564
        %v639 = vmul.f32 %v624, %v564
        %v640 = vmul.f32 %v625, %v564
        %v645 = vcombine.high %v637, %v637
        %v646 = vcombine.high %v638, %v638
        %v647 = vcombine.high %v639, %v639
        %v648 = vcombine.high %v640, %v640
        %v653 = vadd.f32 %v629, %v637
        %v654 = vadd.f32 %v630, %v645
        %v655 = vadd.f32 %v631, %v638
        %v656 = vadd.f32 %v632, %v646
        %v657 = vadd.f32 %v633, %v639
        %v658 = vadd.f32 %v634, %v647
        %v659 = vadd.f32 %v635, %v640
        %v660 = vadd.f32 %v636, %v648
        %v661 = vmul.f32 %v653, 0.35355338
        %v662 = vmul.f32 %v654, 0.35355338
        %v663 = vmul.f32 %v655, 0.35355338
        %v664 = vmul.f32 %v656, 0.35355338
        %v665 = vmul.f32 %v657, 0.35355338
        %v666 = vmul.f32 %v658, 0.35355338
        %v667 = vmul.f32 %v659, 0.35355338
        %v668 = vmul.f32 %v660, 0.35355338
        %v677 = vcombine.low %v661, %v662
        %v678 = vcombine.low %v663, %v664
        %v679 = vcombine.low %v665, %v666
        %v680 = vcombine.low %v667, %v668
        %v685 = vpack.c.bf16 %v677, %v677
        %v686 = vpack.c.bf16 %v678, %v678
        %v687 = vpack.c.bf16 %v679, %v679
        %v688 = vpack.c.bf16 %v680, %v680
        %vm689 = vcmask 60416
        %690 = vst.msk [vmem:[#allocation2] sm:$0xf] %vm689, %v685
        %691 = vst.msk [vmem:[#allocation2 + $0x4] sm:$0xf] %vm689, %v686
        %692 = vst.msk [vmem:[#allocation2 + $0x8] sm:$0xf] %vm689, %v687
        %693 = vst.msk [vmem:[#allocation2 + $0xc] sm:$0xf] %vm689, %v688
      $region52: #{transformer_forward.11} parent=47 // pred_fallthru
        _
      %v694 = vld [vmem:[%s425] sm:$0x3]
      %v695 = vld [vmem:[%s425 + $0x2] sm:$0x3]
      %v696 = vld [vmem:[%s425 + $0x4] sm:$0x3]
      %v697 = vld [vmem:[%s425 + $0x6] sm:$0x3]
      %v698 = vld [vmem:[%s425 + $0x8] sm:$0x3]
      %v699 = vld [vmem:[%s425 + $0xa] sm:$0x3]
      %v700 = vld [vmem:[%s425 + $0xc] sm:$0x3]
      %v701 = vld [vmem:[%s425 + $0xe] sm:$0x3]
      %v702 = vcombine.low %v694, %v696
      %v704 = vunpack.c.l.s4 1934713408
      %v705 = vunpack.c.0.s8 %v704
      %v706 = vlaneseq
      %v707 = vshrl.u32 %v706, 7
      %v708 = vsub.s32 %v705, %v707
      %v709 = vrot.slane %v702, %v708
      %v710 = vcombine.high %v709, 0
      %v711 = vcombine.low %v695, %v697
      %v713 = vunpack.c.l.s4 1934713408
      %v714 = vunpack.c.0.s8 %v713
      %v715 = vlaneseq
      %v716 = vshrl.u32 %v715, 7
      %v717 = vsub.s32 %v714, %v716
      %v718 = vrot.slane %v711, %v717
      %v719 = vcombine.high %v718, 0
      %v720 = vcombine.low %v698, %v700
      %v722 = vunpack.c.l.s4 1934713408
      %v723 = vunpack.c.0.s8 %v722
      %v724 = vlaneseq
      %v725 = vshrl.u32 %v724, 7
      %v726 = vsub.s32 %v723, %v725
      %v727 = vrot.slane %v720, %v726
      %v728 = vcombine.high %v727, 0
      %v729 = vcombine.low %v699, %v701
      %v731 = vunpack.c.l.s4 1934713408
      %v732 = vunpack.c.0.s8 %v731
      %v733 = vlaneseq
      %v734 = vshrl.u32 %v733, 7
      %v735 = vsub.s32 %v732, %v734
      %v736 = vrot.slane %v729, %v735
      %v737 = vcombine.high %v736, 0
      %v740 = vpack.i.b16 %v718, %v709
      %v742 = vshrl.u32 %v709, 16
      %v743 = vshrl.u32 %v718, 16
      %v744 = vpack.i.b16 %v743, %v742
      %v748 = vpack.i.b16 %v719, %v710
      %v750 = vshrl.u32 %v710, 16
      %v751 = vshrl.u32 %v719, 16
      %v752 = vpack.i.b16 %v751, %v750
      %v756 = vpack.i.b16 %v736, %v727
      %v758 = vshrl.u32 %v727, 16
      %v759 = vshrl.u32 %v736, 16
      %v760 = vpack.i.b16 %v759, %v758
      %v764 = vpack.i.b16 %v737, %v728
      %v766 = vshrl.u32 %v728, 16
      %v767 = vshrl.u32 %v737, 16
      %v768 = vpack.i.b16 %v767, %v766
      %v770 = vunpack.c.l.bf16 %v740
      %v771 = vunpack.c.l.bf16 %v756
      %v772 = vunpack.c.l.bf16 %v744
      %v773 = vunpack.c.l.bf16 %v760
      %v774 = vunpack.c.l.bf16 %v748
      %v775 = vunpack.c.l.bf16 %v764
      %v776 = vunpack.c.l.bf16 %v752
      %v777 = vunpack.c.l.bf16 %v768
      %v778 = vld [vmem:[%s435] sm:$0x3]
      %v779 = vld [vmem:[%s435 + $0x2] sm:$0x3]
      %v780 = vld [vmem:[%s435 + $0x4] sm:$0x3]
      %v781 = vld [vmem:[%s435 + $0x6] sm:$0x3]
      %v782 = vld [vmem:[%s435 + $0x8] sm:$0x3]
      %v783 = vld [vmem:[%s435 + $0xa] sm:$0x3]
      %v784 = vld [vmem:[%s435 + $0xc] sm:$0x3]
      %v785 = vld [vmem:[%s435 + $0xe] sm:$0x3]
      %v786 = vcombine.low %v778, %v780
      %v788 = vunpack.c.l.s4 1934713408
      %v789 = vunpack.c.0.s8 %v788
      %v790 = vlaneseq
      %v791 = vshrl.u32 %v790, 7
      %v792 = vsub.s32 %v789, %v791
      %v793 = vrot.slane %v786, %v792
      %v794 = vcombine.high %v793, 0
      %v795 = vcombine.low %v779, %v781
      %v797 = vunpack.c.l.s4 1934713408
      %v798 = vunpack.c.0.s8 %v797
      %v799 = vlaneseq
      %v800 = vshrl.u32 %v799, 7
      %v801 = vsub.s32 %v798, %v800
      %v802 = vrot.slane %v795, %v801
      %v803 = vcombine.high %v802, 0
      %v804 = vcombine.low %v782, %v784
      %v806 = vunpack.c.l.s4 1934713408
      %v807 = vunpack.c.0.s8 %v806
      %v808 = vlaneseq
      %v809 = vshrl.u32 %v808, 7
      %v810 = vsub.s32 %v807, %v809
      %v811 = vrot.slane %v804, %v810
      %v812 = vcombine.high %v811, 0
      %v813 = vcombine.low %v783, %v785
      %v815 = vunpack.c.l.s4 1934713408
      %v816 = vunpack.c.0.s8 %v815
      %v817 = vlaneseq
      %v818 = vshrl.u32 %v817, 7
      %v819 = vsub.s32 %v816, %v818
      %v820 = vrot.slane %v813, %v819
      %v821 = vcombine.high %v820, 0
      %v824 = vpack.i.b16 %v802, %v793
      %v825 = vshrl.u32 %v793, 16
      %v826 = vshrl.u32 %v802, 16
      %v827 = vpack.i.b16 %v826, %v825
      %v830 = vpack.i.b16 %v803, %v794
      %v831 = vshrl.u32 %v794, 16
      %v832 = vshrl.u32 %v803, 16
      %v833 = vpack.i.b16 %v832, %v831
      %v836 = vpack.i.b16 %v820, %v811
      %v837 = vshrl.u32 %v811, 16
      %v838 = vshrl.u32 %v820, 16
      %v839 = vpack.i.b16 %v838, %v837
      %v842 = vpack.i.b16 %v821, %v812
      %v843 = vshrl.u32 %v812, 16
      %v844 = vshrl.u32 %v821, 16
      %v845 = vpack.i.b16 %v844, %v843
      %v846 = vld [vmem:[%s448] sm:$0xff]
      %v847 = vld [vmem:[%s452] sm:$0xff]
      %v848 = vsub.f32 0.0, %v770
      %v849 = vsub.f32 0.0, %v771
      %v850 = vsub.f32 0.0, %v772
      %v851 = vsub.f32 0.0, %v773
      %v852 = vsub.f32 0.0, %v774
      %v853 = vsub.f32 0.0, %v775
      %v854 = vsub.f32 0.0, %v776
      %v855 = vsub.f32 0.0, %v777
      %v864 = vcombine.low %v848, %v849
      %v865 = vcombine.low %v850, %v851
      %v866 = vcombine.low %v852, %v853
      %v867 = vcombine.low %v854, %v855
      %868 = vrot.lane.b32.xlu0 %v864, 124
      %v869 = vpop.permute.xlu0 %868
      %870 = vrot.lane.b32.xlu0 %v865, 124
      %v871 = vpop.permute.xlu0 %870
      %872 = vrot.lane.b32.xlu0 %v866, 124
      %v873 = vpop.permute.xlu0 %872
      %874 = vrot.lane.b32.xlu0 %v867, 124
      %v875 = vpop.permute.xlu0 %874
      %v888 = vcombine.low %v770, %v771
      %v889 = vcombine.low %v772, %v773
      %v890 = vcombine.low %v774, %v775
      %v891 = vcombine.low %v776, %v777
      %892 = vrot.lane.b32.xlu0 %v888, 4
      %v893 = vpop.permute.xlu0 %892
      %894 = vrot.lane.b32.xlu0 %v889, 4
      %v895 = vpop.permute.xlu0 %894
      %896 = vrot.lane.b32.xlu0 %v890, 4
      %v897 = vpop.permute.xlu0 %896
      %898 = vrot.lane.b32.xlu0 %v891, 4
      %v899 = vpop.permute.xlu0 %898
      %vm904 = vcmask 31744
      %v905 = vsel %vm904, %v869, %v893
      %v906 = vsel %vm904, %v871, %v895
      %v907 = vsel %vm904, %v873, %v897
      %v908 = vsel %vm904, %v875, %v899
      %v910 = vcombine.high %v846, %v846
      %v912 = vmul.f32 %v770, %v846
      %v913 = vmul.f32 %v771, %v910
      %v914 = vmul.f32 %v772, %v846
      %v915 = vmul.f32 %v773, %v910
      %v916 = vmul.f32 %v774, %v846
      %v917 = vmul.f32 %v775, %v910
      %v918 = vmul.f32 %v776, %v846
      %v919 = vmul.f32 %v777, %v910
      %v920 = vmul.f32 %v905, %v847
      %v921 = vmul.f32 %v906, %v847
      %v922 = vmul.f32 %v907, %v847
      %v923 = vmul.f32 %v908, %v847
      %v928 = vcombine.high %v920, %v920
      %v929 = vcombine.high %v921, %v921
      %v930 = vcombine.high %v922, %v922
      %v931 = vcombine.high %v923, %v923
      %v936 = vadd.f32 %v912, %v920
      %v937 = vadd.f32 %v913, %v928
      %v938 = vadd.f32 %v914, %v921
      %v939 = vadd.f32 %v915, %v929
      %v940 = vadd.f32 %v916, %v922
      %v941 = vadd.f32 %v917, %v930
      %v942 = vadd.f32 %v918, %v923
      %v943 = vadd.f32 %v919, %v931
      %v952 = vcombine.low %v936, %v937
      %v953 = vcombine.low %v938, %v939
      %v954 = vcombine.low %v940, %v941
      %v955 = vcombine.low %v942, %v943
      %v960 = vpack.c.bf16 %v952, %v952
      %v961 = vpack.c.bf16 %v953, %v953
      %v962 = vpack.c.bf16 %v954, %v954
      %v963 = vpack.c.bf16 %v955, %v955
      %v964 = vld [vmem:[#allocation2] sm:$0xf]
      %v965 = vld [vmem:[#allocation2 + $0x4] sm:$0xf]
      %v966 = vld [vmem:[#allocation2 + $0x8] sm:$0xf]
      %v967 = vld [vmem:[#allocation2 + $0xc] sm:$0xf]
      %vm968 = vcmask 64512
      %v970 = vsel %vm968, %v964, 0
      %v973 = vsel %vm968, %v960, 0
      %975 = vmatprep.subr.bf16.mxu0 0
      %976 = vmatpush1.bf16.xpose.msra.mxu0 0
      %977 = vmatprep.subr.bf16.mxu0 0
      %978 = vmatpush1.bf16.xpose.msra.mxu0 0
      %979 = vmatprep.subr.bf16.mxu0 0
      %980 = vmatpush1.bf16.xpose.msra.mxu0 0
      %981 = vmatprep.subr.bf16.mxu0 0
      %982 = vmatpush1.bf16.xpose.msra.mxu0 0
      %983 = vmatprep.subr.bf16.mxu0 0
      %984 = vmatpush1.bf16.xpose.msra.mxu0 0
      %985 = vmatprep.subr.bf16.mxu0 0
      %986 = vmatpush1.bf16.xpose.msra.mxu0 0
      %987 = vmatprep.subr.bf16.mxu0 0
      %988 = vmatpush1.bf16.xpose.msra.mxu0 0
      %989 = vmatprep.subr.bf16.mxu0 0
      %990 = vmatpush1.bf16.xpose.msra.mxu0 %v973
      %991 = vmatprep.subr.bf16.mxu0 0
      %992 = vmatpush2.bf16.xpose.msra.mxu0 0
      %993 = vmatprep.subr.bf16.mxu0 0
      %994 = vmatpush2.bf16.xpose.msra.mxu0 0
      %995 = vmatprep.subr.bf16.mxu0 0
      %996 = vmatpush2.bf16.xpose.msra.mxu0 0
      %997 = vmatprep.subr.bf16.mxu0 0
      %998 = vmatpush2.bf16.xpose.msra.mxu0 0
      %999 = vmatprep.subr.bf16.mxu0 0
      %1000 = vmatpush2.bf16.xpose.msra.mxu0 0
      %1001 = vmatprep.subr.bf16.mxu0 0
      %1002 = vmatpush2.bf16.xpose.msra.mxu0 0
      %1003 = vmatprep.subr.bf16.mxu0 0
      %1004 = vmatpush2.bf16.xpose.msra.mxu0 0
      %1005 = vmatprep.subr.bf16.mxu0 0
      %1006 = vmatpush2.bf16.xpose.msra.mxu0 0
      %1007 = vmatprep.mubr.bf16.mxu0 0
      %1008 = vmatmul.mubr.bf16.gmra.mxu0 %v970
      %v1009 = vpop.f32.mrf.mxu0
      %v1010 = vadd.f32 0.0, %v1009
      %v1011 = vpop.f32.mrf.mxu0
      %v1012 = vpop.f32.mrf.mxu0
      %v1013 = vpop.f32.mrf.mxu0
      %1014 = vdwg.mxu0
      %v1016 = vsel %vm968, %v965, 0
      %v1019 = vsel %vm968, %v961, 0
      %1021 = vmatprep.subr.bf16.mxu0 0
      %1022 = vmatpush1.bf16.xpose.msra.mxu0 0
      %1023 = vmatprep.subr.bf16.mxu0 0
      %1024 = vmatpush1.bf16.xpose.msra.mxu0 0
      %1025 = vmatprep.subr.bf16.mxu0 0
      %1026 = vmatpush1.bf16.xpose.msra.mxu0 0
      %1027 = vmatprep.subr.bf16.mxu0 0
      %1028 = vmatpush1.bf16.xpose.msra.mxu0 0
      %1029 = vmatprep.subr.bf16.mxu0 0
      %1030 = vmatpush1.bf16.xpose.msra.mxu0 0
      %1031 = vmatprep.subr.bf16.mxu0 0
      %1032 = vmatpush1.bf16.xpose.msra.mxu0 0
      %1033 = vmatprep.subr.bf16.mxu0 0
      %1034 = vmatpush1.bf16.xpose.msra.mxu0 0
      %1035 = vmatprep.subr.bf16.mxu0 0
      %1036 = vmatpush1.bf16.xpose.msra.mxu0 %v1019
      %1037 = vmatprep.subr.bf16.mxu0 0
      %1038 = vmatpush2.bf16.xpose.msra.mxu0 0
      %1039 = vmatprep.subr.bf16.mxu0 0
      %1040 = vmatpush2.bf16.xpose.msra.mxu0 0
      %1041 = vmatprep.subr.bf16.mxu0 0
      %1042 = vmatpush2.bf16.xpose.msra.mxu0 0
      %1043 = vmatprep.subr.bf16.mxu0 0
      %1044 = vmatpush2.bf16.xpose.msra.mxu0 0
      %1045 = vmatprep.subr.bf16.mxu0 0
      %1046 = vmatpush2.bf16.xpose.msra.mxu0 0
      %1047 = vmatprep.subr.bf16.mxu0 0
      %1048 = vmatpush2.bf16.xpose.msra.mxu0 0
      %1049 = vmatprep.subr.bf16.mxu0 0
      %1050 = vmatpush2.bf16.xpose.msra.mxu0 0
      %1051 = vmatprep.subr.bf16.mxu0 0
      %1052 = vmatpush2.bf16.xpose.msra.mxu0 0
      %1053 = vmatprep.mubr.bf16.mxu0 0
      %1054 = vmatmul.mubr.bf16.gmra.mxu0 %v1016
      %v1055 = vpop.f32.mrf.mxu0
      %v1056 = vadd.f32 0.0, %v1055
      %v1057 = vpop.f32.mrf.mxu0
      %v1058 = vpop.f32.mrf.mxu0
      %v1059 = vpop.f32.mrf.mxu0
      %1060 = vdwg.mxu0
      %v1062 = vsel %vm968, %v966, 0
      %v1065 = vsel %vm968, %v962, 0
      %1067 = vmatprep.subr.bf16.mxu0 0
      %1068 = vmatpush1.bf16.xpose.msra.mxu0 0
      %1069 = vmatprep.subr.bf16.mxu0 0
      %1070 = vmatpush1.bf16.xpose.msra.mxu0 0
      %1071 = vmatprep.subr.bf16.mxu0 0
      %1072 = vmatpush1.bf16.xpose.msra.mxu0 0
      %1073 = vmatprep.subr.bf16.mxu0 0
      %1074 = vmatpush1.bf16.xpose.msra.mxu0 0
      %1075 = vmatprep.subr.bf16.mxu0 0
      %1076 = vmatpush1.bf16.xpose.msra.mxu0 0
      %1077 = vmatprep.subr.bf16.mxu0 0
      %1078 = vmatpush1.bf16.xpose.msra.mxu0 0
      %1079 = vmatprep.subr.bf16.mxu0 0
      %1080 = vmatpush1.bf16.xpose.msra.mxu0 0
      %1081 = vmatprep.subr.bf16.mxu0 0
      %1082 = vmatpush1.bf16.xpose.msra.mxu0 %v1065
      %1083 = vmatprep.subr.bf16.mxu0 0
      %1084 = vmatpush2.bf16.xpose.msra.mxu0 0
      %1085 = vmatprep.subr.bf16.mxu0 0
      %1086 = vmatpush2.bf16.xpose.msra.mxu0 0
      %1087 = vmatprep.subr.bf16.mxu0 0
      %1088 = vmatpush2.bf16.xpose.msra.mxu0 0
      %1089 = vmatprep.subr.bf16.mxu0 0
      %1090 = vmatpush2.bf16.xpose.msra.mxu0 0
      %1091 = vmatprep.subr.bf16.mxu0 0
      %1092 = vmatpush2.bf16.xpose.msra.mxu0 0
      %1093 = vmatprep.subr.bf16.mxu0 0
      %1094 = vmatpush2.bf16.xpose.msra.mxu0 0
      %1095 = vmatprep.subr.bf16.mxu0 0
      %1096 = vmatpush2.bf16.xpose.msra.mxu0 0
      %1097 = vmatprep.subr.bf16.mxu0 0
      %1098 = vmatpush2.bf16.xpose.msra.mxu0 0
      %1099 = vmatprep.mubr.bf16.mxu0 0
      %1100 = vmatmul.mubr.bf16.gmra.mxu0 %v1062
      %v1101 = vpop.f32.mrf.mxu0
      %v1102 = vadd.f32 0.0, %v1101
      %v1103 = vpop.f32.mrf.mxu0
      %v1104 = vpop.f32.mrf.mxu0
      %v1105 = vpop.f32.mrf.mxu0
      %1106 = vdwg.mxu0
      %v1108 = vsel %vm968, %v967, 0
      %v1111 = vsel %vm968, %v963, 0
      %1113 = vmatprep.subr.bf16.mxu0 0
      %1114 = vmatpush1.bf16.xpose.msra.mxu0 0
      %1115 = vmatprep.subr.bf16.mxu0 0
      %1116 = vmatpush1.bf16.xpose.msra.mxu0 0
      %1117 = vmatprep.subr.bf16.mxu0 0
      %1118 = vmatpush1.bf16.xpose.msra.mxu0 0
      %1119 = vmatprep.subr.bf16.mxu0 0
      %1120 = vmatpush1.bf16.xpose.msra.mxu0 0
      %1121 = vmatprep.subr.bf16.mxu0 0
      %1122 = vmatpush1.bf16.xpose.msra.mxu0 0
      %1123 = vmatprep.subr.bf16.mxu0 0
      %1124 = vmatpush1.bf16.xpose.msra.mxu0 0
      %1125 = vmatprep.subr.bf16.mxu0 0
      %1126 = vmatpush1.bf16.xpose.msra.mxu0 0
      %1127 = vmatprep.subr.bf16.mxu0 0
      %1128 = vmatpush1.bf16.xpose.msra.mxu0 %v1111
      %1129 = vmatprep.subr.bf16.mxu0 0
      %1130 = vmatpush2.bf16.xpose.msra.mxu0 0
      %1131 = vmatprep.subr.bf16.mxu0 0
      %1132 = vmatpush2.bf16.xpose.msra.mxu0 0
      %1133 = vmatprep.subr.bf16.mxu0 0
      %1134 = vmatpush2.bf16.xpose.msra.mxu0 0
      %1135 = vmatprep.subr.bf16.mxu0 0
      %1136 = vmatpush2.bf16.xpose.msra.mxu0 0
      %1137 = vmatprep.subr.bf16.mxu0 0
      %1138 = vmatpush2.bf16.xpose.msra.mxu0 0
      %1139 = vmatprep.subr.bf16.mxu0 0
      %1140 = vmatpush2.bf16.xpose.msra.mxu0 0
      %1141 = vmatprep.subr.bf16.mxu0 0
      %1142 = vmatpush2.bf16.xpose.msra.mxu0 0
      %1143 = vmatprep.subr.bf16.mxu0 0
      %1144 = vmatpush2.bf16.xpose.msra.mxu0 0
      %1145 = vmatprep.mubr.bf16.mxu0 0
      %1146 = vmatmul.mubr.bf16.gmra.mxu0 %v1108
      %v1147 = vpop.f32.mrf.mxu0
      %v1148 = vadd.f32 0.0, %v1147
      %v1149 = vpop.f32.mrf.mxu0
      %v1150 = vpop.f32.mrf.mxu0
      %v1151 = vpop.f32.mrf.mxu0
      %1152 = vdwg.mxu0
      %v1153 = vld [vmem:[#allocation3] sm:$0xff]
      %v1154 = vld [vmem:[#allocation3 + $0x8] sm:$0xff]
      %v1155 = vld [vmem:[#allocation3 + $0x10] sm:$0xff]
      %v1156 = vld [vmem:[#allocation3 + $0x18] sm:$0xff]
      %v1157 = vsel %vm968, %v1010, -inf
      %1158 = vmax.xlane.f32.xlu0 %v1157
      %v1159 = vpop.xlane.xlu0 %1158
      %v1160 = vsel %vm968, %v1056, -inf
      %1161 = vmax.xlane.f32.xlu0 %v1160
      %v1162 = vpop.xlane.xlu0 %1161
      %v1163 = vsel %vm968, %v1102, -inf
      %1164 = vmax.xlane.f32.xlu0 %v1163
      %v1165 = vpop.xlane.xlu0 %1164
      %v1166 = vsel %vm968, %v1148, -inf
      %1167 = vmax.xlane.f32.xlu0 %v1166
      %v1168 = vpop.xlane.xlu0 %1167
      %v1169 = vmax.f32 %v1153, %v1159
      %v1170 = vmax.f32 %v1154, %v1162
      %v1171 = vmax.f32 %v1155, %v1165
      %v1172 = vmax.f32 %v1156, %v1168
      %v1173 = vsub.f32 %v1153, %v1169
      %v1174 = vsub.f32 %v1154, %v1170
      %v1175 = vsub.f32 %v1155, %v1171
      %v1176 = vsub.f32 %v1156, %v1172
      %v1177 = vmul.f32 %v1173, 1.442695
      %v1178 = vpow.pop %v1177
      %v1179 = vmul.f32 %v1174, 1.442695
      %v1180 = vpow.pop %v1179
      %v1181 = vmul.f32 %v1175, 1.442695
      %v1182 = vpow.pop %v1181
      %v1183 = vmul.f32 %v1176, 1.442695
      %v1184 = vpow.pop %v1183
      %1186 = vset.pattern.permute.xlu0 0
      %1187 = vperm.xlu0 %1186, %v1169
      %v1188 = vpop.permute.xlu0 %1187
      %1191 = vset.pattern.permute.xlu0 0
      %1192 = vperm.xlu0 %1191, %v1170
      %v1193 = vpop.permute.xlu0 %1192
      %1196 = vset.pattern.permute.xlu0 0
      %1197 = vperm.xlu0 %1196, %v1171
      %v1198 = vpop.permute.xlu0 %1197
      %1201 = vset.pattern.permute.xlu0 0
      %1202 = vperm.xlu0 %1201, %v1172
      %v1203 = vpop.permute.xlu0 %1202
      %v1205 = vsub.f32 %v1010, %v1188
      %v1206 = vsub.f32 %v1056, %v1193
      %v1207 = vsub.f32 %v1102, %v1198
      %v1208 = vsub.f32 %v1148, %v1203
      %v1209 = vmul.f32 %v1205, 1.442695
      %v1210 = vpow.pop %v1209
      %v1211 = vmul.f32 %v1206, 1.442695
      %v1212 = vpow.pop %v1211
      %v1213 = vmul.f32 %v1207, 1.442695
      %v1214 = vpow.pop %v1213
      %v1215 = vmul.f32 %v1208, 1.442695
      %v1216 = vpow.pop %v1215
      %v1217 = vld [vmem:[#allocation4] sm:$0xff]
      %v1218 = vld [vmem:[#allocation4 + $0x8] sm:$0xff]
      %v1219 = vld [vmem:[#allocation4 + $0x10] sm:$0xff]
      %v1220 = vld [vmem:[#allocation4 + $0x18] sm:$0xff]
      %v1221 = vmul.f32 %v1178, %v1217
      %v1222 = vmul.f32 %v1180, %v1218
      %v1223 = vmul.f32 %v1182, %v1219
      %v1224 = vmul.f32 %v1184, %v1220
      %v1225 = vsel %vm968, %v1210, 0.0
      %1226 = vadd.xlane.f32.xlu0 %v1225
      %v1227 = vpop.xlane.xlu0 %1226
      %v1228 = vsel %vm968, %v1212, 0.0
      %1229 = vadd.xlane.f32.xlu0 %v1228
      %v1230 = vpop.xlane.xlu0 %1229
      %v1231 = vsel %vm968, %v1214, 0.0
      %1232 = vadd.xlane.f32.xlu0 %v1231
      %v1233 = vpop.xlane.xlu0 %1232
      %v1234 = vsel %vm968, %v1216, 0.0
      %1235 = vadd.xlane.f32.xlu0 %v1234
      %v1236 = vpop.xlane.xlu0 %1235
      %v1237 = vadd.f32 %v1221, %v1227
      %v1238 = vadd.f32 %v1222, %v1230
      %v1239 = vadd.f32 %v1223, %v1233
      %v1240 = vadd.f32 %v1224, %v1236
      %vm1241 = vcmask 7168
      %1242 = vst.msk [vmem:[#allocation4] sm:$0xff] %vm1241, %v1237
      %1243 = vst.msk [vmem:[#allocation4 + $0x8] sm:$0xff] %vm1241, %v1238
      %1244 = vst.msk [vmem:[#allocation4 + $0x10] sm:$0xff] %vm1241, %v1239
      %1245 = vst.msk [vmem:[#allocation4 + $0x18] sm:$0xff] %vm1241, %v1240
      %v1246 = vld [vmem:[#allocation5] sm:$0xff]
      %v1247 = vld [vmem:[#allocation5 + $0x8] sm:$0xff]
      %v1248 = vld [vmem:[#allocation5 + $0x10] sm:$0xff]
      %v1249 = vld [vmem:[#allocation5 + $0x18] sm:$0xff]
      %1251 = vset.pattern.permute.xlu0 0
      %1252 = vperm.xlu0 %1251, %v1178
      %v1253 = vpop.permute.xlu0 %1252
      %1256 = vset.pattern.permute.xlu0 0
      %1257 = vperm.xlu0 %1256, %v1180
      %v1258 = vpop.permute.xlu0 %1257
      %1261 = vset.pattern.permute.xlu0 0
      %1262 = vperm.xlu0 %1261, %v1182
      %v1263 = vpop.permute.xlu0 %1262
      %1266 = vset.pattern.permute.xlu0 0
      %1267 = vperm.xlu0 %1266, %v1184
      %v1268 = vpop.permute.xlu0 %1267
      %v1270 = vmul.f32 %v1253, %v1246
      %v1271 = vmul.f32 %v1258, %v1247
      %v1272 = vmul.f32 %v1263, %v1248
      %v1273 = vmul.f32 %v1268, %v1249
      %v1274 = vpack.c.bf16 %v1210, %v1210
      %v1275 = vpack.c.bf16 %v1212, %v1212
      %v1276 = vpack.c.bf16 %v1214, %v1214
      %v1277 = vpack.c.bf16 %v1216, %v1216
      %v1278 = vcombine.low %v824, %v836
      %v1280 = vunpack.c.l.s4 1983009808
      %v1281 = vunpack.c.0.s8 %v1280
      %v1282 = vlaneseq
      %v1283 = vshrl.u32 %v1282, 7
      %v1284 = vsub.s32 %v1281, %v1283
      %v1285 = vrot.slane %v1278, %v1284
      %v1287 = vsel %vm968, %v1274, 0
      %vm1289 = vcmask 1043456
      %v1291 = vsel %vm1289, %v1285, 0
      %1293 = vmatprep.subr.bf16.mxu0 0
      %1294 = vmatpush1.bf16.msra.mxu0 0
      %1295 = vmatprep.subr.bf16.mxu0 0
      %1296 = vmatpush1.bf16.msra.mxu0 0
      %1297 = vmatprep.subr.bf16.mxu0 0
      %1298 = vmatpush1.bf16.msra.mxu0 0
      %1299 = vmatprep.subr.bf16.mxu0 0
      %1300 = vmatpush1.bf16.msra.mxu0 0
      %1301 = vmatprep.subr.bf16.mxu0 0
      %1302 = vmatpush1.bf16.msra.mxu0 0
      %1303 = vmatprep.subr.bf16.mxu0 0
      %1304 = vmatpush1.bf16.msra.mxu0 0
      %1305 = vmatprep.subr.bf16.mxu0 0
      %1306 = vmatpush1.bf16.msra.mxu0 0
      %1307 = vmatprep.subr.bf16.mxu0 0
      %1308 = vmatpush1.bf16.msra.mxu0 %v1291
      %1309 = vmatprep.subr.bf16.mxu0 0
      %1310 = vmatpush2.bf16.msra.mxu0 0
      %1311 = vmatprep.subr.bf16.mxu0 0
      %1312 = vmatpush2.bf16.msra.mxu0 0
      %1313 = vmatprep.subr.bf16.mxu0 0
      %1314 = vmatpush2.bf16.msra.mxu0 0
      %1315 = vmatprep.subr.bf16.mxu0 0
      %1316 = vmatpush2.bf16.msra.mxu0 0
      %1317 = vmatprep.subr.bf16.mxu0 0
      %1318 = vmatpush2.bf16.msra.mxu0 0
      %1319 = vmatprep.subr.bf16.mxu0 0
      %1320 = vmatpush2.bf16.msra.mxu0 0
      %1321 = vmatprep.subr.bf16.mxu0 0
      %1322 = vmatpush2.bf16.msra.mxu0 0
      %1323 = vmatprep.subr.bf16.mxu0 0
      %1324 = vmatpush2.bf16.msra.mxu0 0
      %1325 = vmatprep.mubr.bf16.mxu0 0
      %1326 = vmatmul.mubr.bf16.gmra.mxu0 %v1287
      %v1327 = vpop.f32.mrf.mxu0
      %v1328 = vadd.f32 0.0, %v1327
      %v1329 = vpop.f32.mrf.mxu0
      %v1330 = vpop.f32.mrf.mxu0
      %v1331 = vpop.f32.mrf.mxu0
      %1332 = vdwg.mxu0
      %v1333 = vcombine.low %v827, %v839
      %v1335 = vunpack.c.l.s4 1983009808
      %v1336 = vunpack.c.0.s8 %v1335
      %v1337 = vlaneseq
      %v1338 = vshrl.u32 %v1337, 7
      %v1339 = vsub.s32 %v1336, %v1338
      %v1340 = vrot.slane %v1333, %v1339
      %v1342 = vsel %vm968, %v1275, 0
      %v1345 = vsel %vm1289, %v1340, 0
      %1347 = vmatprep.subr.bf16.mxu0 0
      %1348 = vmatpush1.bf16.msra.mxu0 0
      %1349 = vmatprep.subr.bf16.mxu0 0
      %1350 = vmatpush1.bf16.msra.mxu0 0
      %1351 = vmatprep.subr.bf16.mxu0 0
      %1352 = vmatpush1.bf16.msra.mxu0 0
      %1353 = vmatprep.subr.bf16.mxu0 0
      %1354 = vmatpush1.bf16.msra.mxu0 0
      %1355 = vmatprep.subr.bf16.mxu0 0
      %1356 = vmatpush1.bf16.msra.mxu0 0
      %1357 = vmatprep.subr.bf16.mxu0 0
      %1358 = vmatpush1.bf16.msra.mxu0 0
      %1359 = vmatprep.subr.bf16.mxu0 0
      %1360 = vmatpush1.bf16.msra.mxu0 0
      %1361 = vmatprep.subr.bf16.mxu0 0
      %1362 = vmatpush1.bf16.msra.mxu0 %v1345
      %1363 = vmatprep.subr.bf16.mxu0 0
      %1364 = vmatpush2.bf16.msra.mxu0 0
      %1365 = vmatprep.subr.bf16.mxu0 0
      %1366 = vmatpush2.bf16.msra.mxu0 0
      %1367 = vmatprep.subr.bf16.mxu0 0
      %1368 = vmatpush2.bf16.msra.mxu0 0
      %1369 = vmatprep.subr.bf16.mxu0 0
      %1370 = vmatpush2.bf16.msra.mxu0 0
      %1371 = vmatprep.subr.bf16.mxu0 0
      %1372 = vmatpush2.bf16.msra.mxu0 0
      %1373 = vmatprep.subr.bf16.mxu0 0
      %1374 = vmatpush2.bf16.msra.mxu0 0
      %1375 = vmatprep.subr.bf16.mxu0 0
      %1376 = vmatpush2.bf16.msra.mxu0 0
      %1377 = vmatprep.subr.bf16.mxu0 0
      %1378 = vmatpush2.bf16.msra.mxu0 0
      %1379 = vmatprep.mubr.bf16.mxu0 0
      %1380 = vmatmul.mubr.bf16.gmra.mxu0 %v1342
      %v1381 = vpop.f32.mrf.mxu0
      %v1382 = vadd.f32 0.0, %v1381
      %v1383 = vpop.f32.mrf.mxu0
      %v1384 = vpop.f32.mrf.mxu0
      %v1385 = vpop.f32.mrf.mxu0
      %1386 = vdwg.mxu0
      %v1387 = vcombine.low %v830, %v842
      %v1389 = vunpack.c.l.s4 1983009808
      %v1390 = vunpack.c.0.s8 %v1389
      %v1391 = vlaneseq
      %v1392 = vshrl.u32 %v1391, 7
      %v1393 = vsub.s32 %v1390, %v1392
      %v1394 = vrot.slane %v1387, %v1393
      %v1396 = vsel %vm968, %v1276, 0
      %v1399 = vsel %vm1289, %v1394, 0
      %1401 = vmatprep.subr.bf16.mxu0 0
      %1402 = vmatpush1.bf16.msra.mxu0 0
      %1403 = vmatprep.subr.bf16.mxu0 0
      %1404 = vmatpush1.bf16.msra.mxu0 0
      %1405 = vmatprep.subr.bf16.mxu0 0
      %1406 = vmatpush1.bf16.msra.mxu0 0
      %1407 = vmatprep.subr.bf16.mxu0 0
      %1408 = vmatpush1.bf16.msra.mxu0 0
      %1409 = vmatprep.subr.bf16.mxu0 0
      %1410 = vmatpush1.bf16.msra.mxu0 0
      %1411 = vmatprep.subr.bf16.mxu0 0
      %1412 = vmatpush1.bf16.msra.mxu0 0
      %1413 = vmatprep.subr.bf16.mxu0 0
      %1414 = vmatpush1.bf16.msra.mxu0 0
      %1415 = vmatprep.subr.bf16.mxu0 0
      %1416 = vmatpush1.bf16.msra.mxu0 %v1399
      %1417 = vmatprep.subr.bf16.mxu0 0
      %1418 = vmatpush2.bf16.msra.mxu0 0
      %1419 = vmatprep.subr.bf16.mxu0 0
      %1420 = vmatpush2.bf16.msra.mxu0 0
      %1421 = vmatprep.subr.bf16.mxu0 0
      %1422 = vmatpush2.bf16.msra.mxu0 0
      %1423 = vmatprep.subr.bf16.mxu0 0
      %1424 = vmatpush2.bf16.msra.mxu0 0
      %1425 = vmatprep.subr.bf16.mxu0 0
      %1426 = vmatpush2.bf16.msra.mxu0 0
      %1427 = vmatprep.subr.bf16.mxu0 0
      %1428 = vmatpush2.bf16.msra.mxu0 0
      %1429 = vmatprep.subr.bf16.mxu0 0
      %1430 = vmatpush2.bf16.msra.mxu0 0
      %1431 = vmatprep.subr.bf16.mxu0 0
      %1432 = vmatpush2.bf16.msra.mxu0 0
      %1433 = vmatprep.mubr.bf16.mxu0 0
      %1434 = vmatmul.mubr.bf16.gmra.mxu0 %v1396
      %v1435 = vpop.f32.mrf.mxu0
      %v1436 = vadd.f32 0.0, %v1435
      %v1437 = vpop.f32.mrf.mxu0
      %v1438 = vpop.f32.mrf.mxu0
      %v1439 = vpop.f32.mrf.mxu0
      %1440 = vdwg.mxu0
      %v1441 = vcombine.low %v833, %v845
      %v1443 = vunpack.c.l.s4 1983009808
      %v1444 = vunpack.c.0.s8 %v1443
      %v1445 = vlaneseq
      %v1446 = vshrl.u32 %v1445, 7
      %v1447 = vsub.s32 %v1444, %v1446
      %v1448 = vrot.slane %v1441, %v1447
      %v1450 = vsel %vm968, %v1277, 0
      %v1453 = vsel %vm1289, %v1448, 0
      %1455 = vmatprep.subr.bf16.mxu0 0
      %1456 = vmatpush1.bf16.msra.mxu0 0
      %1457 = vmatprep.subr.bf16.mxu0 0
      %1458 = vmatpush1.bf16.msra.mxu0 0
      %1459 = vmatprep.subr.bf16.mxu0 0
      %1460 = vmatpush1.bf16.msra.mxu0 0
      %1461 = vmatprep.subr.bf16.mxu0 0
      %1462 = vmatpush1.bf16.msra.mxu0 0
      %1463 = vmatprep.subr.bf16.mxu0 0
      %1464 = vmatpush1.bf16.msra.mxu0 0
      %1465 = vmatprep.subr.bf16.mxu0 0
      %1466 = vmatpush1.bf16.msra.mxu0 0
      %1467 = vmatprep.subr.bf16.mxu0 0
      %1468 = vmatpush1.bf16.msra.mxu0 0
      %1469 = vmatprep.subr.bf16.mxu0 0
      %1470 = vmatpush1.bf16.msra.mxu0 %v1453
      %1471 = vmatprep.subr.bf16.mxu0 0
      %1472 = vmatpush2.bf16.msra.mxu0 0
      %1473 = vmatprep.subr.bf16.mxu0 0
      %1474 = vmatpush2.bf16.msra.mxu0 0
      %1475 = vmatprep.subr.bf16.mxu0 0
      %1476 = vmatpush2.bf16.msra.mxu0 0
      %1477 = vmatprep.subr.bf16.mxu0 0
      %1478 = vmatpush2.bf16.msra.mxu0 0
      %1479 = vmatprep.subr.bf16.mxu0 0
      %1480 = vmatpush2.bf16.msra.mxu0 0
      %1481 = vmatprep.subr.bf16.mxu0 0
      %1482 = vmatpush2.bf16.msra.mxu0 0
      %1483 = vmatprep.subr.bf16.mxu0 0
      %1484 = vmatpush2.bf16.msra.mxu0 0
      %1485 = vmatprep.subr.bf16.mxu0 0
      %1486 = vmatpush2.bf16.msra.mxu0 0
      %1487 = vmatprep.mubr.bf16.mxu0 0
      %1488 = vmatmul.mubr.bf16.gmra.mxu0 %v1450
      %v1489 = vpop.f32.mrf.mxu0
      %v1490 = vadd.f32 0.0, %v1489
      %v1491 = vpop.f32.mrf.mxu0
      %v1492 = vpop.f32.mrf.mxu0
      %v1493 = vpop.f32.mrf.mxu0
      %1494 = vdwg.mxu0
      %v1495 = vadd.f32 %v1270, %v1328
      %v1496 = vadd.f32 %v1271, %v1382
      %v1497 = vadd.f32 %v1272, %v1436
      %v1498 = vadd.f32 %v1273, %v1490
      %1499 = vst.msk [vmem:[#allocation5] sm:$0xff] %vm968, %v1495
      %1500 = vst.msk [vmem:[#allocation5 + $0x8] sm:$0xff] %vm968, %v1496
      %1501 = vst.msk [vmem:[#allocation5 + $0x10] sm:$0xff] %vm968, %v1497
      %1502 = vst.msk [vmem:[#allocation5 + $0x18] sm:$0xff] %vm968, %v1498
      %1503 = vst.msk [vmem:[#allocation3] sm:$0xff] %vm1241, %v1169
      %1504 = vst.msk [vmem:[#allocation3 + $0x8] sm:$0xff] %vm1241, %v1170
      %1505 = vst.msk [vmem:[#allocation3 + $0x10] sm:$0xff] %vm1241, %v1171
      %1506 = vst.msk [vmem:[#allocation3 + $0x18] sm:$0xff] %vm1241, %v1172
      // Predicated region
      $region53: #{transformer_forward.11} parent=47 // pred_check
        %p1507 = pneg %p461
      $region54: #{transformer_forward.11} parent=47 // pred_check_branch
        %1509 = sbr.rel (%p1507) target = $region56
      $region55: #{transformer_forward.11} parent=47 // pred_region
        %v1510 = vld [vmem:[#allocation4] sm:$0xff]
        %v1511 = vld [vmem:[#allocation4 + $0x8] sm:$0xff]
        %v1512 = vld [vmem:[#allocation4 + $0x10] sm:$0xff]
        %v1513 = vld [vmem:[#allocation4 + $0x18] sm:$0xff]
        %v1514 = vrcp.pop %v1510
        %v1515 = vrcp.pop %v1511
        %v1516 = vrcp.pop %v1512
        %v1517 = vrcp.pop %v1513
        %v1518 = vld [vmem:[#allocation5] sm:$0xff]
        %v1519 = vld [vmem:[#allocation5 + $0x8] sm:$0xff]
        %v1520 = vld [vmem:[#allocation5 + $0x10] sm:$0xff]
        %v1521 = vld [vmem:[#allocation5 + $0x18] sm:$0xff]
        %1523 = vset.pattern.permute.xlu0 0
        %1524 = vperm.xlu0 %1523, %v1514
        %v1525 = vpop.permute.xlu0 %1524
        %1528 = vset.pattern.permute.xlu0 0
        %1529 = vperm.xlu0 %1528, %v1515
        %v1530 = vpop.permute.xlu0 %1529
        %1533 = vset.pattern.permute.xlu0 0
        %1534 = vperm.xlu0 %1533, %v1516
        %v1535 = vpop.permute.xlu0 %1534
        %1538 = vset.pattern.permute.xlu0 0
        %1539 = vperm.xlu0 %1538, %v1517
        %v1540 = vpop.permute.xlu0 %1539
        %v1542 = vmul.f32 %v1518, %v1525
        %v1543 = vmul.f32 %v1519, %v1530
        %v1544 = vmul.f32 %v1520, %v1535
        %v1545 = vmul.f32 %v1521, %v1540
        %v1546 = vcombine.low %v1542, %v1544
        %v1547 = vcombine.high %v1542, %v1544
        %v1549 = vunpack.c.l.s4 1983009808
        %v1550 = vunpack.c.0.s8 %v1549
        %v1551 = vlaneseq
        %v1552 = vshrl.u32 %v1551, 7
        %v1553 = vsub.s32 %v1550, %v1552
        %v1554 = vrot.slane %v1546, %v1553
        %v1556 = vunpack.c.l.s4 1983009808
        %v1557 = vunpack.c.0.s8 %v1556
        %v1558 = vlaneseq
        %v1559 = vshrl.u32 %v1558, 7
        %v1560 = vsub.s32 %v1557, %v1559
        %v1561 = vrot.slane %v1547, %v1560
        %v1562 = vcombine.low %v1543, %v1545
        %v1563 = vcombine.high %v1543, %v1545
        %v1565 = vunpack.c.l.s4 1983009808
        %v1566 = vunpack.c.0.s8 %v1565
        %v1567 = vlaneseq
        %v1568 = vshrl.u32 %v1567, 7
        %v1569 = vsub.s32 %v1566, %v1568
        %v1570 = vrot.slane %v1562, %v1569
        %v1572 = vunpack.c.l.s4 1983009808
        %v1573 = vunpack.c.0.s8 %v1572
        %v1574 = vlaneseq
        %v1575 = vshrl.u32 %v1574, 7
        %v1576 = vsub.s32 %v1573, %v1575
        %v1577 = vrot.slane %v1563, %v1576
        %v1578 = vcombine.low %v1554, %v1570
        %v1579 = vcombine.high %v1554, %v1570
        %v1581 = vunpack.c.l.s4 1934713408
        %v1582 = vunpack.c.0.s8 %v1581
        %v1583 = vlaneseq
        %v1584 = vshrl.u32 %v1583, 7
        %v1585 = vsub.s32 %v1582, %v1584
        %v1586 = vrot.slane %v1578, %v1585
        %v1588 = vunpack.c.l.s4 1934713408
        %v1589 = vunpack.c.0.s8 %v1588
        %v1590 = vlaneseq
        %v1591 = vshrl.u32 %v1590, 7
        %v1592 = vsub.s32 %v1589, %v1591
        %v1593 = vrot.slane %v1579, %v1592
        %v1594 = vcombine.low %v1561, %v1577
        %v1595 = vcombine.high %v1561, %v1577
        %v1597 = vunpack.c.l.s4 1934713408
        %v1598 = vunpack.c.0.s8 %v1597
        %v1599 = vlaneseq
        %v1600 = vshrl.u32 %v1599, 7
        %v1601 = vsub.s32 %v1598, %v1600
        %v1602 = vrot.slane %v1594, %v1601
        %v1604 = vunpack.c.l.s4 1934713408
        %v1605 = vunpack.c.0.s8 %v1604
        %v1606 = vlaneseq
        %v1607 = vshrl.u32 %v1606, 7
        %v1608 = vsub.s32 %v1605, %v1607
        %v1609 = vrot.slane %v1595, %v1608
        %v1610 = vcombine.high %v1586, 0.0
        %v1611 = vcombine.high %v1593, 0.0
        %v1612 = vcombine.high %v1602, 0.0
        %v1613 = vcombine.high %v1609, 0.0
        %v1614 = vcombine.low %v1586, %v1593
        %v1616 = vunpack.c.l.s4 1983009808
        %v1617 = vunpack.c.0.s8 %v1616
        %v1618 = vlaneseq
        %v1619 = vshrl.u32 %v1618, 7
        %v1620 = vsub.s32 %v1617, %v1619
        %v1621 = vrot.slane %v1614, %v1620
        %v1622 = vcombine.low %v1610, %v1611
        %v1624 = vunpack.c.l.s4 1983009808
        %v1625 = vunpack.c.0.s8 %v1624
        %v1626 = vlaneseq
        %v1627 = vshrl.u32 %v1626, 7
        %v1628 = vsub.s32 %v1625, %v1627
        %v1629 = vrot.slane %v1622, %v1628
        %v1630 = vcombine.low %v1602, %v1609
        %v1632 = vunpack.c.l.s4 1983009808
        %v1633 = vunpack.c.0.s8 %v1632
        %v1634 = vlaneseq
        %v1635 = vshrl.u32 %v1634, 7
        %v1636 = vsub.s32 %v1633, %v1635
        %v1637 = vrot.slane %v1630, %v1636
        %v1638 = vcombine.low %v1612, %v1613
        %v1640 = vunpack.c.l.s4 1983009808
        %v1641 = vunpack.c.0.s8 %v1640
        %v1642 = vlaneseq
        %v1643 = vshrl.u32 %v1642, 7
        %v1644 = vsub.s32 %v1641, %v1643
        %v1645 = vrot.slane %v1638, %v1644
        %v1646 = vcombine.low %v1621, %v1629
        %v1647 = vcombine.high %v1621, %v1629
        %v1649 = vunpack.c.l.s4 1934713408
        %v1650 = vunpack.c.0.s8 %v1649
        %v1651 = vlaneseq
        %v1652 = vshrl.u32 %v1651, 7
        %v1653 = vsub.s32 %v1650, %v1652
        %v1654 = vrot.slane %v1646, %v1653
        %v1656 = vunpack.c.l.s4 1934713408
        %v1657 = vunpack.c.0.s8 %v1656
        %v1658 = vlaneseq
        %v1659 = vshrl.u32 %v1658, 7
        %v1660 = vsub.s32 %v1657, %v1659
        %v1661 = vrot.slane %v1647, %v1660
        %v1662 = vcombine.low %v1637, %v1645
        %v1663 = vcombine.high %v1637, %v1645
        %v1665 = vunpack.c.l.s4 1934713408
        %v1666 = vunpack.c.0.s8 %v1665
        %v1667 = vlaneseq
        %v1668 = vshrl.u32 %v1667, 7
        %v1669 = vsub.s32 %v1666, %v1668
        %v1670 = vrot.slane %v1662, %v1669
        %v1672 = vunpack.c.l.s4 1934713408
        %v1673 = vunpack.c.0.s8 %v1672
        %v1674 = vlaneseq
        %v1675 = vshrl.u32 %v1674, 7
        %v1676 = vsub.s32 %v1673, %v1675
        %v1677 = vrot.slane %v1663, %v1676
        %v1678 = vcombine.low %v1654, %v1670
        %v1679 = vcombine.high %v1654, %v1670
        %v1680 = vcombine.low %v1661, %v1677
        %v1681 = vcombine.high %v1661, %v1677
        %1683 = vrot.lane.b32.xlu0 %v1679, 8
        %v1684 = vpop.permute.xlu0 %1683
        %1687 = vrot.lane.b32.xlu0 %v1680, 16
        %v1688 = vpop.permute.xlu0 %1687
        %1691 = vrot.lane.b32.xlu0 %v1681, 24
        %v1692 = vpop.permute.xlu0 %1691
        %v1694 = vsel %vm968, %v1678, %v1684
        %vm1695 = vcmask 130048
        %v1696 = vsel %vm1695, %v1694, %v1688
        %vm1697 = vcmask 195584
        %v1698 = vsel %vm1697, %v1696, %v1692
        %v1699 = vpack.c.bf16 %v1698, %v1698
        %vm1700 = vcmask 257024
        %1701 = vst.msk [vmem:[%s459] sm:$0xf] %vm1700, %v1699
      $region56: #{transformer_forward.11} parent=47 // pred_fallthru
        _
      %p1702 = scmp.lt.s32.totalorder %s23, 1
      %s1703 = scalar_select %p1702, %s23, 1
      %p1704 = scmp.lt.s32.totalorder %s24, 0
      %s1705 = scalar_select %p1704, %s24, 0
      %s1706 = sadd.s32 %s1705, %s1703
      %s1707 = smul.addr %s1706, 4
      %s1708 = scalar_lea.vmem %s7, %s1707
      // Predicated region
      $region57: #{transformer_forward.11} parent=47 // pred_check
        %p1709 = pneg %p245
      $region58: #{transformer_forward.11} parent=47 // pred_check_branch
        %1711 = sbr.rel (%p1709) target = $region60
      $region59: #{transformer_forward.11} parent=47 // pred_region
        _
      $region60: #{transformer_forward.11} parent=47 // pred_fallthru
        _
    $region48: #{transformer_forward.11} parent=5 // pred_fallthru
      _
    %p1712 = scmp.le.s32.totalorder 2, %s13
    // Predicated region
    $region61: #{transformer_forward.11} parent=5 // pred_check
      %p1713 = pneg %p1712
    $region62: #{transformer_forward.11} parent=5 // pred_check_branch
      %1715 = sbr.rel (%p1713) target = $region64
    $region63: #{transformer_forward.11} parent=5 // pred_region
      %s1716 = ssub.s32 %s13, 2
      // Predicated region
      $region65: #{transformer_forward.11} parent=63 // pred_check
        %p1717 = pneg %p251
      $region66: #{transformer_forward.11} parent=63 // pred_check_branch
        %1719 = sbr.rel (%p1717) target = $region68
      $region67: #{transformer_forward.11} parent=63 // pred_region
        %p1720 = scmp.lt.s32.totalorder %s26, 1
        %s1721 = scalar_select %p1720, %s26, 1
        %p1722 = scmp.lt.s32.totalorder %s27, 0
        %s1723 = scalar_select %p1722, %s27, 0
        %s1724 = sadd.s32 %s1723, %s1721
        %s1725 = smul.addr %s1724, 4
        %s1726 = scalar_lea.vmem %s7, %s1725
      $region68: #{transformer_forward.11} parent=63 // pred_fallthru
        _
    $region64: #{transformer_forward.11} parent=5 // pred_fallthru
      _
  $region6: #{transformer_forward.11} parent=0 // loop_footer
    %s17 = sadd.s32 1, %s13
  $region7: #{transformer_forward.11} parent=0 // loop_footer_branch
    %12 = sbr.rel target = $region3
  $region8: #{transformer_forward.11} parent=0 // loop_exit
    _

// kernel: transformer_forward.19
$region0: #{transformer_forward.19}
  #allocation0 [shape = 'u32[]', space=smem, size = 0x4, offset = 0x4, fixed_abs, tag = 'smem constant byte address 0x4 - core index']
  #allocation1 [shape = 'u32[144,128]{1,0:T(1,128)}', space=vmem, size = 0x12000, scoped, tag = 'internal scratch']
  #allocation2 [shape = 'f32[16,32]{1,0:T(8,128)}', space=vmem, size = 0x2000, scoped, tag = 'scratch operand']
  %s0 = inlined_call_operand.vmem [shape: bf16[16,128], index: 0, kind: input, shape index: {}]
  %s1 = inlined_call_operand.vmem [shape: f32[128,32], index: 1, kind: input, shape index: {}]
  %s2 = inlined_call_operand.vmem [shape: f32[1,32], index: 2, kind: input, shape index: {}]
  %s3 = inlined_call_operand.hbm [shape: f32[16,32], index: 3, kind: output, shape index: {}]
  %s4 = sld [smem:[#allocation0]]
  $region30: #{transformer_forward.19} parent=0
    _
  %s6 = ssub.s32 1, %s4
  %s7 = scalar_select 0, %s6, %s4
  $region1: #{transformer_forward.19} parent=0
    #allocation3 [shape = 'u8[8192]{0}', space=vmem, size = 0x2000, scoped, tag = 'output window, operand 0, single buffered']
    #allocation4 [shape = 's32[1]{0}', space=sflag, size = 0x4, scoped, tag = 'scoped memory for transformer_forward.19']
    %8 = vsyncpa [#allocation4], 0
    // Predicated region
    $region2: #{transformer_forward.19} parent=1 // pred_check
      _
    $region3: #{transformer_forward.19} parent=1 // pred_check_branch
      %10 = sbr.rel (0) target = $region5
    $region4: #{transformer_forward.19} parent=1 // pred_region
      _
    $region5: #{transformer_forward.19} parent=1 // pred_fallthru
      _
    // Predicated region
    $region6: #{transformer_forward.19} parent=1 // pred_check
      _
    $region7: #{transformer_forward.19} parent=1 // pred_check_branch
      %12 = sbr.rel (0) target = $region9
    $region8: #{transformer_forward.19} parent=1 // pred_region
      _
    $region9: #{transformer_forward.19} parent=1 // pred_fallthru
      _
    // Predicated region
    $region10: #{transformer_forward.19} parent=1 // pred_check
      _
    $region11: #{transformer_forward.19} parent=1 // pred_check_branch
      %14 = sbr.rel (0) target = $region13
    $region12: #{transformer_forward.19} parent=1 // pred_region
      _
    $region13: #{transformer_forward.19} parent=1 // pred_fallthru
      _
    %p16 = scmp.eq.s32.totalorder 0, 0
    // Predicated region
    $region14: #{transformer_forward.19} parent=1 // pred_check
      %p17 = pneg %p16
    $region15: #{transformer_forward.19} parent=1 // pred_check_branch
      %19 = sbr.rel (%p17) target = $region17
    $region16: #{transformer_forward.19} parent=1 // pred_region
      %vm20 = vcmask 261120
      %21 = vst.msk [vmem:[#allocation2] sm:$0xff] %vm20, 0.0
      %22 = vst.msk [vmem:[#allocation2 + $0x8] sm:$0xff] %vm20, 0.0
    $region17: #{transformer_forward.19} parent=1 // pred_fallthru
      _
    %v23 = vld [vmem:[#allocation2] sm:$0xff]
    %v24 = vld [vmem:[#allocation2 + $0x8] sm:$0xff]
    %v25 = vld [vmem:[%s0] sm:$0xf]
    %v26 = vld [vmem:[%s0 + $0x4] sm:$0xf]
    %v27 = vld [vmem:[%s1] sm:$0xff]
    %v28 = vld [vmem:[%s1 + $0x8] sm:$0xff]
    %v29 = vld [vmem:[%s1 + $0x10] sm:$0xff]
    %v30 = vld [vmem:[%s1 + $0x18] sm:$0xff]
    %v31 = vld [vmem:[%s1 + $0x20] sm:$0xff]
    %v32 = vld [vmem:[%s1 + $0x28] sm:$0xff]
    %v33 = vld [vmem:[%s1 + $0x30] sm:$0xff]
    %v34 = vld [vmem:[%s1 + $0x38] sm:$0xff]
    %v35 = vld [vmem:[%s1 + $0x40] sm:$0xff]
    %v36 = vld [vmem:[%s1 + $0x48] sm:$0xff]
    %v37 = vld [vmem:[%s1 + $0x50] sm:$0xff]
    %v38 = vld [vmem:[%s1 + $0x58] sm:$0xff]
    %v39 = vld [vmem:[%s1 + $0x60] sm:$0xff]
    %v40 = vld [vmem:[%s1 + $0x68] sm:$0xff]
    %v41 = vld [vmem:[%s1 + $0x70] sm:$0xff]
    %v42 = vld [vmem:[%s1 + $0x78] sm:$0xff]
    %v45 = vunpack.c.l.b16 %v25
    %v46 = vunpack.c.l.b16 %v26
    %v47 = vpack.c.b16 %v46, %v45
    %49 = vmatprep.subr.mxu0 0.0
    %50 = vmatpush1.msra.mxu0 %v42
    %51 = vmatprep.subr.mxu0 0.0
    %52 = vmatpush1.msra.mxu0 %v41
    %53 = vmatprep.subr.mxu0 0.0
    %54 = vmatpush1.msra.mxu0 %v40
    %55 = vmatprep.subr.mxu0 0.0
    %56 = vmatpush1.msra.mxu0 %v39
    %57 = vmatprep.subr.mxu0 0.0
    %58 = vmatpush1.msra.mxu0 %v38
    %59 = vmatprep.subr.mxu0 0.0
    %60 = vmatpush1.msra.mxu0 %v37
    %61 = vmatprep.subr.mxu0 0.0
    %62 = vmatpush1.msra.mxu0 %v36
    %63 = vmatprep.subr.mxu0 0.0
    %64 = vmatpush1.msra.mxu0 %v35
    %65 = vmatprep.subr.mxu0 0.0
    %66 = vmatpush1.msra.mxu0 %v34
    %67 = vmatprep.subr.mxu0 0.0
    %68 = vmatpush1.msra.mxu0 %v33
    %69 = vmatprep.subr.mxu0 0.0
    %70 = vmatpush1.msra.mxu0 %v32
    %71 = vmatprep.subr.mxu0 0.0
    %72 = vmatpush1.msra.mxu0 %v31
    %73 = vmatprep.subr.mxu0 0.0
    %74 = vmatpush1.msra.mxu0 %v30
    %75 = vmatprep.subr.mxu0 0.0
    %76 = vmatpush1.msra.mxu0 %v29
    %77 = vmatprep.subr.mxu0 0.0
    %78 = vmatpush1.msra.mxu0 %v28
    %79 = vmatprep.subr.mxu0 0.0
    %80 = vmatpush1.msra.mxu0 %v27
    %81 = vmatprep.subr.mxu0 0.0
    %82 = vmatpush2.msra.mxu0 0.0
    %83 = vmatprep.subr.mxu0 0.0
    %84 = vmatpush2.msra.mxu0 0.0
    %85 = vmatprep.subr.mxu0 0.0
    %86 = vmatpush2.msra.mxu0 0.0
    %87 = vmatprep.subr.mxu0 0.0
    %88 = vmatpush2.msra.mxu0 0.0
    %89 = vmatprep.subr.mxu0 0.0
    %90 = vmatpush2.msra.mxu0 0.0
    %91 = vmatprep.subr.mxu0 0.0
    %92 = vmatpush2.msra.mxu0 0.0
    %93 = vmatprep.subr.mxu0 0.0
    %94 = vmatpush2.msra.mxu0 0.0
    %95 = vmatprep.subr.mxu0 0.0
    %96 = vmatpush2.msra.mxu0 0.0
    %97 = vmatprep.subr.mxu0 0.0
    %98 = vmatpush2.msra.mxu0 0.0
    %99 = vmatprep.subr.mxu0 0.0
    %100 = vmatpush2.msra.mxu0 0.0
    %101 = vmatprep.subr.mxu0 0.0
    %102 = vmatpush2.msra.mxu0 0.0
    %103 = vmatprep.subr.mxu0 0.0
    %104 = vmatpush2.msra.mxu0 0.0
    %105 = vmatprep.subr.mxu0 0.0
    %106 = vmatpush2.msra.mxu0 0.0
    %107 = vmatprep.subr.mxu0 0.0
    %108 = vmatpush2.msra.mxu0 0.0
    %109 = vmatprep.subr.mxu0 0.0
    %110 = vmatpush2.msra.mxu0 0.0
    %111 = vmatprep.subr.mxu0 0.0
    %112 = vmatpush2.msra.mxu0 0.0
    %113 = vmatprep.mubr.bf16.mxu0 0
    %114 = vmatmul.mubr.bf16.gmra.mxu0 %v47
    %v115 = vpop.f32.mrf.mxu0
    %v116 = vadd.f32 0.0, %v115
    %v117 = vpop.f32.mrf.mxu0
    %v118 = vpop.f32.mrf.mxu0
    %v119 = vadd.f32 0.0, %v118
    %v120 = vpop.f32.mrf.mxu0
    %121 = vdwg.mxu0
    %v122 = vadd.f32 %v23, %v116
    %v123 = vadd.f32 %v24, %v119
    %vm124 = vcmask 261120
    %125 = vst.msk [vmem:[#allocation2] sm:$0xff] %vm124, %v122
    %126 = vst.msk [vmem:[#allocation2 + $0x8] sm:$0xff] %vm124, %v123
    // Predicated region
    $region18: #{transformer_forward.19} parent=1 // pred_check
      %p127 = pneg %p16
    $region19: #{transformer_forward.19} parent=1 // pred_check_branch
      %129 = sbr.rel (%p127) target = $region21
    $region20: #{transformer_forward.19} parent=1 // pred_region
      %v130 = vld [vmem:[#allocation2] sm:$0xff]
      %v131 = vld [vmem:[#allocation2 + $0x8] sm:$0xff]
      %v132 = vld [vmem:[%s2] sm:$0x1]
      %v134 = vlaneseq
      %v135 = vshrl.u32 %v134, 7
      %v136 = vsub.s32 0, %v135
      %v137 = vrot.slane %v132, %v136
      %v139 = vadd.f32 %v130, %v137
      %v140 = vadd.f32 %v131, %v137
      %141 = vst.msk [vmem:[#allocation3] sm:$0xff] %vm124, %v139
      %142 = vst.msk [vmem:[#allocation3 + $0x8] sm:$0xff] %vm124, %v140
    $region21: #{transformer_forward.19} parent=1 // pred_fallthru
      _
    // Predicated region
    $region22: #{transformer_forward.19} parent=1 // pred_check
      _
    $region23: #{transformer_forward.19} parent=1 // pred_check_branch
      %144 = sbr.rel (0) target = $region25
    $region24: #{transformer_forward.19} parent=1 // pred_region
      %s146 = ssub.s32 256, 256
      %147 = vsyncadd [#allocation4], %s146
      %s148 = sshll.u32 [#allocation3], 4
      %s149 = int_to_ptr.vmem [resolvable:$true] %s148
      %154 = dma.vmem_to_hbm [thread:$0]  %s149, 256, %s3, [#allocation4], 128, 128, 8
    $region25: #{transformer_forward.19} parent=1 // pred_fallthru
      _
    // Predicated region
    $region26: #{transformer_forward.19} parent=1 // pred_check
      _
    $region27: #{transformer_forward.19} parent=1 // pred_check_branch
      %156 = sbr.rel (0) target = $region29
    $region28: #{transformer_forward.19} parent=1 // pred_region
      %157 = dma.done [#allocation4], 256
    $region29: #{transformer_forward.19} parent=1 // pred_fallthru
      _
    %158 = vsyncpa [#allocation4], 1

</llo_original>
